<compile_context>
chip_gen: v7x
topology: tpu7x:2x2x1
jax: 0.10.0
libtpu: 0.0.40
codegen_flags: <defaults>
</compile_context>

<pallas_src>
import jax
import jax.numpy as jnp
from jax.experimental import pallas as pl
from jax.experimental.pallas import tpu as pltpu


def _round_up(x, m):
    return ((x + m - 1) // m) * m


def _pick_s_tile(S, R, max_tile=1024):
    """Largest multiple-of-128 divisor of S in [R, max_tile]; fall back sensibly."""
    divisors = [t for t in range(128, S + 1, 128) if S % t == 0]
    if not divisors:
        return S
    good = [t for t in divisors if R <= t <= max_tile]
    if good:
        return max(good)
    ge = [t for t in divisors if t >= R]
    return min(ge) if ge else S


def _vmem_limit(block_bytes, scratch_bytes):
    """Size the scoped-VMEM request from the actual buffers instead of a hard-coded 32 MiB."""
    needed = 2 * block_bytes + scratch_bytes + (4 << 20)   # double-buffered IO + margin
    try:
        phys = int(pltpu.get_tpu_info().vmem_capacity_bytes)
    except Exception:
        phys = 64 << 20            # assume the smallest generation (v7x: 64 MiB per TC)
    limit = max(needed, 16 << 20)
    limit = min(limit, int(phys * 0.9))
    return int(max(limit, needed))


def conv3d_block(x, weight, bias, kernel_size=3, compute_dtype=jnp.float32,
                 max_s_tile=1024):
    """x: (N, Cin, D, H, W); weight: (Cout, Cin, K, K, K); bias: (Cout,) (dead: it cancels
    under InstanceNorm).  compute_dtype in {float32, bfloat16} controls the MXU/copy dtype;
    accumulation and normalization statistics stay in f32."""
    N, Cin, D, H, W = x.shape
    Cout = weight.shape[0]
    K = kernel_size
    assert K == 3, "boundary-mask bank / tap table assume kernel_size=3 (module default)"
    # TODO(synk): generalize the 6-row boundary-mask bank to other odd kernel sizes.

    HW = H * W
    S = D * HW
    assert S % 128 == 0, "flattened spatial size must be a multiple of 128"
    R = HW + W + 1                       # max |flattened tap offset| for K=3, pad=1
    S_TILE = _pick_s_tile(S, R, max_s_tile)
    assert S % S_TILE == 0 and S_TILE >= R
    n_tiles = S // S_TILE
    n_taps = K * K * K
    Cin_pad = _round_up(Cin, 8)          # sublane-aligned tap row blocks (v5e store slot)
    KCp = _round_up(n_taps * Cin_pad, 128)
    WLEN = S_TILE + 2 * R
    WLENp = _round_up(WLEN, 128)
    eps = 1e-5
    cb = jnp.dtype(compute_dtype).itemsize

    # -------- host-side glue: everything is O(1)x the input (no im2col / mask inflation) ----
    x_flat = x.reshape(N, Cin, S).astype(compute_dtype)            # NCDHW, spatial flattened

    # Weight -> (Cout, KCp); column order (kd, kh, kw, cin) with cin padded to Cin_pad and the
    # contraction zero-padded to a lane multiple.  Conv bias is mathematically dead under
    # InstanceNorm's mean subtraction, so it is dropped entirely.
    wt = jnp.transpose(weight, (0, 2, 3, 4, 1)).reshape(Cout, n_taps, Cin)
    wt = jnp.pad(wt, ((0, 0), (0, 0), (0, Cin_pad - Cin))).reshape(Cout, n_taps * Cin_pad)
    wt = jnp.pad(wt, ((0, 0), (0, KCp - n_taps * Cin_pad))).astype(compute_dtype)
    del bias

    # Compressed boundary-mask bank (8, S): rows = [d>=1, d<=D-2, h>=1, h<=H-2, w>=1, w<=W-2,
    # 1, 1].  ~100x smaller than the old (KCp, S) f32 mask; tiled along the spatial grid axis.
    s_idx = jnp.arange(S, dtype=jnp.int32)
    d_i = s_idx // HW
    h_i = (s_idx // W) % H
    w_i = s_idx % W
    one = jnp.ones((S,), dtype=bool)
    bank = jnp.stack([d_i >= 1, d_i <= D - 2, h_i >= 1, h_i <= H - 2,
                      w_i >= 1, w_i <= W - 2, one, one], axis=0).astype(compute_dtype)

    # Tap table (dd, dh, dw, flat offset); order matches the weight column layout.
    taps = []
    for kd in range(K):
        for kh in range(K):
            for kw in range(K):
                dd, dh, dw = kd - 1, kh - 1, kw - 1
                taps.append((dd, dh, dw, dd * HW + dh * W + dw))

    # -------- pass 1: conv tiles + per-(n, c) sum / sumsq (two-phase InstanceNorm) ----------
    def conv_kernel(xp_ref, xc_ref, xn_ref, w_ref, m_ref,
                    conv_ref, sum_ref, ssq_ref, win_ref, p_ref):
        ti = pl.program_id(1)

        @pl.when(ti == 0)
        def _init():
            # Reset the stats accumulators and zero the im2col scratch once per batch row
            # (the Cin_pad / KCp padding rows are never written afterwards, so this also
            # sanitizes the zero-padded contraction rows).
            sum_ref[...] = jnp.zeros_like(sum_ref)
            ssq_ref[...] = jnp.zeros_like(ssq_ref)
            p_ref[...] = jnp.zeros_like(p_ref)

        # Assemble the haloed activation window (Cin, S_TILE + 2R) from prev/cur/next tiles.
        # The prev/next block indices are clamped at the volume ends; every read of clamped
        # (out-of-volume) data corresponds to a masked tap, so it never reaches the matmul.
        win_ref[:, 0:R] = xp_ref[0, :, S_TILE - R:S_TILE]
        win_ref[:, R:R + S_TILE] = xc_ref[0]
        win_ref[:, R + S_TILE:R + S_TILE + R] = xn_ref[0, :, 0:R]

        # Boundary-mask rows for this tile, indexed by the tap offset sign (0 -> no mask).
        m_d = (None, m_ref[1:2, :], m_ref[0:1, :])
        m_h = (None, m_ref[3:4, :], m_ref[2:3, :])
        m_w = (None, m_ref[5:6, :], m_ref[4:5, :])

        # On-chip im2col: each tap is a shifted STATIC lane-slice of the window, masked with
        # its combined (1, S_TILE) boundary mask, written to a sublane-aligned row block.
        # TODO(synk): group kw=-1/0/+1 taps with pltpu.roll to cut unaligned window loads ~3x.
        for t, (dd, dh, dw, off) in enumerate(taps):
            sl = win_ref[:, R + off:R + off + S_TILE]
            m = m_d[dd]
            for extra in (m_h[dh], m_w[dw]):
                if extra is not None:
                    m = extra if m is None else m * extra
            if m is not None:
                sl = sl * m
            p_ref[t * Cin_pad:t * Cin_pad + Cin, :] = sl

        # Conv3d == one MXU matmul per spatial tile, f32 accumulation; spatial on lanes so the
        # output block is lane-dense and already NCDHW after a reshape.
        y = jnp.dot(w_ref[...], p_ref[...], preferred_element_type=jnp.float32)
        conv_ref[0] = y
        # Phase-1 InstanceNorm statistics.
        sum_ref[0] += jnp.sum(y, axis=1, keepdims=True)
        ssq_ref[0] += jnp.sum(y * y, axis=1, keepdims=True)

    blocks1 = (3 * Cin * S_TILE * cb + Cout * KCp * cb + 8 * S_TILE * cb
               + Cout * S_TILE * 4 + 2 * Cout * 4)
    scratch1 = Cin * WLENp * cb + KCp * S_TILE * cb

    conv_out, sums, ssqs = pl.pallas_call(
        conv_kernel,
        out_shape=(jax.ShapeDtypeStruct((N, Cout, S), jnp.float32),
                   jax.ShapeDtypeStruct((N, Cout, 1), jnp.float32),
                   jax.ShapeDtypeStruct((N, Cout, 1), jnp.float32)),
        grid_spec=pltpu.PrefetchScalarGridSpec(
            num_scalar_prefetch=0,
            grid=(N, n_tiles),
            in_specs=[
                # prev / current / next spatial tiles of the flat activation (conv halo).
                pl.BlockSpec((1, Cin, S_TILE),
                             lambda n, t: (n, 0, jnp.maximum(t - 1, 0))),
                pl.BlockSpec((1, Cin, S_TILE), lambda n, t: (n, 0, t)),
                pl.BlockSpec((1, Cin, S_TILE),
                             lambda n, t: (n, 0, jnp.minimum(t + 1, n_tiles - 1))),
                # TODO(synk): pipeline_mode=pl.Buffered(1) for this constant-index block.
                pl.BlockSpec((Cout, KCp), lambda n, t: (0, 0)),
                pl.BlockSpec((8, S_TILE), lambda n, t: (0, t)),
            ],
            out_specs=[
                pl.BlockSpec((1, Cout, S_TILE), lambda n, t: (n, 0, t)),
                pl.BlockSpec((1, Cout, 1), lambda n, t: (n, 0, 0)),
                pl.BlockSpec((1, Cout, 1), lambda n, t: (n, 0, 0)),
            ],
            scratch_shapes=[
                pltpu.VMEM((Cin, WLENp), compute_dtype),   # haloed activation window
                pltpu.VMEM((KCp, S_TILE), compute_dtype),  # on-chip im2col tile
            ],
        ),
        compiler_params=pltpu.CompilerParams(
            dimension_semantics=("parallel", "arbitrary"),
            vmem_limit_bytes=_vmem_limit(blocks1, scratch1),
        ),
    )(x_flat, x_flat, x_flat, wt, bank)

    # -------- pass 2: normalize tile-by-tile (both grid axes parallel -> both v7x TCs) ------
    inv_S = 1.0 / float(S)

    def norm_kernel(y_ref, sum_ref, ssq_ref, o_ref):
        # Dropout(0.3): inference-mode identity.
        # TODO(synk): training-mode dropout RNG is not reproduced.
        y = y_ref[0]                                       # (Cout, S_TILE), f32
        mean = sum_ref[0] * inv_S                          # (Cout, 1)
        var = jnp.maximum(ssq_ref[0] * inv_S - mean * mean, 0.0)
        scale = jax.lax.rsqrt(var + eps)
        # LeakyReLU(True): positional negative_slope == True -> slope 1.0 -> identity.
        o_ref[0] = ((y - mean) * scale).astype(o_ref.dtype)

    blocks2 = (Cout * S_TILE * 4 + 2 * Cout * 4
               + Cout * S_TILE * jnp.dtype(x.dtype).itemsize)

    out = pl.pallas_call(
        norm_kernel,
        out_shape=jax.ShapeDtypeStruct((N, Cout, S), x.dtype),
        grid_spec=pltpu.PrefetchScalarGridSpec(
            num_scalar_prefetch=0,
            grid=(N, n_tiles),
            in_specs=[
                pl.BlockSpec((1, Cout, S_TILE), lambda n, t: (n, 0, t)),
                pl.BlockSpec((1, Cout, 1), lambda n, t: (n, 0, 0)),
                pl.BlockSpec((1, Cout, 1), lambda n, t: (n, 0, 0)),
            ],
            out_specs=pl.BlockSpec((1, Cout, S_TILE), lambda n, t: (n, 0, t)),
        ),
        compiler_params=pltpu.CompilerParams(
            dimension_semantics=("parallel", "parallel"),
            vmem_limit_bytes=_vmem_limit(blocks2, 0),
        ),
    )(conv_out, sums, ssqs)

    # (N, Cout, S) is already NCDHW with spatial flattened: pure reshape, no transpose.
    return out.reshape(N, Cout, D, H, W)


def reference_conv3d_block(x, weight, bias, kernel_size=3):
    """Pure-JAX reference matching the PyTorch module's forward (eval-mode dropout)."""
    p = (kernel_size - 1) // 2
    y = jax.lax.conv_general_dilated(
        x, weight, window_strides=(1, 1, 1),
        padding=[(p, p)] * 3,
        dimension_numbers=("NCDHW", "OIDHW", "NCDHW"))
    y = y + bias.reshape(1, -1, 1, 1, 1)
    mean = jnp.mean(y, axis=(2, 3, 4), keepdims=True)
    var = jnp.mean((y - mean) ** 2, axis=(2, 3, 4), keepdims=True)
    yn = (y - mean) / jnp.sqrt(var + 1e-5)
    return yn   # LeakyReLU(True) -> negative_slope = 1.0 -> identity


if __name__ == "__main__":
    # Small shapes consistent with the module: N=2, Cin=4, Cout=8, D=H=W=16, K=3.
    # S = 4096 -> S_TILE = 1024 -> 4 spatial tiles per batch element (exercises the
    # grid-level tiling, halo assembly and two-phase InstanceNorm accumulation).
    N, Cin, Cout, D, H, W, K = 2, 4, 8, 16, 16, 16, 3

    key = jax.random.PRNGKey(0)
    kx, kw, kb = jax.random.split(key, 3)
    x = jax.random.normal(kx, (N, Cin, D, H, W), dtype=jnp.float32)
    weight = jax.random.normal(kw, (Cout, Cin, K, K, K), dtype=jnp.float32) * 0.1
    bias = jax.random.normal(kb, (Cout,), dtype=jnp.float32) * 0.1

    ref = jax.block_until_ready(reference_conv3d_block(x, weight, bias, kernel_size=K))

    # f32 compute path (exact-ish): tight tolerance.
    out = jax.block_until_ready(conv3d_block(x, weight, bias, kernel_size=K))
    assert out.shape == (N, Cout, D, H, W), out.shape
    assert jnp.allclose(out, ref, atol=2e-3, rtol=2e-3), float(jnp.max(jnp.abs(out - ref)))

    # bf16 compute path (v6e/v7x MXU feedback): inputs/weights/patches in bf16, f32
    # accumulation and f32 InstanceNorm stats; looser tolerance due to bf16 rounding.
    out_bf16 = jax.block_until_ready(
        conv3d_block(x, weight, bias, kernel_size=K, compute_dtype=jnp.bfloat16))
    assert jnp.allclose(out_bf16, ref, atol=1e-1, rtol=1e-1), \
        float(jnp.max(jnp.abs(out_bf16 - ref)))

    print("KERNEL_OK")
</pallas_src>

<mosaic_0001>
module attributes {stable_mosaic.version = 11 : i64} {
  func.func @conv_kernel(%arg0: i32, %arg1: i32, %arg2: memref<1x4x1024xf32, #tpu.memory_space<vmem>>, %arg3: memref<1x4x1024xf32, #tpu.memory_space<vmem>>, %arg4: memref<1x4x1024xf32, #tpu.memory_space<vmem>>, %arg5: memref<8x256xf32, #tpu.memory_space<vmem>>, %arg6: memref<8x1024xf32, #tpu.memory_space<vmem>>, %arg7: memref<1x8x1024xf32, #tpu.memory_space<vmem>>, %arg8: memref<1x8x1xf32, #tpu.memory_space<vmem>>, %arg9: memref<1x8x1xf32, #tpu.memory_space<vmem>>, %arg10: memref<4x1664xf32, #tpu.memory_space<vmem>>, %arg11: memref<256x1024xf32, #tpu.memory_space<vmem>>) attributes {dimension_semantics = [#tpu.dimension_semantics<parallel>, #tpu.dimension_semantics<arbitrary>], iteration_bounds = array<i64: 2, 4>, scalar_prefetch = 0 : i64, scratch_operands = 2 : i64, tpu.core_type = #tpu.core_type<tc>, window_params = [{transform_indices = @transform_0, window_bounds = array<i64: 1, 4, 1024>}, {transform_indices = @transform_1, window_bounds = array<i64: 1, 4, 1024>}, {transform_indices = @transform_2, window_bounds = array<i64: 1, 4, 1024>}, {pipeline_mode = #tpu.pipeline_mode<synchronous>, transform_indices = @transform_3, window_bounds = array<i64: 8, 256>}, {transform_indices = @transform_4, window_bounds = array<i64: 8, 1024>}, {transform_indices = @transform_5, window_bounds = array<i64: 1, 8, 1024>}, {transform_indices = @transform_6, window_bounds = array<i64: 1, 8, 1>}, {transform_indices = @transform_7, window_bounds = array<i64: 1, 8, 1>}]} {
    %c0_i32 = arith.constant 0 : i32
    %0 = arith.cmpi eq, %arg1, %c0_i32 : i32
    %1 = arith.extui %0 : i1 to i32
    %c0_i32_0 = arith.constant 0 : i32
    %2 = arith.cmpi ne, %1, %c0_i32_0 : i32
    scf.if %2 {
      %cst_101 = arith.constant 0.000000e+00 : f32
      %175 = vector.broadcast %cst_101 : f32 to vector<1x8x1xf32>
      %c0_102 = arith.constant 0 : index
      %c0_103 = arith.constant 0 : index
      %c0_104 = arith.constant 0 : index
      %176 = vector.load %arg8[%c0_102, %c0_103, %c0_104] : memref<1x8x1xf32, #tpu.memory_space<vmem>>, vector<1x8x1xf32>
      tpu.vector_store %arg8[%c0_102, %c0_103, %c0_104], %175 {strides = array<i32>} : memref<1x8x1xf32, #tpu.memory_space<vmem>>, vector<1x8x1xf32>,
      %cst_105 = arith.constant 0.000000e+00 : f32
      %177 = vector.broadcast %cst_105 : f32 to vector<1x8x1xf32>
      %c0_106 = arith.constant 0 : index
      %c0_107 = arith.constant 0 : index
      %c0_108 = arith.constant 0 : index
      %178 = vector.load %arg9[%c0_106, %c0_107, %c0_108] : memref<1x8x1xf32, #tpu.memory_space<vmem>>, vector<1x8x1xf32>
      tpu.vector_store %arg9[%c0_106, %c0_107, %c0_108], %177 {strides = array<i32>} : memref<1x8x1xf32, #tpu.memory_space<vmem>>, vector<1x8x1xf32>,
      %cst_109 = arith.constant 0.000000e+00 : f32
      %179 = vector.broadcast %cst_109 : f32 to vector<256x1024xf32>
      %c0_110 = arith.constant 0 : index
      %c0_111 = arith.constant 0 : index
      %180 = vector.load %arg11[%c0_110, %c0_111] : memref<256x1024xf32, #tpu.memory_space<vmem>>, vector<256x1024xf32>
      tpu.vector_store %arg11[%c0_110, %c0_111], %179 {strides = array<i32>} : memref<256x1024xf32, #tpu.memory_space<vmem>>, vector<256x1024xf32>,
    } else {
    }
    %c0 = arith.constant 0 : index
    %c0_1 = arith.constant 0 : index
    %c751 = arith.constant 751 : index
    %3 = vector.load %arg2[%c0, %c0_1, %c751] : memref<1x4x1024xf32, #tpu.memory_space<vmem>>, vector<1x4x273xf32>
    %4 = vector.shape_cast %3 : vector<1x4x273xf32> to vector<4x273xf32>
    %c0_2 = arith.constant 0 : index
    %c0_3 = arith.constant 0 : index
    %5 = vector.load %arg10[%c0_2, %c0_3] : memref<4x1664xf32, #tpu.memory_space<vmem>>, vector<4x273xf32>
    tpu.vector_store %arg10[%c0_2, %c0_3], %4 {strides = array<i32>} : memref<4x1664xf32, #tpu.memory_space<vmem>>, vector<4x273xf32>,
    %c0_4 = arith.constant 0 : index
    %c0_5 = arith.constant 0 : index
    %c0_6 = arith.constant 0 : index
    %6 = vector.load %arg3[%c0_4, %c0_5, %c0_6] : memref<1x4x1024xf32, #tpu.memory_space<vmem>>, vector<1x4x1024xf32>
    %7 = vector.shape_cast %6 : vector<1x4x1024xf32> to vector<4x1024xf32>
    %c0_7 = arith.constant 0 : index
    %c273 = arith.constant 273 : index
    %8 = vector.load %arg10[%c0_7, %c273] : memref<4x1664xf32, #tpu.memory_space<vmem>>, vector<4x1024xf32>
    tpu.vector_store %arg10[%c0_7, %c273], %7 {strides = array<i32>} : memref<4x1664xf32, #tpu.memory_space<vmem>>, vector<4x1024xf32>,
    %c0_8 = arith.constant 0 : index
    %c0_9 = arith.constant 0 : index
    %c0_10 = arith.constant 0 : index
    %9 = vector.load %arg4[%c0_8, %c0_9, %c0_10] : memref<1x4x1024xf32, #tpu.memory_space<vmem>>, vector<1x4x273xf32>
    %10 = vector.shape_cast %9 : vector<1x4x273xf32> to vector<4x273xf32>
    %c0_11 = arith.constant 0 : index
    %c1297 = arith.constant 1297 : index
    %11 = vector.load %arg10[%c0_11, %c1297] : memref<4x1664xf32, #tpu.memory_space<vmem>>, vector<4x273xf32>
    tpu.vector_store %arg10[%c0_11, %c1297], %10 {strides = array<i32>} : memref<4x1664xf32, #tpu.memory_space<vmem>>, vector<4x273xf32>,
    %c1 = arith.constant 1 : index
    %c0_12 = arith.constant 0 : index
    %12 = vector.load %arg6[%c1, %c0_12] : memref<8x1024xf32, #tpu.memory_space<vmem>>, vector<1x1024xf32>
    %c0_13 = arith.constant 0 : index
    %c0_14 = arith.constant 0 : index
    %13 = vector.load %arg6[%c0_13, %c0_14] : memref<8x1024xf32, #tpu.memory_space<vmem>>, vector<1x1024xf32>
    %c3 = arith.constant 3 : index
    %c0_15 = arith.constant 0 : index
    %14 = vector.load %arg6[%c3, %c0_15] : memref<8x1024xf32, #tpu.memory_space<vmem>>, vector<1x1024xf32>
    %c2 = arith.constant 2 : index
    %c0_16 = arith.constant 0 : index
    %15 = vector.load %arg6[%c2, %c0_16] : memref<8x1024xf32, #tpu.memory_space<vmem>>, vector<1x1024xf32>
    %c5 = arith.constant 5 : index
    %c0_17 = arith.constant 0 : index
    %16 = vector.load %arg6[%c5, %c0_17] : memref<8x1024xf32, #tpu.memory_space<vmem>>, vector<1x1024xf32>
    %c4 = arith.constant 4 : index
    %c0_18 = arith.constant 0 : index
    %17 = vector.load %arg6[%c4, %c0_18] : memref<8x1024xf32, #tpu.memory_space<vmem>>, vector<1x1024xf32>
    %c0_19 = arith.constant 0 : index
    %c0_20 = arith.constant 0 : index
    %18 = vector.load %arg10[%c0_19, %c0_20] : memref<4x1664xf32, #tpu.memory_space<vmem>>, vector<4x1024xf32>
    %19 = arith.mulf %13, %15 : vector<1x1024xf32>
    %20 = arith.mulf %19, %17 : vector<1x1024xf32>
    %21 = vector.broadcast %20 : vector<1x1024xf32> to vector<4x1024xf32>
    %22 = arith.mulf %18, %21 : vector<4x1024xf32>
    %c0_21 = arith.constant 0 : index
    %c0_22 = arith.constant 0 : index
    %23 = vector.load %arg11[%c0_21, %c0_22] : memref<256x1024xf32, #tpu.memory_space<vmem>>, vector<4x1024xf32>
    tpu.vector_store %arg11[%c0_21, %c0_22], %22 {strides = array<i32>} : memref<256x1024xf32, #tpu.memory_space<vmem>>, vector<4x1024xf32>,
    %c0_23 = arith.constant 0 : index
    %c1_24 = arith.constant 1 : index
    %24 = vector.load %arg10[%c0_23, %c1_24] : memref<4x1664xf32, #tpu.memory_space<vmem>>, vector<4x1024xf32>
    %25 = arith.mulf %13, %15 : vector<1x1024xf32>
    %26 = vector.broadcast %25 : vector<1x1024xf32> to vector<4x1024xf32>
    %27 = arith.mulf %24, %26 : vector<4x1024xf32>
    %c8 = arith.constant 8 : index
    %c0_25 = arith.constant 0 : index
    %28 = vector.load %arg11[%c8, %c0_25] : memref<256x1024xf32, #tpu.memory_space<vmem>>, vector<4x1024xf32>
    tpu.vector_store %arg11[%c8, %c0_25], %27 {strides = array<i32>} : memref<256x1024xf32, #tpu.memory_space<vmem>>, vector<4x1024xf32>,
    %c0_26 = arith.constant 0 : index
    %c2_27 = arith.constant 2 : index
    %29 = vector.load %arg10[%c0_26, %c2_27] : memref<4x1664xf32, #tpu.memory_space<vmem>>, vector<4x1024xf32>
    %30 = arith.mulf %13, %15 : vector<1x1024xf32>
    %31 = arith.mulf %30, %16 : vector<1x1024xf32>
    %32 = vector.broadcast %31 : vector<1x1024xf32> to vector<4x1024xf32>
    %33 = arith.mulf %29, %32 : vector<4x1024xf32>
    %c16 = arith.constant 16 : index
    %c0_28 = arith.constant 0 : index
    %34 = vector.load %arg11[%c16, %c0_28] : memref<256x1024xf32, #tpu.memory_space<vmem>>, vector<4x1024xf32>
    tpu.vector_store %arg11[%c16, %c0_28], %33 {strides = array<i32>} : memref<256x1024xf32, #tpu.memory_space<vmem>>, vector<4x1024xf32>,
    %c0_29 = arith.constant 0 : index
    %c16_30 = arith.constant 16 : index
    %35 = vector.load %arg10[%c0_29, %c16_30] : memref<4x1664xf32, #tpu.memory_space<vmem>>, vector<4x1024xf32>
    %36 = arith.mulf %13, %17 : vector<1x1024xf32>
    %37 = vector.broadcast %36 : vector<1x1024xf32> to vector<4x1024xf32>
    %38 = arith.mulf %35, %37 : vector<4x1024xf32>
    %c24 = arith.constant 24 : index
    %c0_31 = arith.constant 0 : index
    %39 = vector.load %arg11[%c24, %c0_31] : memref<256x1024xf32, #tpu.memory_space<vmem>>, vector<4x1024xf32>
    tpu.vector_store %arg11[%c24, %c0_31], %38 {strides = array<i32>} : memref<256x1024xf32, #tpu.memory_space<vmem>>, vector<4x1024xf32>,
    %c0_32 = arith.constant 0 : index
    %c17 = arith.constant 17 : index
    %40 = vector.load %arg10[%c0_32, %c17] : memref<4x1664xf32, #tpu.memory_space<vmem>>, vector<4x1024xf32>
    %41 = vector.broadcast %13 : vector<1x1024xf32> to vector<4x1024xf32>
    %42 = arith.mulf %40, %41 : vector<4x1024xf32>
    %c32 = arith.constant 32 : index
    %c0_33 = arith.constant 0 : index
    %43 = vector.load %arg11[%c32, %c0_33] : memref<256x1024xf32, #tpu.memory_space<vmem>>, vector<4x1024xf32>
    tpu.vector_store %arg11[%c32, %c0_33], %42 {strides = array<i32>} : memref<256x1024xf32, #tpu.memory_space<vmem>>, vector<4x1024xf32>,
    %c0_34 = arith.constant 0 : index
    %c18 = arith.constant 18 : index
    %44 = vector.load %arg10[%c0_34, %c18] : memref<4x1664xf32, #tpu.memory_space<vmem>>, vector<4x1024xf32>
    %45 = arith.mulf %13, %16 : vector<1x1024xf32>
    %46 = vector.broadcast %45 : vector<1x1024xf32> to vector<4x1024xf32>
    %47 = arith.mulf %44, %46 : vector<4x1024xf32>
    %c40 = arith.constant 40 : index
    %c0_35 = arith.constant 0 : index
    %48 = vector.load %arg11[%c40, %c0_35] : memref<256x1024xf32, #tpu.memory_space<vmem>>, vector<4x1024xf32>
    tpu.vector_store %arg11[%c40, %c0_35], %47 {strides = array<i32>} : memref<256x1024xf32, #tpu.memory_space<vmem>>, vector<4x1024xf32>,
    %c0_36 = arith.constant 0 : index
    %c32_37 = arith.constant 32 : index
    %49 = vector.load %arg10[%c0_36, %c32_37] : memref<4x1664xf32, #tpu.memory_space<vmem>>, vector<4x1024xf32>
    %50 = arith.mulf %13, %14 : vector<1x1024xf32>
    %51 = arith.mulf %50, %17 : vector<1x1024xf32>
    %52 = vector.broadcast %51 : vector<1x1024xf32> to vector<4x1024xf32>
    %53 = arith.mulf %49, %52 : vector<4x1024xf32>
    %c48 = arith.constant 48 : index
    %c0_38 = arith.constant 0 : index
    %54 = vector.load %arg11[%c48, %c0_38] : memref<256x1024xf32, #tpu.memory_space<vmem>>, vector<4x1024xf32>
    tpu.vector_store %arg11[%c48, %c0_38], %53 {strides = array<i32>} : memref<256x1024xf32, #tpu.memory_space<vmem>>, vector<4x1024xf32>,
    %c0_39 = arith.constant 0 : index
    %c33 = arith.constant 33 : index
    %55 = vector.load %arg10[%c0_39, %c33] : memref<4x1664xf32, #tpu.memory_space<vmem>>, vector<4x1024xf32>
    %56 = arith.mulf %13, %14 : vector<1x1024xf32>
    %57 = vector.broadcast %56 : vector<1x1024xf32> to vector<4x1024xf32>
    %58 = arith.mulf %55, %57 : vector<4x1024xf32>
    %c56 = arith.constant 56 : index
    %c0_40 = arith.constant 0 : index
    %59 = vector.load %arg11[%c56, %c0_40] : memref<256x1024xf32, #tpu.memory_space<vmem>>, vector<4x1024xf32>
    tpu.vector_store %arg11[%c56, %c0_40], %58 {strides = array<i32>} : memref<256x1024xf32, #tpu.memory_space<vmem>>, vector<4x1024xf32>,
    %c0_41 = arith.constant 0 : index
    %c34 = arith.constant 34 : index
    %60 = vector.load %arg10[%c0_41, %c34] : memref<4x1664xf32, #tpu.memory_space<vmem>>, vector<4x1024xf32>
    %61 = arith.mulf %13, %14 : vector<1x1024xf32>
    %62 = arith.mulf %61, %16 : vector<1x1024xf32>
    %63 = vector.broadcast %62 : vector<1x1024xf32> to vector<4x1024xf32>
    %64 = arith.mulf %60, %63 : vector<4x1024xf32>
    %c64 = arith.constant 64 : index
    %c0_42 = arith.constant 0 : index
    %65 = vector.load %arg11[%c64, %c0_42] : memref<256x1024xf32, #tpu.memory_space<vmem>>, vector<4x1024xf32>
    tpu.vector_store %arg11[%c64, %c0_42], %64 {strides = array<i32>} : memref<256x1024xf32, #tpu.memory_space<vmem>>, vector<4x1024xf32>,
    %c0_43 = arith.constant 0 : index
    %c256 = arith.constant 256 : index
    %66 = vector.load %arg10[%c0_43, %c256] : memref<4x1664xf32, #tpu.memory_space<vmem>>, vector<4x1024xf32>
    %67 = arith.mulf %15, %17 : vector<1x1024xf32>
    %68 = vector.broadcast %67 : vector<1x1024xf32> to vector<4x1024xf32>
    %69 = arith.mulf %66, %68 : vector<4x1024xf32>
    %c72 = arith.constant 72 : index
    %c0_44 = arith.constant 0 : index
    %70 = vector.load %arg11[%c72, %c0_44] : memref<256x1024xf32, #tpu.memory_space<vmem>>, vector<4x1024xf32>
    tpu.vector_store %arg11[%c72, %c0_44], %69 {strides = array<i32>} : memref<256x1024xf32, #tpu.memory_space<vmem>>, vector<4x1024xf32>,
    %c0_45 = arith.constant 0 : index
    %c257 = arith.constant 257 : index
    %71 = vector.load %arg10[%c0_45, %c257] : memref<4x1664xf32, #tpu.memory_space<vmem>>, vector<4x1024xf32>
    %72 = vector.broadcast %15 : vector<1x1024xf32> to vector<4x1024xf32>
    %73 = arith.mulf %71, %72 : vector<4x1024xf32>
    %c80 = arith.constant 80 : index
    %c0_46 = arith.constant 0 : index
    %74 = vector.load %arg11[%c80, %c0_46] : memref<256x1024xf32, #tpu.memory_space<vmem>>, vector<4x1024xf32>
    tpu.vector_store %arg11[%c80, %c0_46], %73 {strides = array<i32>} : memref<256x1024xf32, #tpu.memory_space<vmem>>, vector<4x1024xf32>,
    %c0_47 = arith.constant 0 : index
    %c258 = arith.constant 258 : index
    %75 = vector.load %arg10[%c0_47, %c258] : memref<4x1664xf32, #tpu.memory_space<vmem>>, vector<4x1024xf32>
    %76 = arith.mulf %15, %16 : vector<1x1024xf32>
    %77 = vector.broadcast %76 : vector<1x1024xf32> to vector<4x1024xf32>
    %78 = arith.mulf %75, %77 : vector<4x1024xf32>
    %c88 = arith.constant 88 : index
    %c0_48 = arith.constant 0 : index
    %79 = vector.load %arg11[%c88, %c0_48] : memref<256x1024xf32, #tpu.memory_space<vmem>>, vector<4x1024xf32>
    tpu.vector_store %arg11[%c88, %c0_48], %78 {strides = array<i32>} : memref<256x1024xf32, #tpu.memory_space<vmem>>, vector<4x1024xf32>,
    %c0_49 = arith.constant 0 : index
    %c272 = arith.constant 272 : index
    %80 = vector.load %arg10[%c0_49, %c272] : memref<4x1664xf32, #tpu.memory_space<vmem>>, vector<4x1024xf32>
    %81 = vector.broadcast %17 : vector<1x1024xf32> to vector<4x1024xf32>
    %82 = arith.mulf %80, %81 : vector<4x1024xf32>
    %c96 = arith.constant 96 : index
    %c0_50 = arith.constant 0 : index
    %83 = vector.load %arg11[%c96, %c0_50] : memref<256x1024xf32, #tpu.memory_space<vmem>>, vector<4x1024xf32>
    tpu.vector_store %arg11[%c96, %c0_50], %82 {strides = array<i32>} : memref<256x1024xf32, #tpu.memory_space<vmem>>, vector<4x1024xf32>,
    %c0_51 = arith.constant 0 : index
    %c273_52 = arith.constant 273 : index
    %84 = vector.load %arg10[%c0_51, %c273_52] : memref<4x1664xf32, #tpu.memory_space<vmem>>, vector<4x1024xf32>
    %c104 = arith.constant 104 : index
    %c0_53 = arith.constant 0 : index
    %85 = vector.load %arg11[%c104, %c0_53] : memref<256x1024xf32, #tpu.memory_space<vmem>>, vector<4x1024xf32>
    tpu.vector_store %arg11[%c104, %c0_53], %84 {strides = array<i32>} : memref<256x1024xf32, #tpu.memory_space<vmem>>, vector<4x1024xf32>,
    %c0_54 = arith.constant 0 : index
    %c274 = arith.constant 274 : index
    %86 = vector.load %arg10[%c0_54, %c274] : memref<4x1664xf32, #tpu.memory_space<vmem>>, vector<4x1024xf32>
    %87 = vector.broadcast %16 : vector<1x1024xf32> to vector<4x1024xf32>
    %88 = arith.mulf %86, %87 : vector<4x1024xf32>
    %c112 = arith.constant 112 : index
    %c0_55 = arith.constant 0 : index
    %89 = vector.load %arg11[%c112, %c0_55] : memref<256x1024xf32, #tpu.memory_space<vmem>>, vector<4x1024xf32>
    tpu.vector_store %arg11[%c112, %c0_55], %88 {strides = array<i32>} : memref<256x1024xf32, #tpu.memory_space<vmem>>, vector<4x1024xf32>,
    %c0_56 = arith.constant 0 : index
    %c288 = arith.constant 288 : index
    %90 = vector.load %arg10[%c0_56, %c288] : memref<4x1664xf32, #tpu.memory_space<vmem>>, vector<4x1024xf32>
    %91 = arith.mulf %14, %17 : vector<1x1024xf32>
    %92 = vector.broadcast %91 : vector<1x1024xf32> to vector<4x1024xf32>
    %93 = arith.mulf %90, %92 : vector<4x1024xf32>
    %c120 = arith.constant 120 : index
    %c0_57 = arith.constant 0 : index
    %94 = vector.load %arg11[%c120, %c0_57] : memref<256x1024xf32, #tpu.memory_space<vmem>>, vector<4x1024xf32>
    tpu.vector_store %arg11[%c120, %c0_57], %93 {strides = array<i32>} : memref<256x1024xf32, #tpu.memory_space<vmem>>, vector<4x1024xf32>,
    %c0_58 = arith.constant 0 : index
    %c289 = arith.constant 289 : index
    %95 = vector.load %arg10[%c0_58, %c289] : memref<4x1664xf32, #tpu.memory_space<vmem>>, vector<4x1024xf32>
    %96 = vector.broadcast %14 : vector<1x1024xf32> to vector<4x1024xf32>
    %97 = arith.mulf %95, %96 : vector<4x1024xf32>
    %c128 = arith.constant 128 : index
    %c0_59 = arith.constant 0 : index
    %98 = vector.load %arg11[%c128, %c0_59] : memref<256x1024xf32, #tpu.memory_space<vmem>>, vector<4x1024xf32>
    tpu.vector_store %arg11[%c128, %c0_59], %97 {strides = array<i32>} : memref<256x1024xf32, #tpu.memory_space<vmem>>, vector<4x1024xf32>,
    %c0_60 = arith.constant 0 : index
    %c290 = arith.constant 290 : index
    %99 = vector.load %arg10[%c0_60, %c290] : memref<4x1664xf32, #tpu.memory_space<vmem>>, vector<4x1024xf32>
    %100 = arith.mulf %14, %16 : vector<1x1024xf32>
    %101 = vector.broadcast %100 : vector<1x1024xf32> to vector<4x1024xf32>
    %102 = arith.mulf %99, %101 : vector<4x1024xf32>
    %c136 = arith.constant 136 : index
    %c0_61 = arith.constant 0 : index
    %103 = vector.load %arg11[%c136, %c0_61] : memref<256x1024xf32, #tpu.memory_space<vmem>>, vector<4x1024xf32>
    tpu.vector_store %arg11[%c136, %c0_61], %102 {strides = array<i32>} : memref<256x1024xf32, #tpu.memory_space<vmem>>, vector<4x1024xf32>,
    %c0_62 = arith.constant 0 : index
    %c512 = arith.constant 512 : index
    %104 = vector.load %arg10[%c0_62, %c512] : memref<4x1664xf32, #tpu.memory_space<vmem>>, vector<4x1024xf32>
    %105 = arith.mulf %12, %15 : vector<1x1024xf32>
    %106 = arith.mulf %105, %17 : vector<1x1024xf32>
    %107 = vector.broadcast %106 : vector<1x1024xf32> to vector<4x1024xf32>
    %108 = arith.mulf %104, %107 : vector<4x1024xf32>
    %c144 = arith.constant 144 : index
    %c0_63 = arith.constant 0 : index
    %109 = vector.load %arg11[%c144, %c0_63] : memref<256x1024xf32, #tpu.memory_space<vmem>>, vector<4x1024xf32>
    tpu.vector_store %arg11[%c144, %c0_63], %108 {strides = array<i32>} : memref<256x1024xf32, #tpu.memory_space<vmem>>, vector<4x1024xf32>,
    %c0_64 = arith.constant 0 : index
    %c513 = arith.constant 513 : index
    %110 = vector.load %arg10[%c0_64, %c513] : memref<4x1664xf32, #tpu.memory_space<vmem>>, vector<4x1024xf32>
    %111 = arith.mulf %12, %15 : vector<1x1024xf32>
    %112 = vector.broadcast %111 : vector<1x1024xf32> to vector<4x1024xf32>
    %113 = arith.mulf %110, %112 : vector<4x1024xf32>
    %c152 = arith.constant 152 : index
    %c0_65 = arith.constant 0 : index
    %114 = vector.load %arg11[%c152, %c0_65] : memref<256x1024xf32, #tpu.memory_space<vmem>>, vector<4x1024xf32>
    tpu.vector_store %arg11[%c152, %c0_65], %113 {strides = array<i32>} : memref<256x1024xf32, #tpu.memory_space<vmem>>, vector<4x1024xf32>,
    %c0_66 = arith.constant 0 : index
    %c514 = arith.constant 514 : index
    %115 = vector.load %arg10[%c0_66, %c514] : memref<4x1664xf32, #tpu.memory_space<vmem>>, vector<4x1024xf32>
    %116 = arith.mulf %12, %15 : vector<1x1024xf32>
    %117 = arith.mulf %116, %16 : vector<1x1024xf32>
    %118 = vector.broadcast %117 : vector<1x1024xf32> to vector<4x1024xf32>
    %119 = arith.mulf %115, %118 : vector<4x1024xf32>
    %c160 = arith.constant 160 : index
    %c0_67 = arith.constant 0 : index
    %120 = vector.load %arg11[%c160, %c0_67] : memref<256x1024xf32, #tpu.memory_space<vmem>>, vector<4x1024xf32>
    tpu.vector_store %arg11[%c160, %c0_67], %119 {strides = array<i32>} : memref<256x1024xf32, #tpu.memory_space<vmem>>, vector<4x1024xf32>,
    %c0_68 = arith.constant 0 : index
    %c528 = arith.constant 528 : index
    %121 = vector.load %arg10[%c0_68, %c528] : memref<4x1664xf32, #tpu.memory_space<vmem>>, vector<4x1024xf32>
    %122 = arith.mulf %12, %17 : vector<1x1024xf32>
    %123 = vector.broadcast %122 : vector<1x1024xf32> to vector<4x1024xf32>
    %124 = arith.mulf %121, %123 : vector<4x1024xf32>
    %c168 = arith.constant 168 : index
    %c0_69 = arith.constant 0 : index
    %125 = vector.load %arg11[%c168, %c0_69] : memref<256x1024xf32, #tpu.memory_space<vmem>>, vector<4x1024xf32>
    tpu.vector_store %arg11[%c168, %c0_69], %124 {strides = array<i32>} : memref<256x1024xf32, #tpu.memory_space<vmem>>, vector<4x1024xf32>,
    %c0_70 = arith.constant 0 : index
    %c529 = arith.constant 529 : index
    %126 = vector.load %arg10[%c0_70, %c529] : memref<4x1664xf32, #tpu.memory_space<vmem>>, vector<4x1024xf32>
    %127 = vector.broadcast %12 : vector<1x1024xf32> to vector<4x1024xf32>
    %128 = arith.mulf %126, %127 : vector<4x1024xf32>
    %c176 = arith.constant 176 : index
    %c0_71 = arith.constant 0 : index
    %129 = vector.load %arg11[%c176, %c0_71] : memref<256x1024xf32, #tpu.memory_space<vmem>>, vector<4x1024xf32>
    tpu.vector_store %arg11[%c176, %c0_71], %128 {strides = array<i32>} : memref<256x1024xf32, #tpu.memory_space<vmem>>, vector<4x1024xf32>,
    %c0_72 = arith.constant 0 : index
    %c530 = arith.constant 530 : index
    %130 = vector.load %arg10[%c0_72, %c530] : memref<4x1664xf32, #tpu.memory_space<vmem>>, vector<4x1024xf32>
    %131 = arith.mulf %12, %16 : vector<1x1024xf32>
    %132 = vector.broadcast %131 : vector<1x1024xf32> to vector<4x1024xf32>
    %133 = arith.mulf %130, %132 : vector<4x1024xf32>
    %c184 = arith.constant 184 : index
    %c0_73 = arith.constant 0 : index
    %134 = vector.load %arg11[%c184, %c0_73] : memref<256x1024xf32, #tpu.memory_space<vmem>>, vector<4x1024xf32>
    tpu.vector_store %arg11[%c184, %c0_73], %133 {strides = array<i32>} : memref<256x1024xf32, #tpu.memory_space<vmem>>, vector<4x1024xf32>,
    %c0_74 = arith.constant 0 : index
    %c544 = arith.constant 544 : index
    %135 = vector.load %arg10[%c0_74, %c544] : memref<4x1664xf32, #tpu.memory_space<vmem>>, vector<4x1024xf32>
    %136 = arith.mulf %12, %14 : vector<1x1024xf32>
    %137 = arith.mulf %136, %17 : vector<1x1024xf32>
    %138 = vector.broadcast %137 : vector<1x1024xf32> to vector<4x1024xf32>
    %139 = arith.mulf %135, %138 : vector<4x1024xf32>
    %c192 = arith.constant 192 : index
    %c0_75 = arith.constant 0 : index
    %140 = vector.load %arg11[%c192, %c0_75] : memref<256x1024xf32, #tpu.memory_space<vmem>>, vector<4x1024xf32>
    tpu.vector_store %arg11[%c192, %c0_75], %139 {strides = array<i32>} : memref<256x1024xf32, #tpu.memory_space<vmem>>, vector<4x1024xf32>,
    %c0_76 = arith.constant 0 : index
    %c545 = arith.constant 545 : index
    %141 = vector.load %arg10[%c0_76, %c545] : memref<4x1664xf32, #tpu.memory_space<vmem>>, vector<4x1024xf32>
    %142 = arith.mulf %12, %14 : vector<1x1024xf32>
    %143 = vector.broadcast %142 : vector<1x1024xf32> to vector<4x1024xf32>
    %144 = arith.mulf %141, %143 : vector<4x1024xf32>
    %c200 = arith.constant 200 : index
    %c0_77 = arith.constant 0 : index
    %145 = vector.load %arg11[%c200, %c0_77] : memref<256x1024xf32, #tpu.memory_space<vmem>>, vector<4x1024xf32>
    tpu.vector_store %arg11[%c200, %c0_77], %144 {strides = array<i32>} : memref<256x1024xf32, #tpu.memory_space<vmem>>, vector<4x1024xf32>,
    %c0_78 = arith.constant 0 : index
    %c546 = arith.constant 546 : index
    %146 = vector.load %arg10[%c0_78, %c546] : memref<4x1664xf32, #tpu.memory_space<vmem>>, vector<4x1024xf32>
    %147 = arith.mulf %12, %14 : vector<1x1024xf32>
    %148 = arith.mulf %147, %16 : vector<1x1024xf32>
    %149 = vector.broadcast %148 : vector<1x1024xf32> to vector<4x1024xf32>
    %150 = arith.mulf %146, %149 : vector<4x1024xf32>
    %c208 = arith.constant 208 : index
    %c0_79 = arith.constant 0 : index
    %151 = vector.load %arg11[%c208, %c0_79] : memref<256x1024xf32, #tpu.memory_space<vmem>>, vector<4x1024xf32>
    tpu.vector_store %arg11[%c208, %c0_79], %150 {strides = array<i32>} : memref<256x1024xf32, #tpu.memory_space<vmem>>, vector<4x1024xf32>,
    %c0_80 = arith.constant 0 : index
    %c0_81 = arith.constant 0 : index
    %152 = vector.load %arg5[%c0_80, %c0_81] : memref<8x256xf32, #tpu.memory_space<vmem>>, vector<8x256xf32>
    %c0_82 = arith.constant 0 : index
    %c0_83 = arith.constant 0 : index
    %153 = vector.load %arg11[%c0_82, %c0_83] : memref<256x1024xf32, #tpu.memory_space<vmem>>, vector<256x1024xf32>
    %cst = arith.constant dense<0.000000e+00> : vector<8x1024xf32>
    %154 = tpu.matmul %152, %153, %cst {dimension_numbers = #tpu.dot_dimension_numbers<[1], [0], [0], [1], [0, 0, 1, 1], [], []>} : vector<8x256xf32>, vector<256x1024xf32>, vector<8x1024xf32> -> vector<8x1024xf32>
    %c0_84 = arith.constant 0 : index
    %c0_85 = arith.constant 0 : index
    %c0_86 = arith.constant 0 : index
    %155 = vector.load %arg7[%c0_84, %c0_85, %c0_86] : memref<1x8x1024xf32, #tpu.memory_space<vmem>>, vector<1x8x1024xf32>
    %156 = vector.shape_cast %155 : vector<1x8x1024xf32> to vector<8x1024xf32>
    %157 = vector.shape_cast %154 : vector<8x1024xf32> to vector<1x8x1024xf32>
    tpu.vector_store %arg7[%c0_84, %c0_85, %c0_86], %157 {strides = array<i32>} : memref<1x8x1024xf32, #tpu.memory_space<vmem>>, vector<1x8x1024xf32>,
    %c0_87 = arith.constant 0 : index
    %c0_88 = arith.constant 0 : index
    %c0_89 = arith.constant 0 : index
    %158 = vector.load %arg8[%c0_87, %c0_88, %c0_89] : memref<1x8x1xf32, #tpu.memory_space<vmem>>, vector<1x8x1xf32>
    %159 = vector.shape_cast %158 : vector<1x8x1xf32> to vector<8x1xf32>
    %cst_90 = arith.constant dense<0.000000e+00> : vector<8xf32>
    %160 = vector.multi_reduction <add>, %154, %cst_90 [1] : vector<8x1024xf32> to vector<8xf32>
    %161 = vector.shape_cast %160 : vector<8xf32> to vector<8x1xf32>
    %162 = arith.addf %159, %161 : vector<8x1xf32>
    %c0_91 = arith.constant 0 : index
    %c0_92 = arith.constant 0 : index
    %c0_93 = arith.constant 0 : index
    %163 = vector.load %arg8[%c0_91, %c0_92, %c0_93] : memref<1x8x1xf32, #tpu.memory_space<vmem>>, vector<1x8x1xf32>
    %164 = vector.shape_cast %163 : vector<1x8x1xf32> to vector<8x1xf32>
    %165 = vector.shape_cast %162 : vector<8x1xf32> to vector<1x8x1xf32>
    tpu.vector_store %arg8[%c0_91, %c0_92, %c0_93], %165 {strides = array<i32>} : memref<1x8x1xf32, #tpu.memory_space<vmem>>, vector<1x8x1xf32>,
    %c0_94 = arith.constant 0 : index
    %c0_95 = arith.constant 0 : index
    %c0_96 = arith.constant 0 : index
    %166 = vector.load %arg9[%c0_94, %c0_95, %c0_96] : memref<1x8x1xf32, #tpu.memory_space<vmem>>, vector<1x8x1xf32>
    %167 = vector.shape_cast %166 : vector<1x8x1xf32> to vector<8x1xf32>
    %168 = arith.mulf %154, %154 : vector<8x1024xf32>
    %cst_97 = arith.constant dense<0.000000e+00> : vector<8xf32>
    %169 = vector.multi_reduction <add>, %168, %cst_97 [1] : vector<8x1024xf32> to vector<8xf32>
    %170 = vector.shape_cast %169 : vector<8xf32> to vector<8x1xf32>
    %171 = arith.addf %167, %170 : vector<8x1xf32>
    %c0_98 = arith.constant 0 : index
    %c0_99 = arith.constant 0 : index
    %c0_100 = arith.constant 0 : index
    %172 = vector.load %arg9[%c0_98, %c0_99, %c0_100] : memref<1x8x1xf32, #tpu.memory_space<vmem>>, vector<1x8x1xf32>
    %173 = vector.shape_cast %172 : vector<1x8x1xf32> to vector<8x1xf32>
    %174 = vector.shape_cast %171 : vector<8x1xf32> to vector<1x8x1xf32>
    tpu.vector_store %arg9[%c0_98, %c0_99, %c0_100], %174 {strides = array<i32>} : memref<1x8x1xf32, #tpu.memory_space<vmem>>, vector<1x8x1xf32>,
    return
  }
  func.func @transform_0(%arg0: i32, %arg1: i32) -> (i32, i32, i32) {
    %c1_i32 = arith.constant 1 : i32
    %0 = arith.subi %arg1, %c1_i32 : i32
    %c0_i32 = arith.constant 0 : i32
    %1 = arith.maxsi %0, %c0_i32 : i32
    %c0_i32_0 = arith.constant 0 : i32
    %c0_i32_1 = arith.constant 0 : i32
    return %arg0, %c0_i32_0, %1 : i32, i32, i32
  }
  func.func @transform_1(%arg0: i32, %arg1: i32) -> (i32, i32, i32) {
    %c0_i32 = arith.constant 0 : i32
    %c0_i32_0 = arith.constant 0 : i32
    return %arg0, %c0_i32, %arg1 : i32, i32, i32
  }
  func.func @transform_2(%arg0: i32, %arg1: i32) -> (i32, i32, i32) {
    %c1_i32 = arith.constant 1 : i32
    %0 = arith.addi %arg1, %c1_i32 : i32
    %c3_i32 = arith.constant 3 : i32
    %1 = arith.minsi %0, %c3_i32 : i32
    %c0_i32 = arith.constant 0 : i32
    %c0_i32_0 = arith.constant 0 : i32
    return %arg0, %c0_i32, %1 : i32, i32, i32
  }
  func.func @transform_3(%arg0: i32, %arg1: i32) -> (i32, i32) {
    %c0_i32 = arith.constant 0 : i32
    %c0_i32_0 = arith.constant 0 : i32
    %c0_i32_1 = arith.constant 0 : i32
    return %c0_i32, %c0_i32_0 : i32, i32
  }
  func.func @transform_4(%arg0: i32, %arg1: i32) -> (i32, i32) {
    %c0_i32 = arith.constant 0 : i32
    %c0_i32_0 = arith.constant 0 : i32
    return %c0_i32, %arg1 : i32, i32
  }
  func.func @transform_5(%arg0: i32, %arg1: i32) -> (i32, i32, i32) {
    %c0_i32 = arith.constant 0 : i32
    %c0_i32_0 = arith.constant 0 : i32
    return %arg0, %c0_i32, %arg1 : i32, i32, i32
  }
  func.func @transform_6(%arg0: i32, %arg1: i32) -> (i32, i32, i32) {
    %c0_i32 = arith.constant 0 : i32
    %c0_i32_0 = arith.constant 0 : i32
    %c0_i32_1 = arith.constant 0 : i32
    return %arg0, %c0_i32, %c0_i32_0 : i32, i32, i32
  }
  func.func @transform_7(%arg0: i32, %arg1: i32) -> (i32, i32, i32) {
    %c0_i32 = arith.constant 0 : i32
    %c0_i32_0 = arith.constant 0 : i32
    %c0_i32_1 = arith.constant 0 : i32
    return %arg0, %c0_i32, %c0_i32_0 : i32, i32, i32
  }
}

</mosaic_0001>

<llo_original>
// kernel: tpu_custom_call.1
$region0: #{tpu_custom_call.1}
  #allocation0 [shape = 'u32[]', space=smem, size = 0x4, offset = 0x4, fixed_abs, tag = 'smem constant byte address 0x4 - core index']
  #allocation1 [shape = 'u32[144,128]{1,0:T(1,128)}', space=vmem, size = 0x12000, scoped, tag = 'internal scratch']
  #allocation2 [shape = 'f32[4,1664]{1,0:T(4,128)}', space=vmem, size = 0x6800, scoped, tag = 'scratch operand']
  #allocation3 [shape = 'f32[256,1024]{1,0:T(8,128)}', space=vmem, size = 0x100000, scoped, tag = 'scratch operand']
  %s0 = inlined_call_operand.hbm [shape: f32[2,4,4096], index: 0, kind: input, shape index: {}]
  %s1 = inlined_call_operand.hbm [shape: f32[2,4,4096], index: 1, kind: input, shape index: {}]
  %s2 = inlined_call_operand.hbm [shape: f32[2,4,4096], index: 2, kind: input, shape index: {}]
  %s3 = inlined_call_operand.hbm [shape: f32[8,256], index: 3, kind: input, shape index: {}]
  %s4 = inlined_call_operand.hbm [shape: f32[8,4096], index: 4, kind: input, shape index: {}]
  %s5 = inlined_call_operand.hbm [shape: f32[2,8,4096], index: 5, kind: output, shape index: {0}]
  %s6 = inlined_call_operand.vmem [shape: f32[2,8,1], index: 6, kind: output, shape index: {1}]
  %s7 = inlined_call_operand.vmem [shape: f32[2,8,1], index: 7, kind: output, shape index: {2}]
  %8 = xla_tuple %s5, %s6, %s7
  %s9 = sld [smem:[#allocation0]]
  $region93: #{tpu_custom_call.1} parent=0
    _
  %s11 = ssub.s32 1, %s9
  %s12 = scalar_select 0, %s11, %s9
  $region1: #{tpu_custom_call.1} parent=0
    #allocation4 [shape = 'u8[32768]{0}', space=vmem, size = 0x8000, scoped, tag = 'input window, operand 0']
    #allocation5 [shape = 's32[2]{0}', space=sflag, size = 0x8, scoped, tag = 'scoped memory for tpu_custom_call.1']
    #allocation6 [shape = 's32[2]{0}', space=sflag, size = 0x8, scoped, tag = 'scoped memory for tpu_custom_call.1']
    #allocation7 [shape = 'u8[32768]{0}', space=vmem, size = 0x8000, scoped, tag = 'input window, operand 1']
    #allocation8 [shape = 's32[2]{0}', space=sflag, size = 0x8, scoped, tag = 'scoped memory for tpu_custom_call.1']
    #allocation9 [shape = 'u8[32768]{0}', space=vmem, size = 0x8000, scoped, tag = 'input window, operand 2']
    #allocation10 [shape = 'u8[8192]{0}', space=vmem, size = 0x2000, scoped, tag = 'input window, operand 3, single buffered']
    #allocation11 [shape = 's32[1]{0}', space=sflag, size = 0x4, scoped, tag = 'scoped memory for tpu_custom_call.1']
    #allocation12 [shape = 'u8[65536]{0}', space=vmem, size = 0x10000, scoped, tag = 'input window, operand 4']
    #allocation13 [shape = 'u8[65536]{0}', space=vmem, size = 0x10000, scoped, tag = 'output window, operand 0']
    %13 = vsyncpa [#allocation5], 0
    %s14 = scalar_lea.sflag [#allocation5], 1
    %15 = vsyncpa %s14, 0
    %16 = vsyncpa [#allocation8], 0
    %s17 = scalar_lea.sflag [#allocation8], 1
    %18 = vsyncpa %s17, 0
    %19 = vsyncpa [#allocation11], 0
    %20 = vsyncpa [#allocation6], 0
    %s21 = scalar_lea.sflag [#allocation6], 1
    %22 = vsyncpa %s21, 0
    loop: start=0, step=1, limit=10
    $region2: #{tpu_custom_call.1} parent=1 // loop_pre_header
      _
    $region3: #{tpu_custom_call.1} parent=1 // loop_header
      %s24 = sphi 0, %s28
      %p25 = scmp.ge.s32.totalorder %s24, 10
      %s31 = sphi 0, %s43
      %s32 = sphi 0, %s39
      %s33 = sphi 0, %s31
      %s34 = sphi 0, %s32
      %s35 = sphi 0, %s33
      %s36 = sphi 0, %s34
      %s54 = sphi 0, %s56
      %s57 = sphi 0, %s54
      %s58 = sphi 0, %s57
      %s74 = sphi 0, %s58
      %s82 = sphi 0, %s84
      %s85 = sphi 0, %s82
      %s86 = sphi 0, %s85
      %s102 = sphi 0, %s86
      %s116 = sphi 0, %s118
      %s119 = sphi 0, %s116
      %s120 = sphi 0, %s119
      %s136 = sphi 0, %s120
      %s140 = sphi 0, %s140
      %s142 = sphi 0, %s140
      %s143 = sphi 0, %s142
      %s157 = sphi 0, %s143
      %s163 = sphi 0, %s165
      %s166 = sphi 0, %s163
      %s167 = sphi 0, %s166
      %s183 = sphi 0, %s167
      %s191 = sphi 0, %s193
      %s194 = sphi 0, %s191
      %s195 = sphi 0, %s194
      %s211 = sphi 0, %s195
      %s217 = sphi 0, %s219
      %s220 = sphi 0, %s217
      %s221 = sphi 0, %s220
      %s237 = sphi 0, %s221
      %s243 = sphi 0, %s245
      %s246 = sphi 0, %s243
      %s247 = sphi 0, %s246
      %s263 = sphi 0, %s247
    $region4: #{tpu_custom_call.1} parent=1 // loop_header_branch
      %27 = sbr.rel (%p25) target = $region8
    $region5: #{tpu_custom_call.1} parent=1 // loop_body
      %s29 = ssub.s32 %s24, 1
      %s30 = ssub.s32 %s24, 2
      %s37 = sadd.s32 1, %s32
      %p38 = scmp.ge.s32.totalorder %s37, 4
      %s39 = scalar_select %p38, 0, %s37
      %s40 = sadd.s32 1, %s31
      %s41 = scalar_select %p38, %s40, %s31
      %p42 = scmp.ge.s32.totalorder %s41, 2
      %s43 = scalar_select %p42, 0, %s41
      %s44 = ssub.s32 %s32, 1
      %p45 = scmp.gt.s32.totalorder %s44, 0
      %s46 = scalar_select %p45, %s44, 0
      %s47 = ssub.s32 %s39, 1
      %p48 = scmp.gt.s32.totalorder %s47, 0
      %s49 = scalar_select %p48, %s47, 0
      %s50 = ssub.s32 %s31, %s43
      %s51 = ssub.s32 %s46, %s49
      %s52 = sor.u32 %s50, %s51
      %p53 = scmp.eq.s32.totalorder %s52, 0
      %s55 = sadd.s32 %s54, 1
      %s56 = scalar_select %p53, %s54, %s55
      %p59 = pneg %p53
      %p60 = scmp.eq.s32.totalorder %s24, 7
      %p61 = por %p59, %p60
      %p62 = scmp.ne.s32.totalorder %s54, %s57
      %p63 = scmp.eq.s32.totalorder %s24, 0
      %p64 = por %p62, %p63
      %p65 = scmp.ne.s32.totalorder %s54, %s57
      %p66 = scmp.eq.s32.totalorder %s29, 7
      %p67 = por %p65, %p66
      %p68 = scmp.ne.s32.totalorder %s57, %s58
      %p69 = scmp.eq.s32.totalorder %s29, 0
      %p70 = por %p68, %p69
      %p71 = scmp.ne.s32.totalorder %s57, %s58
      %p72 = scmp.eq.s32.totalorder %s30, 7
      %p73 = por %p71, %p72
      %p75 = scmp.ne.s32.totalorder %s58, %s74
      %p76 = scmp.eq.s32.totalorder %s30, 0
      %p77 = por %p75, %p76
      %s78 = ssub.s32 %s31, %s43
      %s79 = ssub.s32 %s32, %s39
      %s80 = sor.u32 %s78, %s79
      %p81 = scmp.eq.s32.totalorder %s80, 0
      %s83 = sadd.s32 %s82, 1
      %s84 = scalar_select %p81, %s82, %s83
      %p87 = pneg %p81
      %p88 = scmp.eq.s32.totalorder %s24, 7
      %p89 = por %p87, %p88
      %p90 = scmp.ne.s32.totalorder %s82, %s85
      %p91 = scmp.eq.s32.totalorder %s24, 0
      %p92 = por %p90, %p91
      %p93 = scmp.ne.s32.totalorder %s82, %s85
      %p94 = scmp.eq.s32.totalorder %s29, 7
      %p95 = por %p93, %p94
      %p96 = scmp.ne.s32.totalorder %s85, %s86
      %p97 = scmp.eq.s32.totalorder %s29, 0
      %p98 = por %p96, %p97
      %p99 = scmp.ne.s32.totalorder %s85, %s86
      %p100 = scmp.eq.s32.totalorder %s30, 7
      %p101 = por %p99, %p100
      %p103 = scmp.ne.s32.totalorder %s86, %s102
      %p104 = scmp.eq.s32.totalorder %s30, 0
      %p105 = por %p103, %p104
      %s106 = sadd.s32 %s32, 1
      %p107 = scmp.lt.s32.totalorder %s106, 3
      %s108 = scalar_select %p107, %s106, 3
      %s109 = sadd.s32 %s39, 1
      %p110 = scmp.lt.s32.totalorder %s109, 3
      %s111 = scalar_select %p110, %s109, 3
      %s112 = ssub.s32 %s31, %s43
      %s113 = ssub.s32 %s108, %s111
      %s114 = sor.u32 %s112, %s113
      %p115 = scmp.eq.s32.totalorder %s114, 0
      %s117 = sadd.s32 %s116, 1
      %s118 = scalar_select %p115, %s116, %s117
      %p121 = pneg %p115
      %p122 = scmp.eq.s32.totalorder %s24, 7
      %p123 = por %p121, %p122
      %p124 = scmp.ne.s32.totalorder %s116, %s119
      %p125 = scmp.eq.s32.totalorder %s24, 0
      %p126 = por %p124, %p125
      %p127 = scmp.ne.s32.totalorder %s116, %s119
      %p128 = scmp.eq.s32.totalorder %s29, 7
      %p129 = por %p127, %p128
      %p130 = scmp.ne.s32.totalorder %s119, %s120
      %p131 = scmp.eq.s32.totalorder %s29, 0
      %p132 = por %p130, %p131
      %p133 = scmp.ne.s32.totalorder %s119, %s120
      %p134 = scmp.eq.s32.totalorder %s30, 7
      %p135 = por %p133, %p134
      %p137 = scmp.ne.s32.totalorder %s120, %s136
      %p138 = scmp.eq.s32.totalorder %s30, 0
      %p139 = por %p137, %p138
      %s141 = sadd.s32 %s140, 1
      %p144 = scmp.eq.s32.totalorder %s24, 7
      %p145 = scmp.ne.s32.totalorder %s140, %s142
      %p146 = scmp.eq.s32.totalorder %s24, 0
      %p147 = por %p145, %p146
      %p148 = scmp.ne.s32.totalorder %s140, %s142
      %p149 = scmp.eq.s32.totalorder %s29, 7
      %p150 = por %p148, %p149
      %p151 = scmp.ne.s32.totalorder %s142, %s143
      %p152 = scmp.eq.s32.totalorder %s29, 0
      %p153 = por %p151, %p152
      %p154 = scmp.ne.s32.totalorder %s142, %s143
      %p155 = scmp.eq.s32.totalorder %s30, 7
      %p156 = por %p154, %p155
      %p158 = scmp.ne.s32.totalorder %s143, %s157
      %p159 = scmp.eq.s32.totalorder %s30, 0
      %p160 = por %p158, %p159
      %s161 = ssub.s32 %s32, %s39
      %p162 = scmp.eq.s32.totalorder %s161, 0
      %s164 = sadd.s32 %s163, 1
      %s165 = scalar_select %p162, %s163, %s164
      %p168 = pneg %p162
      %p169 = scmp.eq.s32.totalorder %s24, 7
      %p170 = por %p168, %p169
      %p171 = scmp.ne.s32.totalorder %s163, %s166
      %p172 = scmp.eq.s32.totalorder %s24, 0
      %p173 = por %p171, %p172
      %p174 = scmp.ne.s32.totalorder %s163, %s166
      %p175 = scmp.eq.s32.totalorder %s29, 7
      %p176 = por %p174, %p175
      %p177 = scmp.ne.s32.totalorder %s166, %s167
      %p178 = scmp.eq.s32.totalorder %s29, 0
      %p179 = por %p177, %p178
      %p180 = scmp.ne.s32.totalorder %s166, %s167
      %p181 = scmp.eq.s32.totalorder %s30, 7
      %p182 = por %p180, %p181
      %p184 = scmp.ne.s32.totalorder %s167, %s183
      %p185 = scmp.eq.s32.totalorder %s30, 0
      %p186 = por %p184, %p185
      %s187 = ssub.s32 %s31, %s43
      %s188 = ssub.s32 %s32, %s39
      %s189 = sor.u32 %s187, %s188
      %p190 = scmp.eq.s32.totalorder %s189, 0
      %s192 = sadd.s32 %s191, 1
      %s193 = scalar_select %p190, %s191, %s192
      %p196 = pneg %p190
      %p197 = scmp.eq.s32.totalorder %s24, 7
      %p198 = por %p196, %p197
      %p199 = scmp.ne.s32.totalorder %s191, %s194
      %p200 = scmp.eq.s32.totalorder %s24, 0
      %p201 = por %p199, %p200
      %p202 = scmp.ne.s32.totalorder %s191, %s194
      %p203 = scmp.eq.s32.totalorder %s29, 7
      %p204 = por %p202, %p203
      %p205 = scmp.ne.s32.totalorder %s194, %s195
      %p206 = scmp.eq.s32.totalorder %s29, 0
      %p207 = por %p205, %p206
      %p208 = scmp.ne.s32.totalorder %s194, %s195
      %p209 = scmp.eq.s32.totalorder %s30, 7
      %p210 = por %p208, %p209
      %p212 = scmp.ne.s32.totalorder %s195, %s211
      %p213 = scmp.eq.s32.totalorder %s30, 0
      %p214 = por %p212, %p213
      %s215 = ssub.s32 %s31, %s43
      %p216 = scmp.eq.s32.totalorder %s215, 0
      %s218 = sadd.s32 %s217, 1
      %s219 = scalar_select %p216, %s217, %s218
      %p222 = pneg %p216
      %p223 = scmp.eq.s32.totalorder %s24, 7
      %p224 = por %p222, %p223
      %p225 = scmp.ne.s32.totalorder %s217, %s220
      %p226 = scmp.eq.s32.totalorder %s24, 0
      %p227 = por %p225, %p226
      %p228 = scmp.ne.s32.totalorder %s217, %s220
      %p229 = scmp.eq.s32.totalorder %s29, 7
      %p230 = por %p228, %p229
      %p231 = scmp.ne.s32.totalorder %s220, %s221
      %p232 = scmp.eq.s32.totalorder %s29, 0
      %p233 = por %p231, %p232
      %p234 = scmp.ne.s32.totalorder %s220, %s221
      %p235 = scmp.eq.s32.totalorder %s30, 7
      %p236 = por %p234, %p235
      %p238 = scmp.ne.s32.totalorder %s221, %s237
      %p239 = scmp.eq.s32.totalorder %s30, 0
      %p240 = por %p238, %p239
      %s241 = ssub.s32 %s31, %s43
      %p242 = scmp.eq.s32.totalorder %s241, 0
      %s244 = sadd.s32 %s243, 1
      %s245 = scalar_select %p242, %s243, %s244
      %p248 = pneg %p242
      %p249 = scmp.eq.s32.totalorder %s24, 7
      %p250 = por %p248, %p249
      %p251 = scmp.ne.s32.totalorder %s243, %s246
      %p252 = scmp.eq.s32.totalorder %s24, 0
      %p253 = por %p251, %p252
      %p254 = scmp.ne.s32.totalorder %s243, %s246
      %p255 = scmp.eq.s32.totalorder %s29, 7
      %p256 = por %p254, %p255
      %p257 = scmp.ne.s32.totalorder %s246, %s247
      %p258 = scmp.eq.s32.totalorder %s29, 0
      %p259 = por %p257, %p258
      %p260 = scmp.ne.s32.totalorder %s246, %s247
      %p261 = scmp.eq.s32.totalorder %s30, 7
      %p262 = por %p260, %p261
      %p264 = scmp.ne.s32.totalorder %s247, %s263
      %p265 = scmp.eq.s32.totalorder %s30, 0
      %p266 = por %p264, %p265
      %p267 = scmp.le.s32.totalorder 1, %s24
      %p268 = scmp.lt.s32.totalorder %s24, 9
      %p269 = pnand %p267, %p268
      %p270 = pneg %p269
      // Predicated region
      $region9: #{tpu_custom_call.1} parent=5 // pred_check
        _
      $region10: #{tpu_custom_call.1} parent=5 // pred_check_branch
        %272 = sbr.rel (%p269) target = $region12
      $region11: #{tpu_custom_call.1} parent=5 // pred_region
        %s273 = ssub.s32 %s24, 1
        // Predicated region
        $region13: #{tpu_custom_call.1} parent=11 // pred_check
          %p274 = pneg %p153
        $region14: #{tpu_custom_call.1} parent=11 // pred_check_branch
          %276 = sbr.rel (%p274) target = $region16
        $region15: #{tpu_custom_call.1} parent=11 // pred_region
          %s278 = ssub.s32 256, 256
          %279 = vsyncadd [#allocation11], %s278
          %s281 = sshll.u32 [#allocation10], 4
          %s282 = int_to_ptr.vmem [resolvable:$true] %s281
          %284 = dma.hbm_to_vmem [thread:$0]  %s3, 256, %s282, [#allocation11]
        $region16: #{tpu_custom_call.1} parent=11 // pred_fallthru
          _
      $region12: #{tpu_custom_call.1} parent=5 // pred_fallthru
        _
      %p285 = scmp.lt.s32.totalorder %s24, 8
      // Predicated region
      $region17: #{tpu_custom_call.1} parent=5 // pred_check
        %p286 = pneg %p285
      $region18: #{tpu_custom_call.1} parent=5 // pred_check_branch
        %288 = sbr.rel (%p286) target = $region20
      $region19: #{tpu_custom_call.1} parent=5 // pred_region
        // Predicated region
        $region21: #{tpu_custom_call.1} parent=19 // pred_check
          %p289 = pneg %p64
        $region22: #{tpu_custom_call.1} parent=19 // pred_check_branch
          %291 = sbr.rel (%p289) target = $region24
        $region23: #{tpu_custom_call.1} parent=19 // pred_region
          %s292 = sand.u32 %s24, 1
          %s293 = scalar_lea.sflag [#allocation5], %s292
          %s294 = sand.u32 %s54, 1
          %s295 = smul.addr %s294, 32
          %s296 = scalar_lea.vmem [#allocation4], %s295
          %s297 = ssub.s32 %s32, 1
          %p298 = scmp.gt.s32.totalorder %s297, 0
          %s299 = scalar_select %p298, %s297, 0
          %s300 = smul.u32 8, %s299
          %s302 = ssub.s32 512, 512
          %303 = vsyncadd %s293, %s302
          %s304 = smul.addr %s31, 32
          %s305 = sadd.s32 %s300, %s304
          %s306 = smul.addr %s305, 64
          %s307 = scalar_lea.hbm %s0, %s306
          %s309 = sshll.u32 %s296, 4
          %s310 = int_to_ptr.vmem [resolvable:$true] %s309
          %312 = dma.hbm_to_vmem [thread:$0]  %s307, 512, %s310, %s293
        $region24: #{tpu_custom_call.1} parent=19 // pred_fallthru
          _
        // Predicated region
        $region25: #{tpu_custom_call.1} parent=19 // pred_check
          %p313 = pneg %p92
        $region26: #{tpu_custom_call.1} parent=19 // pred_check_branch
          %315 = sbr.rel (%p313) target = $region28
        $region27: #{tpu_custom_call.1} parent=19 // pred_region
          %s316 = sand.u32 %s24, 1
          %s317 = scalar_lea.sflag [#allocation8], %s316
          %s318 = sand.u32 %s82, 1
          %s319 = smul.addr %s318, 32
          %s320 = scalar_lea.vmem [#allocation7], %s319
          %s321 = smul.u32 8, %s32
          %s323 = ssub.s32 512, 512
          %324 = vsyncadd %s317, %s323
          %s325 = smul.addr %s31, 32
          %s326 = sadd.s32 %s321, %s325
          %s327 = smul.addr %s326, 64
          %s328 = scalar_lea.hbm %s1, %s327
          %s330 = sshll.u32 %s320, 4
          %s331 = int_to_ptr.vmem [resolvable:$true] %s330
          %333 = dma.hbm_to_vmem [thread:$0]  %s328, 512, %s331, %s317
        $region28: #{tpu_custom_call.1} parent=19 // pred_fallthru
          _
        // Predicated region
        $region29: #{tpu_custom_call.1} parent=19 // pred_check
          %p334 = pneg %p126
        $region30: #{tpu_custom_call.1} parent=19 // pred_check_branch
          %336 = sbr.rel (%p334) target = $region32
        $region31: #{tpu_custom_call.1} parent=19 // pred_region
          %s337 = sand.u32 %s24, 1
          %s338 = scalar_lea.sflag [#allocation8], %s337
          %s339 = sand.u32 %s116, 1
          %s340 = smul.addr %s339, 32
          %s341 = scalar_lea.vmem [#allocation9], %s340
          %s342 = sadd.s32 %s32, 1
          %p343 = scmp.lt.s32.totalorder %s342, 3
          %s344 = scalar_select %p343, %s342, 3
          %s345 = smul.u32 8, %s344
          %s347 = ssub.s32 512, 512
          %348 = vsyncadd %s338, %s347
          %s349 = smul.addr %s31, 32
          %s350 = sadd.s32 %s345, %s349
          %s351 = smul.addr %s350, 64
          %s352 = scalar_lea.hbm %s2, %s351
          %s354 = sshll.u32 %s341, 4
          %s355 = int_to_ptr.vmem [resolvable:$true] %s354
          %357 = dma.hbm_to_vmem [thread:$0]  %s352, 512, %s355, %s338
        $region32: #{tpu_custom_call.1} parent=19 // pred_fallthru
          _
        // Predicated region
        $region33: #{tpu_custom_call.1} parent=19 // pred_check
          %p358 = pneg %p173
        $region34: #{tpu_custom_call.1} parent=19 // pred_check_branch
          %360 = sbr.rel (%p358) target = $region36
        $region35: #{tpu_custom_call.1} parent=19 // pred_region
          %s361 = sand.u32 %s24, 1
          %s362 = scalar_lea.sflag [#allocation5], %s361
          %s363 = sand.u32 %s163, 1
          %s364 = smul.addr %s363, 64
          %s365 = scalar_lea.vmem [#allocation12], %s364
          %s366 = smul.u32 8, %s32
          %s368 = ssub.s32 1024, 1024
          %369 = vsyncadd %s362, %s368
          %s370 = smul.addr %s366, 128
          %s371 = scalar_lea.hbm %s4, %s370
          %s373 = sshll.u32 %s365, 4
          %s374 = int_to_ptr.vmem [resolvable:$true] %s373
          %376 = dma.hbm_to_vmem [thread:$0]  %s371, 1024, %s374, %s362
        $region36: #{tpu_custom_call.1} parent=19 // pred_fallthru
          _
      $region20: #{tpu_custom_call.1} parent=5 // pred_fallthru
        _
      %p377 = scmp.le.s32.totalorder 1, %s24
      %p378 = scmp.lt.s32.totalorder %s24, 9
      %p379 = pnand %p377, %p378
      %p380 = pneg %p379
      // Predicated region
      $region37: #{tpu_custom_call.1} parent=5 // pred_check
        _
      $region38: #{tpu_custom_call.1} parent=5 // pred_check_branch
        %382 = sbr.rel (%p379) target = $region40
      $region39: #{tpu_custom_call.1} parent=5 // pred_region
        %s383 = ssub.s32 %s24, 1
        %s384 = sand.u32 %s29, 1
        %s385 = scalar_lea.sflag [#allocation5], %s384
        %s386 = sand.u32 %s57, 1
        %s387 = smul.addr %s386, 32
        %s388 = scalar_lea.vmem [#allocation4], %s387
        // Predicated region
        $region41: #{tpu_custom_call.1} parent=39 // pred_check
          %p389 = pneg %p70
        $region42: #{tpu_custom_call.1} parent=39 // pred_check_branch
          %391 = sbr.rel (%p389) target = $region44
        $region43: #{tpu_custom_call.1} parent=39 // pred_region
          %392 = dma.done %s385, 512
        $region44: #{tpu_custom_call.1} parent=39 // pred_fallthru
          _
        %s393 = sand.u32 %s29, 1
        %s394 = scalar_lea.sflag [#allocation8], %s393
        %s395 = sand.u32 %s85, 1
        %s396 = smul.addr %s395, 32
        %s397 = scalar_lea.vmem [#allocation7], %s396
        // Predicated region
        $region45: #{tpu_custom_call.1} parent=39 // pred_check
          %p398 = pneg %p98
        $region46: #{tpu_custom_call.1} parent=39 // pred_check_branch
          %400 = sbr.rel (%p398) target = $region48
        $region47: #{tpu_custom_call.1} parent=39 // pred_region
          %401 = dma.done %s394, 512
        $region48: #{tpu_custom_call.1} parent=39 // pred_fallthru
          _
        %s402 = sand.u32 %s29, 1
        %s403 = scalar_lea.sflag [#allocation8], %s402
        %s404 = sand.u32 %s119, 1
        %s405 = smul.addr %s404, 32
        %s406 = scalar_lea.vmem [#allocation9], %s405
        // Predicated region
        $region49: #{tpu_custom_call.1} parent=39 // pred_check
          %p407 = pneg %p132
        $region50: #{tpu_custom_call.1} parent=39 // pred_check_branch
          %409 = sbr.rel (%p407) target = $region52
        $region51: #{tpu_custom_call.1} parent=39 // pred_region
          %410 = dma.done %s403, 512
        $region52: #{tpu_custom_call.1} parent=39 // pred_fallthru
          _
        // Predicated region
        $region53: #{tpu_custom_call.1} parent=39 // pred_check
          %p411 = pneg %p153
        $region54: #{tpu_custom_call.1} parent=39 // pred_check_branch
          %413 = sbr.rel (%p411) target = $region56
        $region55: #{tpu_custom_call.1} parent=39 // pred_region
          %414 = dma.done [#allocation11], 256
        $region56: #{tpu_custom_call.1} parent=39 // pred_fallthru
          _
        %s415 = sand.u32 %s29, 1
        %s416 = scalar_lea.sflag [#allocation5], %s415
        %s417 = sand.u32 %s166, 1
        %s418 = smul.addr %s417, 64
        %s419 = scalar_lea.vmem [#allocation12], %s418
        // Predicated region
        $region57: #{tpu_custom_call.1} parent=39 // pred_check
          %p420 = pneg %p179
        $region58: #{tpu_custom_call.1} parent=39 // pred_check_branch
          %422 = sbr.rel (%p420) target = $region60
        $region59: #{tpu_custom_call.1} parent=39 // pred_region
          %423 = dma.done %s416, 1024
        $region60: #{tpu_custom_call.1} parent=39 // pred_fallthru
          _
        %s424 = sand.u32 %s29, 1
        %s425 = scalar_lea.sflag [#allocation5], %s424
        %s426 = sand.u32 %s57, 1
        %s427 = smul.addr %s426, 32
        %s428 = scalar_lea.vmem [#allocation4], %s427
        %p429 = pneg %p70
        %p430 = pneg %p67
        %s431 = sand.u32 %s29, 1
        %s432 = scalar_lea.sflag [#allocation8], %s431
        %s433 = sand.u32 %s85, 1
        %s434 = smul.addr %s433, 32
        %s435 = scalar_lea.vmem [#allocation7], %s434
        %p436 = pneg %p98
        %p437 = pneg %p95
        %s438 = sand.u32 %s29, 1
        %s439 = scalar_lea.sflag [#allocation8], %s438
        %s440 = sand.u32 %s119, 1
        %s441 = smul.addr %s440, 32
        %s442 = scalar_lea.vmem [#allocation9], %s441
        %p443 = pneg %p132
        %p444 = pneg %p129
        %p445 = pneg %p153
        %p446 = pneg %p150
        %s447 = sand.u32 %s29, 1
        %s448 = scalar_lea.sflag [#allocation5], %s447
        %s449 = sand.u32 %s166, 1
        %s450 = smul.addr %s449, 64
        %s451 = scalar_lea.vmem [#allocation12], %s450
        %p452 = pneg %p179
        %p453 = pneg %p176
        %p454 = pneg %p207
        %p455 = pneg %p204
        %s456 = sand.u32 %s194, 1
        %s457 = scalar_lea.sflag [#allocation6], %s456
        %s458 = sand.u32 %s194, 1
        %s459 = smul.addr %s458, 64
        %s460 = scalar_lea.vmem [#allocation13], %s459
        %p461 = pneg %p233
        %p462 = pneg %p230
        %p463 = scmp.lt.s32.totalorder %s33, 1
        %s464 = scalar_select %p463, %s33, 1
        %s465 = smul.addr %s464, 8
        %s466 = scalar_lea.vmem %s6, %s465
        %p467 = pneg %p259
        %p468 = pneg %p256
        %p469 = scmp.lt.s32.totalorder %s33, 1
        %s470 = scalar_select %p469, %s33, 1
        %s471 = smul.addr %s470, 8
        %s472 = scalar_lea.vmem %s7, %s471
        %s473 = ssub.s32 %s34, 1
        %p474 = scmp.gt.s32.totalorder %s473, 0
        %s475 = scalar_select %p474, %s473, 0
        %s476 = smul.u32 8, %s475
        %s477 = smul.u32 8, %s34
        %s478 = sadd.s32 %s34, 1
        %p479 = scmp.lt.s32.totalorder %s478, 3
        %s480 = scalar_select %p479, %s478, 3
        %s481 = smul.u32 8, %s480
        %s482 = smul.u32 8, %s34
        %s483 = smul.u32 8, %s34
        %p484 = scmp.lt.s32.totalorder %s33, 1
        %s485 = scalar_select %p484, %s33, 1
        %s486 = smul.addr %s485, 8
        %s487 = scalar_lea.vmem %s6, %s486
        %p488 = scmp.lt.s32.totalorder %s33, 1
        %s489 = scalar_select %p488, %s33, 1
        %s490 = smul.addr %s489, 8
        %s491 = scalar_lea.vmem %s7, %s490
        %p492 = scmp.eq.s32.totalorder %s34, 0
        // Predicated region
        $region61: #{tpu_custom_call.1} parent=39 // pred_check
          %p493 = pneg %p492
        $region62: #{tpu_custom_call.1} parent=39 // pred_check_branch
          %495 = sbr.rel (%p493) target = $region64
        $region63: #{tpu_custom_call.1} parent=39 // pred_region
          %vm496 = vcmask 7168
          %497 = vst.msk [vmem:[%s487] sm:$0xff] %vm496, 0.0
          %498 = vst.msk [vmem:[%s491] sm:$0xff] %vm496, 0.0
          %499 = vst [vmem:[#allocation3] sm:$0xff] 0.0
          %500 = vst [vmem:[#allocation3 + $0x8] sm:$0xff] 0.0
          %501 = vst [vmem:[#allocation3 + $0x10] sm:$0xff] 0.0
          %502 = vst [vmem:[#allocation3 + $0x18] sm:$0xff] 0.0
          %503 = vst [vmem:[#allocation3 + $0x20] sm:$0xff] 0.0
          %504 = vst [vmem:[#allocation3 + $0x28] sm:$0xff] 0.0
          %505 = vst [vmem:[#allocation3 + $0x30] sm:$0xff] 0.0
          %506 = vst [vmem:[#allocation3 + $0x38] sm:$0xff] 0.0
          %507 = vst [vmem:[#allocation3 + $0x40] sm:$0xff] 0.0
          %508 = vst [vmem:[#allocation3 + $0x48] sm:$0xff] 0.0
          %509 = vst [vmem:[#allocation3 + $0x50] sm:$0xff] 0.0
          %510 = vst [vmem:[#allocation3 + $0x58] sm:$0xff] 0.0
          %511 = vst [vmem:[#allocation3 + $0x60] sm:$0xff] 0.0
          %512 = vst [vmem:[#allocation3 + $0x68] sm:$0xff] 0.0
          %513 = vst [vmem:[#allocation3 + $0x70] sm:$0xff] 0.0
          %514 = vst [vmem:[#allocation3 + $0x78] sm:$0xff] 0.0
          %515 = vst [vmem:[#allocation3 + $0x80] sm:$0xff] 0.0
          %516 = vst [vmem:[#allocation3 + $0x88] sm:$0xff] 0.0
          %517 = vst [vmem:[#allocation3 + $0x90] sm:$0xff] 0.0
          %518 = vst [vmem:[#allocation3 + $0x98] sm:$0xff] 0.0
          %519 = vst [vmem:[#allocation3 + $0xa0] sm:$0xff] 0.0
          %520 = vst [vmem:[#allocation3 + $0xa8] sm:$0xff] 0.0
          %521 = vst [vmem:[#allocation3 + $0xb0] sm:$0xff] 0.0
          %522 = vst [vmem:[#allocation3 + $0xb8] sm:$0xff] 0.0
          %523 = vst [vmem:[#allocation3 + $0xc0] sm:$0xff] 0.0
          %524 = vst [vmem:[#allocation3 + $0xc8] sm:$0xff] 0.0
          %525 = vst [vmem:[#allocation3 + $0xd0] sm:$0xff] 0.0
          %526 = vst [vmem:[#allocation3 + $0xd8] sm:$0xff] 0.0
          %527 = vst [vmem:[#allocation3 + $0xe0] sm:$0xff] 0.0
          %528 = vst [vmem:[#allocation3 + $0xe8] sm:$0xff] 0.0
          %529 = vst [vmem:[#allocation3 + $0xf0] sm:$0xff] 0.0
          %530 = vst [vmem:[#allocation3 + $0xf8] sm:$0xff] 0.0
          %531 = vst [vmem:[#allocation3 + $0x100] sm:$0xff] 0.0
          %532 = vst [vmem:[#allocation3 + $0x108] sm:$0xff] 0.0
          %533 = vst [vmem:[#allocation3 + $0x110] sm:$0xff] 0.0
          %534 = vst [vmem:[#allocation3 + $0x118] sm:$0xff] 0.0
          %535 = vst [vmem:[#allocation3 + $0x120] sm:$0xff] 0.0
          %536 = vst [vmem:[#allocation3 + $0x128] sm:$0xff] 0.0
          %537 = vst [vmem:[#allocation3 + $0x130] sm:$0xff] 0.0
          %538 = vst [vmem:[#allocation3 + $0x138] sm:$0xff] 0.0
          %539 = vst [vmem:[#allocation3 + $0x140] sm:$0xff] 0.0
          %540 = vst [vmem:[#allocation3 + $0x148] sm:$0xff] 0.0
          %541 = vst [vmem:[#allocation3 + $0x150] sm:$0xff] 0.0
          %542 = vst [vmem:[#allocation3 + $0x158] sm:$0xff] 0.0
          %543 = vst [vmem:[#allocation3 + $0x160] sm:$0xff] 0.0
          %544 = vst [vmem:[#allocation3 + $0x168] sm:$0xff] 0.0
          %545 = vst [vmem:[#allocation3 + $0x170] sm:$0xff] 0.0
          %546 = vst [vmem:[#allocation3 + $0x178] sm:$0xff] 0.0
          %547 = vst [vmem:[#allocation3 + $0x180] sm:$0xff] 0.0
          %548 = vst [vmem:[#allocation3 + $0x188] sm:$0xff] 0.0
          %549 = vst [vmem:[#allocation3 + $0x190] sm:$0xff] 0.0
          %550 = vst [vmem:[#allocation3 + $0x198] sm:$0xff] 0.0
          %551 = vst [vmem:[#allocation3 + $0x1a0] sm:$0xff] 0.0
          %552 = vst [vmem:[#allocation3 + $0x1a8] sm:$0xff] 0.0
          %553 = vst [vmem:[#allocation3 + $0x1b0] sm:$0xff] 0.0
          %554 = vst [vmem:[#allocation3 + $0x1b8] sm:$0xff] 0.0
          %555 = vst [vmem:[#allocation3 + $0x1c0] sm:$0xff] 0.0
          %556 = vst [vmem:[#allocation3 + $0x1c8] sm:$0xff] 0.0
          %557 = vst [vmem:[#allocation3 + $0x1d0] sm:$0xff] 0.0
          %558 = vst [vmem:[#allocation3 + $0x1d8] sm:$0xff] 0.0
          %559 = vst [vmem:[#allocation3 + $0x1e0] sm:$0xff] 0.0
          %560 = vst [vmem:[#allocation3 + $0x1e8] sm:$0xff] 0.0
          %561 = vst [vmem:[#allocation3 + $0x1f0] sm:$0xff] 0.0
          %562 = vst [vmem:[#allocation3 + $0x1f8] sm:$0xff] 0.0
          %563 = vst [vmem:[#allocation3 + $0x200] sm:$0xff] 0.0
          %564 = vst [vmem:[#allocation3 + $0x208] sm:$0xff] 0.0
          %565 = vst [vmem:[#allocation3 + $0x210] sm:$0xff] 0.0
          %566 = vst [vmem:[#allocation3 + $0x218] sm:$0xff] 0.0
          %567 = vst [vmem:[#allocation3 + $0x220] sm:$0xff] 0.0
          %568 = vst [vmem:[#allocation3 + $0x228] sm:$0xff] 0.0
          %569 = vst [vmem:[#allocation3 + $0x230] sm:$0xff] 0.0
          %570 = vst [vmem:[#allocation3 + $0x238] sm:$0xff] 0.0
          %571 = vst [vmem:[#allocation3 + $0x240] sm:$0xff] 0.0
          %572 = vst [vmem:[#allocation3 + $0x248] sm:$0xff] 0.0
          %573 = vst [vmem:[#allocation3 + $0x250] sm:$0xff] 0.0
          %574 = vst [vmem:[#allocation3 + $0x258] sm:$0xff] 0.0
          %575 = vst [vmem:[#allocation3 + $0x260] sm:$0xff] 0.0
          %576 = vst [vmem:[#allocation3 + $0x268] sm:$0xff] 0.0
          %577 = vst [vmem:[#allocation3 + $0x270] sm:$0xff] 0.0
          %578 = vst [vmem:[#allocation3 + $0x278] sm:$0xff] 0.0
          %579 = vst [vmem:[#allocation3 + $0x280] sm:$0xff] 0.0
          %580 = vst [vmem:[#allocation3 + $0x288] sm:$0xff] 0.0
          %581 = vst [vmem:[#allocation3 + $0x290] sm:$0xff] 0.0
          %582 = vst [vmem:[#allocation3 + $0x298] sm:$0xff] 0.0
          %583 = vst [vmem:[#allocation3 + $0x2a0] sm:$0xff] 0.0
          %584 = vst [vmem:[#allocation3 + $0x2a8] sm:$0xff] 0.0
          %585 = vst [vmem:[#allocation3 + $0x2b0] sm:$0xff] 0.0
          %586 = vst [vmem:[#allocation3 + $0x2b8] sm:$0xff] 0.0
          %587 = vst [vmem:[#allocation3 + $0x2c0] sm:$0xff] 0.0
          %588 = vst [vmem:[#allocation3 + $0x2c8] sm:$0xff] 0.0
          %589 = vst [vmem:[#allocation3 + $0x2d0] sm:$0xff] 0.0
          %590 = vst [vmem:[#allocation3 + $0x2d8] sm:$0xff] 0.0
          %591 = vst [vmem:[#allocation3 + $0x2e0] sm:$0xff] 0.0
          %592 = vst [vmem:[#allocation3 + $0x2e8] sm:$0xff] 0.0
          %593 = vst [vmem:[#allocation3 + $0x2f0] sm:$0xff] 0.0
          %594 = vst [vmem:[#allocation3 + $0x2f8] sm:$0xff] 0.0
          %595 = vst [vmem:[#allocation3 + $0x300] sm:$0xff] 0.0
          %596 = vst [vmem:[#allocation3 + $0x308] sm:$0xff] 0.0
          %597 = vst [vmem:[#allocation3 + $0x310] sm:$0xff] 0.0
          %598 = vst [vmem:[#allocation3 + $0x318] sm:$0xff] 0.0
          %599 = vst [vmem:[#allocation3 + $0x320] sm:$0xff] 0.0
          %600 = vst [vmem:[#allocation3 + $0x328] sm:$0xff] 0.0
          %601 = vst [vmem:[#allocation3 + $0x330] sm:$0xff] 0.0
          %602 = vst [vmem:[#allocation3 + $0x338] sm:$0xff] 0.0
          %603 = vst [vmem:[#allocation3 + $0x340] sm:$0xff] 0.0
          %604 = vst [vmem:[#allocation3 + $0x348] sm:$0xff] 0.0
          %605 = vst [vmem:[#allocation3 + $0x350] sm:$0xff] 0.0
          %606 = vst [vmem:[#allocation3 + $0x358] sm:$0xff] 0.0
          %607 = vst [vmem:[#allocation3 + $0x360] sm:$0xff] 0.0
          %608 = vst [vmem:[#allocation3 + $0x368] sm:$0xff] 0.0
          %609 = vst [vmem:[#allocation3 + $0x370] sm:$0xff] 0.0
          %610 = vst [vmem:[#allocation3 + $0x378] sm:$0xff] 0.0
          %611 = vst [vmem:[#allocation3 + $0x380] sm:$0xff] 0.0
          %612 = vst [vmem:[#allocation3 + $0x388] sm:$0xff] 0.0
          %613 = vst [vmem:[#allocation3 + $0x390] sm:$0xff] 0.0
          %614 = vst [vmem:[#allocation3 + $0x398] sm:$0xff] 0.0
          %615 = vst [vmem:[#allocation3 + $0x3a0] sm:$0xff] 0.0
          %616 = vst [vmem:[#allocation3 + $0x3a8] sm:$0xff] 0.0
          %617 = vst [vmem:[#allocation3 + $0x3b0] sm:$0xff] 0.0
          %618 = vst [vmem:[#allocation3 + $0x3b8] sm:$0xff] 0.0
          %619 = vst [vmem:[#allocation3 + $0x3c0] sm:$0xff] 0.0
          %620 = vst [vmem:[#allocation3 + $0x3c8] sm:$0xff] 0.0
          %621 = vst [vmem:[#allocation3 + $0x3d0] sm:$0xff] 0.0
          %622 = vst [vmem:[#allocation3 + $0x3d8] sm:$0xff] 0.0
          %623 = vst [vmem:[#allocation3 + $0x3e0] sm:$0xff] 0.0
          %624 = vst [vmem:[#allocation3 + $0x3e8] sm:$0xff] 0.0
          %625 = vst [vmem:[#allocation3 + $0x3f0] sm:$0xff] 0.0
          %626 = vst [vmem:[#allocation3 + $0x3f8] sm:$0xff] 0.0
          %627 = vst [vmem:[#allocation3 + $0x400] sm:$0xff] 0.0
          %628 = vst [vmem:[#allocation3 + $0x408] sm:$0xff] 0.0
          %629 = vst [vmem:[#allocation3 + $0x410] sm:$0xff] 0.0
          %630 = vst [vmem:[#allocation3 + $0x418] sm:$0xff] 0.0
          %631 = vst [vmem:[#allocation3 + $0x420] sm:$0xff] 0.0
          %632 = vst [vmem:[#allocation3 + $0x428] sm:$0xff] 0.0
          %633 = vst [vmem:[#allocation3 + $0x430] sm:$0xff] 0.0
          %634 = vst [vmem:[#allocation3 + $0x438] sm:$0xff] 0.0
          %635 = vst [vmem:[#allocation3 + $0x440] sm:$0xff] 0.0
          %636 = vst [vmem:[#allocation3 + $0x448] sm:$0xff] 0.0
          %637 = vst [vmem:[#allocation3 + $0x450] sm:$0xff] 0.0
          %638 = vst [vmem:[#allocation3 + $0x458] sm:$0xff] 0.0
          %639 = vst [vmem:[#allocation3 + $0x460] sm:$0xff] 0.0
          %640 = vst [vmem:[#allocation3 + $0x468] sm:$0xff] 0.0
          %641 = vst [vmem:[#allocation3 + $0x470] sm:$0xff] 0.0
          %642 = vst [vmem:[#allocation3 + $0x478] sm:$0xff] 0.0
          %643 = vst [vmem:[#allocation3 + $0x480] sm:$0xff] 0.0
          %644 = vst [vmem:[#allocation3 + $0x488] sm:$0xff] 0.0
          %645 = vst [vmem:[#allocation3 + $0x490] sm:$0xff] 0.0
          %646 = vst [vmem:[#allocation3 + $0x498] sm:$0xff] 0.0
          %647 = vst [vmem:[#allocation3 + $0x4a0] sm:$0xff] 0.0
          %648 = vst [vmem:[#allocation3 + $0x4a8] sm:$0xff] 0.0
          %649 = vst [vmem:[#allocation3 + $0x4b0] sm:$0xff] 0.0
          %650 = vst [vmem:[#allocation3 + $0x4b8] sm:$0xff] 0.0
          %651 = vst [vmem:[#allocation3 + $0x4c0] sm:$0xff] 0.0
          %652 = vst [vmem:[#allocation3 + $0x4c8] sm:$0xff] 0.0
          %653 = vst [vmem:[#allocation3 + $0x4d0] sm:$0xff] 0.0
          %654 = vst [vmem:[#allocation3 + $0x4d8] sm:$0xff] 0.0
          %655 = vst [vmem:[#allocation3 + $0x4e0] sm:$0xff] 0.0
          %656 = vst [vmem:[#allocation3 + $0x4e8] sm:$0xff] 0.0
          %657 = vst [vmem:[#allocation3 + $0x4f0] sm:$0xff] 0.0
          %658 = vst [vmem:[#allocation3 + $0x4f8] sm:$0xff] 0.0
          %659 = vst [vmem:[#allocation3 + $0x500] sm:$0xff] 0.0
          %660 = vst [vmem:[#allocation3 + $0x508] sm:$0xff] 0.0
          %661 = vst [vmem:[#allocation3 + $0x510] sm:$0xff] 0.0
          %662 = vst [vmem:[#allocation3 + $0x518] sm:$0xff] 0.0
          %663 = vst [vmem:[#allocation3 + $0x520] sm:$0xff] 0.0
          %664 = vst [vmem:[#allocation3 + $0x528] sm:$0xff] 0.0
          %665 = vst [vmem:[#allocation3 + $0x530] sm:$0xff] 0.0
          %666 = vst [vmem:[#allocation3 + $0x538] sm:$0xff] 0.0
          %667 = vst [vmem:[#allocation3 + $0x540] sm:$0xff] 0.0
          %668 = vst [vmem:[#allocation3 + $0x548] sm:$0xff] 0.0
          %669 = vst [vmem:[#allocation3 + $0x550] sm:$0xff] 0.0
          %670 = vst [vmem:[#allocation3 + $0x558] sm:$0xff] 0.0
          %671 = vst [vmem:[#allocation3 + $0x560] sm:$0xff] 0.0
          %672 = vst [vmem:[#allocation3 + $0x568] sm:$0xff] 0.0
          %673 = vst [vmem:[#allocation3 + $0x570] sm:$0xff] 0.0
          %674 = vst [vmem:[#allocation3 + $0x578] sm:$0xff] 0.0
          %675 = vst [vmem:[#allocation3 + $0x580] sm:$0xff] 0.0
          %676 = vst [vmem:[#allocation3 + $0x588] sm:$0xff] 0.0
          %677 = vst [vmem:[#allocation3 + $0x590] sm:$0xff] 0.0
          %678 = vst [vmem:[#allocation3 + $0x598] sm:$0xff] 0.0
          %679 = vst [vmem:[#allocation3 + $0x5a0] sm:$0xff] 0.0
          %680 = vst [vmem:[#allocation3 + $0x5a8] sm:$0xff] 0.0
          %681 = vst [vmem:[#allocation3 + $0x5b0] sm:$0xff] 0.0
          %682 = vst [vmem:[#allocation3 + $0x5b8] sm:$0xff] 0.0
          %683 = vst [vmem:[#allocation3 + $0x5c0] sm:$0xff] 0.0
          %684 = vst [vmem:[#allocation3 + $0x5c8] sm:$0xff] 0.0
          %685 = vst [vmem:[#allocation3 + $0x5d0] sm:$0xff] 0.0
          %686 = vst [vmem:[#allocation3 + $0x5d8] sm:$0xff] 0.0
          %687 = vst [vmem:[#allocation3 + $0x5e0] sm:$0xff] 0.0
          %688 = vst [vmem:[#allocation3 + $0x5e8] sm:$0xff] 0.0
          %689 = vst [vmem:[#allocation3 + $0x5f0] sm:$0xff] 0.0
          %690 = vst [vmem:[#allocation3 + $0x5f8] sm:$0xff] 0.0
          %691 = vst [vmem:[#allocation3 + $0x600] sm:$0xff] 0.0
          %692 = vst [vmem:[#allocation3 + $0x608] sm:$0xff] 0.0
          %693 = vst [vmem:[#allocation3 + $0x610] sm:$0xff] 0.0
          %694 = vst [vmem:[#allocation3 + $0x618] sm:$0xff] 0.0
          %695 = vst [vmem:[#allocation3 + $0x620] sm:$0xff] 0.0
          %696 = vst [vmem:[#allocation3 + $0x628] sm:$0xff] 0.0
          %697 = vst [vmem:[#allocation3 + $0x630] sm:$0xff] 0.0
          %698 = vst [vmem:[#allocation3 + $0x638] sm:$0xff] 0.0
          %699 = vst [vmem:[#allocation3 + $0x640] sm:$0xff] 0.0
          %700 = vst [vmem:[#allocation3 + $0x648] sm:$0xff] 0.0
          %701 = vst [vmem:[#allocation3 + $0x650] sm:$0xff] 0.0
          %702 = vst [vmem:[#allocation3 + $0x658] sm:$0xff] 0.0
          %703 = vst [vmem:[#allocation3 + $0x660] sm:$0xff] 0.0
          %704 = vst [vmem:[#allocation3 + $0x668] sm:$0xff] 0.0
          %705 = vst [vmem:[#allocation3 + $0x670] sm:$0xff] 0.0
          %706 = vst [vmem:[#allocation3 + $0x678] sm:$0xff] 0.0
          %707 = vst [vmem:[#allocation3 + $0x680] sm:$0xff] 0.0
          %708 = vst [vmem:[#allocation3 + $0x688] sm:$0xff] 0.0
          %709 = vst [vmem:[#allocation3 + $0x690] sm:$0xff] 0.0
          %710 = vst [vmem:[#allocation3 + $0x698] sm:$0xff] 0.0
          %711 = vst [vmem:[#allocation3 + $0x6a0] sm:$0xff] 0.0
          %712 = vst [vmem:[#allocation3 + $0x6a8] sm:$0xff] 0.0
          %713 = vst [vmem:[#allocation3 + $0x6b0] sm:$0xff] 0.0
          %714 = vst [vmem:[#allocation3 + $0x6b8] sm:$0xff] 0.0
          %715 = vst [vmem:[#allocation3 + $0x6c0] sm:$0xff] 0.0
          %716 = vst [vmem:[#allocation3 + $0x6c8] sm:$0xff] 0.0
          %717 = vst [vmem:[#allocation3 + $0x6d0] sm:$0xff] 0.0
          %718 = vst [vmem:[#allocation3 + $0x6d8] sm:$0xff] 0.0
          %719 = vst [vmem:[#allocation3 + $0x6e0] sm:$0xff] 0.0
          %720 = vst [vmem:[#allocation3 + $0x6e8] sm:$0xff] 0.0
          %721 = vst [vmem:[#allocation3 + $0x6f0] sm:$0xff] 0.0
          %722 = vst [vmem:[#allocation3 + $0x6f8] sm:$0xff] 0.0
          %723 = vst [vmem:[#allocation3 + $0x700] sm:$0xff] 0.0
          %724 = vst [vmem:[#allocation3 + $0x708] sm:$0xff] 0.0
          %725 = vst [vmem:[#allocation3 + $0x710] sm:$0xff] 0.0
          %726 = vst [vmem:[#allocation3 + $0x718] sm:$0xff] 0.0
          %727 = vst [vmem:[#allocation3 + $0x720] sm:$0xff] 0.0
          %728 = vst [vmem:[#allocation3 + $0x728] sm:$0xff] 0.0
          %729 = vst [vmem:[#allocation3 + $0x730] sm:$0xff] 0.0
          %730 = vst [vmem:[#allocation3 + $0x738] sm:$0xff] 0.0
          %731 = vst [vmem:[#allocation3 + $0x740] sm:$0xff] 0.0
          %732 = vst [vmem:[#allocation3 + $0x748] sm:$0xff] 0.0
          %733 = vst [vmem:[#allocation3 + $0x750] sm:$0xff] 0.0
          %734 = vst [vmem:[#allocation3 + $0x758] sm:$0xff] 0.0
          %735 = vst [vmem:[#allocation3 + $0x760] sm:$0xff] 0.0
          %736 = vst [vmem:[#allocation3 + $0x768] sm:$0xff] 0.0
          %737 = vst [vmem:[#allocation3 + $0x770] sm:$0xff] 0.0
          %738 = vst [vmem:[#allocation3 + $0x778] sm:$0xff] 0.0
          %739 = vst [vmem:[#allocation3 + $0x780] sm:$0xff] 0.0
          %740 = vst [vmem:[#allocation3 + $0x788] sm:$0xff] 0.0
          %741 = vst [vmem:[#allocation3 + $0x790] sm:$0xff] 0.0
          %742 = vst [vmem:[#allocation3 + $0x798] sm:$0xff] 0.0
          %743 = vst [vmem:[#allocation3 + $0x7a0] sm:$0xff] 0.0
          %744 = vst [vmem:[#allocation3 + $0x7a8] sm:$0xff] 0.0
          %745 = vst [vmem:[#allocation3 + $0x7b0] sm:$0xff] 0.0
          %746 = vst [vmem:[#allocation3 + $0x7b8] sm:$0xff] 0.0
          %747 = vst [vmem:[#allocation3 + $0x7c0] sm:$0xff] 0.0
          %748 = vst [vmem:[#allocation3 + $0x7c8] sm:$0xff] 0.0
          %749 = vst [vmem:[#allocation3 + $0x7d0] sm:$0xff] 0.0
          %750 = vst [vmem:[#allocation3 + $0x7d8] sm:$0xff] 0.0
          %751 = vst [vmem:[#allocation3 + $0x7e0] sm:$0xff] 0.0
          %752 = vst [vmem:[#allocation3 + $0x7e8] sm:$0xff] 0.0
          %753 = vst [vmem:[#allocation3 + $0x7f0] sm:$0xff] 0.0
          %754 = vst [vmem:[#allocation3 + $0x7f8] sm:$0xff] 0.0
        $region64: #{tpu_custom_call.1} parent=39 // pred_fallthru
          _
        %v755 = vld [vmem:[%s388 + $0x14] sm:$0xff]
        %v756 = vld [vmem:[%s388 + $0x1c] sm:$0xf]
        %759 = vrot.lane.b32.xlu0 %v755, 17
        %v760 = vpop.permute.xlu0 %759
        %761 = vrot.lane.b32.xlu0 %v756, 17
        %v762 = vpop.permute.xlu0 %761
        %v763 = vrot.slane %v760, 4
        %v764 = vrot.slane %v762, 4
        %vm765 = vcmask 1043456
        %v766 = vsel %vm765, %v763, %v764
        %vm767 = vcmask 138240
        %v768 = vsel %vm767, %v760, %v766
        %771 = vst [vmem:[#allocation2] sm:$0xff] %v768
        %vm772 = vcmask 134144
        %773 = vst.msk [vmem:[#allocation2 + $0x8] sm:$0xf] %vm772, %v762
        %v774 = vld [vmem:[%s397] sm:$0xff]
        %v775 = vld [vmem:[%s397 + $0x8] sm:$0xff]
        %v776 = vld [vmem:[%s397 + $0x10] sm:$0xff]
        %v777 = vld [vmem:[%s397 + $0x18] sm:$0xff]
        %782 = vrot.lane.b32.xlu0 %v774, 17
        %v783 = vpop.permute.xlu0 %782
        %784 = vrot.lane.b32.xlu0 %v775, 17
        %v785 = vpop.permute.xlu0 %784
        %786 = vrot.lane.b32.xlu0 %v776, 17
        %v787 = vpop.permute.xlu0 %786
        %788 = vrot.lane.b32.xlu0 %v777, 17
        %v789 = vpop.permute.xlu0 %788
        %v790 = vrot.slane %v783, 4
        %v791 = vrot.slane %v785, 4
        %v792 = vrot.slane %v787, 4
        %v793 = vrot.slane %v789, 4
        %v794 = vsel %vm767, %v790, %v783
        %v795 = vsel %vm765, %v790, %v791
        %v796 = vsel %vm767, %v795, %v785
        %v797 = vsel %vm765, %v791, %v792
        %v798 = vsel %vm767, %v797, %v787
        %v799 = vsel %vm765, %v792, %v793
        %v800 = vsel %vm767, %v799, %v789
        %vm806 = vcmask 1043592
        %vm807 = vcmask 1047556
        %vm808 = vmor %vm807, %vm806
        %809 = vst.msk [vmem:[#allocation2 + $0x8] sm:$0xff] %vm808, %v794
        %810 = vst [vmem:[#allocation2 + $0x10] sm:$0xff] %v796
        %811 = vst [vmem:[#allocation2 + $0x18] sm:$0xff] %v798
        %812 = vst [vmem:[#allocation2 + $0x20] sm:$0xff] %v800
        %813 = vst.msk [vmem:[#allocation2 + $0x28] sm:$0xf] %vm772, %v793
        %v814 = vld [vmem:[%s406] sm:$0xff]
        %v815 = vld [vmem:[%s406 + $0x8] sm:$0xf]
        %818 = vrot.lane.b32.xlu0 %v814, 17
        %v819 = vpop.permute.xlu0 %818
        %820 = vrot.lane.b32.xlu0 %v815, 17
        %v821 = vpop.permute.xlu0 %820
        %v822 = vrot.slane %v819, 4
        %v823 = vsel %vm767, %v822, %v819
        %v824 = vsel %vm767, %v822, %v821
        %827 = vst.msk [vmem:[#allocation2 + $0x28] sm:$0xff] %vm808, %v823
        %vm828 = vcmask 273408
        %829 = vst.msk [vmem:[#allocation2 + $0x30] sm:$0xf] %vm828, %v824
        %s830 = scalar_lea.vmem %s419, 1 [#allocation12]
        %v831 = vld [vmem:[%s830] ss:$8 sm:$0xf]
        %v832 = vld [vmem:[%s830] ss:$8 sm:$0xf0]
        %v833 = vor.u32 %v831, %v832
        %v834 = vld [vmem:[%s419] ss:$8 sm:$0xf]
        %v835 = vld [vmem:[%s419] ss:$8 sm:$0xf0]
        %v836 = vor.u32 %v834, %v835
        %s837 = scalar_lea.vmem %s419, 3 [#allocation12]
        %v838 = vld [vmem:[%s837] ss:$8 sm:$0xf]
        %v839 = vld [vmem:[%s837] ss:$8 sm:$0xf0]
        %v840 = vor.u32 %v838, %v839
        %s841 = scalar_lea.vmem %s419, 2 [#allocation12]
        %v842 = vld [vmem:[%s841] ss:$8 sm:$0xf]
        %v843 = vld [vmem:[%s841] ss:$8 sm:$0xf0]
        %v844 = vor.u32 %v842, %v843
        %s845 = scalar_lea.vmem %s419, 5 [#allocation12]
        %v846 = vld [vmem:[%s845] ss:$8 sm:$0xf]
        %v847 = vld [vmem:[%s845] ss:$8 sm:$0xf0]
        %v848 = vor.u32 %v846, %v847
        %s849 = scalar_lea.vmem %s419, 4 [#allocation12]
        %v850 = vld [vmem:[%s849] ss:$8 sm:$0xf]
        %v851 = vld [vmem:[%s849] ss:$8 sm:$0xf0]
        %v852 = vor.u32 %v850, %v851
        %v853 = vld [vmem:[#allocation2] sm:$0xff]
        %v854 = vld [vmem:[#allocation2 + $0x8] sm:$0xff]
        %v855 = vld [vmem:[#allocation2 + $0x10] sm:$0xff]
        %v856 = vld [vmem:[#allocation2 + $0x18] sm:$0xff]
        %v857 = vmul.f32 %v836, %v844
        %v858 = vmul.f32 %v857, %v852
        %v860 = vlaneseq
        %v861 = vshrl.u32 %v860, 7
        %v862 = vsub.s32 0, %v861
        %v863 = vrot.slane %v858, %v862
        %v864 = vlaneseq
        %v865 = vshrl.u32 %v864, 7
        %v866 = vsub.s32 1, %v865
        %v867 = vrot.slane %v858, %v866
        %v868 = vlaneseq
        %v869 = vshrl.u32 %v868, 7
        %v870 = vsub.s32 2, %v869
        %v871 = vrot.slane %v858, %v870
        %v872 = vlaneseq
        %v873 = vshrl.u32 %v872, 7
        %v874 = vsub.s32 3, %v873
        %v875 = vrot.slane %v858, %v874
        %v876 = vlaneseq
        %v877 = vshrl.u32 %v876, 7
        %v878 = vsub.s32 4, %v877
        %v879 = vrot.slane %v858, %v878
        %v880 = vlaneseq
        %v881 = vshrl.u32 %v880, 7
        %v882 = vsub.s32 5, %v881
        %v883 = vrot.slane %v858, %v882
        %v884 = vlaneseq
        %v885 = vshrl.u32 %v884, 7
        %v886 = vsub.s32 6, %v885
        %v887 = vrot.slane %v858, %v886
        %v888 = vlaneseq
        %v889 = vshrl.u32 %v888, 7
        %v890 = vsub.s32 7, %v889
        %v891 = vrot.slane %v858, %v890
        %v892 = vcombine.low %v863, %v867
        %v893 = vcombine.low %v871, %v875
        %v894 = vcombine.low %v879, %v883
        %v895 = vcombine.low %v887, %v891
        %v900 = vmul.f32 %v853, %v892
        %v901 = vmul.f32 %v854, %v893
        %v902 = vmul.f32 %v855, %v894
        %v903 = vmul.f32 %v856, %v895
        %v908 = vcombine.high %v900, %v900
        %v909 = vcombine.high %v901, %v901
        %v910 = vcombine.high %v902, %v902
        %v911 = vcombine.high %v903, %v903
        %916 = vst [vmem:[#allocation3] sm:$0xf] %v900
        %917 = vst [vmem:[#allocation3 + $0x8] sm:$0xf] %v908
        %918 = vst [vmem:[#allocation3 + $0x10] sm:$0xf] %v901
        %919 = vst [vmem:[#allocation3 + $0x18] sm:$0xf] %v909
        %920 = vst [vmem:[#allocation3 + $0x20] sm:$0xf] %v902
        %921 = vst [vmem:[#allocation3 + $0x28] sm:$0xf] %v910
        %922 = vst [vmem:[#allocation3 + $0x30] sm:$0xf] %v903
        %923 = vst [vmem:[#allocation3 + $0x38] sm:$0xf] %v911
        %v924 = vld [vmem:[#allocation2] sm:$0xff]
        %v925 = vld [vmem:[#allocation2 + $0x8] sm:$0xff]
        %v926 = vld [vmem:[#allocation2 + $0x10] sm:$0xff]
        %v927 = vld [vmem:[#allocation2 + $0x18] sm:$0xff]
        %v928 = vld [vmem:[#allocation2 + $0x20] sm:$0xf]
        %v930 = vlaneseq
        %v931 = vshrl.u32 %v930, 7
        %v932 = vsub.s32 0, %v931
        %v933 = vrot.slane %v857, %v932
        %v934 = vlaneseq
        %v935 = vshrl.u32 %v934, 7
        %v936 = vsub.s32 1, %v935
        %v937 = vrot.slane %v857, %v936
        %v938 = vlaneseq
        %v939 = vshrl.u32 %v938, 7
        %v940 = vsub.s32 2, %v939
        %v941 = vrot.slane %v857, %v940
        %v942 = vlaneseq
        %v943 = vshrl.u32 %v942, 7
        %v944 = vsub.s32 3, %v943
        %v945 = vrot.slane %v857, %v944
        %v946 = vlaneseq
        %v947 = vshrl.u32 %v946, 7
        %v948 = vsub.s32 4, %v947
        %v949 = vrot.slane %v857, %v948
        %v950 = vlaneseq
        %v951 = vshrl.u32 %v950, 7
        %v952 = vsub.s32 5, %v951
        %v953 = vrot.slane %v857, %v952
        %v954 = vlaneseq
        %v955 = vshrl.u32 %v954, 7
        %v956 = vsub.s32 6, %v955
        %v957 = vrot.slane %v857, %v956
        %v958 = vlaneseq
        %v959 = vshrl.u32 %v958, 7
        %v960 = vsub.s32 7, %v959
        %v961 = vrot.slane %v857, %v960
        %v962 = vcombine.low %v933, %v937
        %v963 = vcombine.low %v941, %v945
        %v964 = vcombine.low %v949, %v953
        %v965 = vcombine.low %v957, %v961
        %966 = vrot.lane.b32.xlu0 %v962, 1
        %v967 = vpop.permute.xlu0 %966
        %968 = vrot.lane.b32.xlu0 %v963, 1
        %v969 = vpop.permute.xlu0 %968
        %970 = vrot.lane.b32.xlu0 %v964, 1
        %v971 = vpop.permute.xlu0 %970
        %972 = vrot.lane.b32.xlu0 %v965, 1
        %v973 = vpop.permute.xlu0 %972
        %v974 = vrot.slane %v967, 4
        %v975 = vrot.slane %v969, 4
        %v976 = vrot.slane %v971, 4
        %v977 = vrot.slane %v973, 4
        %vm978 = vcmask 7168
        %v979 = vsel %vm978, %v974, %v967
        %v980 = vsel %vm765, %v974, %v975
        %v981 = vsel %vm978, %v980, %v969
        %v982 = vsel %vm765, %v975, %v976
        %v983 = vsel %vm978, %v982, %v971
        %v984 = vsel %vm765, %v976, %v977
        %v985 = vsel %vm978, %v984, %v973
        %v991 = vmul.f32 %v924, %v979
        %v992 = vmul.f32 %v925, %v981
        %v993 = vmul.f32 %v926, %v983
        %v994 = vmul.f32 %v927, %v985
        %v995 = vmul.f32 %v928, %v977
        %v1001 = vcombine.high %v991, %v991
        %v1002 = vcombine.high %v992, %v992
        %v1003 = vcombine.high %v993, %v993
        %v1004 = vcombine.high %v994, %v994
        %1005 = vrot.lane.b32.xlu0 %v991, 127
        %v1006 = vpop.permute.xlu0 %1005
        %1007 = vrot.lane.b32.xlu0 %v1001, 127
        %v1008 = vpop.permute.xlu0 %1007
        %1009 = vrot.lane.b32.xlu0 %v992, 127
        %v1010 = vpop.permute.xlu0 %1009
        %1011 = vrot.lane.b32.xlu0 %v1002, 127
        %v1012 = vpop.permute.xlu0 %1011
        %1013 = vrot.lane.b32.xlu0 %v993, 127
        %v1014 = vpop.permute.xlu0 %1013
        %1015 = vrot.lane.b32.xlu0 %v1003, 127
        %v1016 = vpop.permute.xlu0 %1015
        %1017 = vrot.lane.b32.xlu0 %v994, 127
        %v1018 = vpop.permute.xlu0 %1017
        %1019 = vrot.lane.b32.xlu0 %v1004, 127
        %v1020 = vpop.permute.xlu0 %1019
        %1021 = vrot.lane.b32.xlu0 %v995, 127
        %v1022 = vpop.permute.xlu0 %1021
        %vm1023 = vcmask 1039360
        %v1024 = vsel %vm1023, %v1006, %v1008
        %v1025 = vsel %vm1023, %v1008, %v1010
        %v1026 = vsel %vm1023, %v1010, %v1012
        %v1027 = vsel %vm1023, %v1012, %v1014
        %v1028 = vsel %vm1023, %v1014, %v1016
        %v1029 = vsel %vm1023, %v1016, %v1018
        %v1030 = vsel %vm1023, %v1018, %v1020
        %v1031 = vsel %vm1023, %v1020, %v1022
        %1040 = vst [vmem:[#allocation3 + $0x40] sm:$0xf] %v1024
        %1041 = vst [vmem:[#allocation3 + $0x48] sm:$0xf] %v1025
        %1042 = vst [vmem:[#allocation3 + $0x50] sm:$0xf] %v1026
        %1043 = vst [vmem:[#allocation3 + $0x58] sm:$0xf] %v1027
        %1044 = vst [vmem:[#allocation3 + $0x60] sm:$0xf] %v1028
        %1045 = vst [vmem:[#allocation3 + $0x68] sm:$0xf] %v1029
        %1046 = vst [vmem:[#allocation3 + $0x70] sm:$0xf] %v1030
        %1047 = vst [vmem:[#allocation3 + $0x78] sm:$0xf] %v1031
        %v1048 = vld [vmem:[#allocation2] sm:$0xff]
        %v1049 = vld [vmem:[#allocation2 + $0x8] sm:$0xff]
        %v1050 = vld [vmem:[#allocation2 + $0x10] sm:$0xff]
        %v1051 = vld [vmem:[#allocation2 + $0x18] sm:$0xff]
        %v1052 = vld [vmem:[#allocation2 + $0x20] sm:$0xf]
        %v1053 = vmul.f32 %v857, %v848
        %v1055 = vlaneseq
        %v1056 = vshrl.u32 %v1055, 7
        %v1057 = vsub.s32 0, %v1056
        %v1058 = vrot.slane %v1053, %v1057
        %v1059 = vlaneseq
        %v1060 = vshrl.u32 %v1059, 7
        %v1061 = vsub.s32 1, %v1060
        %v1062 = vrot.slane %v1053, %v1061
        %v1063 = vlaneseq
        %v1064 = vshrl.u32 %v1063, 7
        %v1065 = vsub.s32 2, %v1064
        %v1066 = vrot.slane %v1053, %v1065
        %v1067 = vlaneseq
        %v1068 = vshrl.u32 %v1067, 7
        %v1069 = vsub.s32 3, %v1068
        %v1070 = vrot.slane %v1053, %v1069
        %v1071 = vlaneseq
        %v1072 = vshrl.u32 %v1071, 7
        %v1073 = vsub.s32 4, %v1072
        %v1074 = vrot.slane %v1053, %v1073
        %v1075 = vlaneseq
        %v1076 = vshrl.u32 %v1075, 7
        %v1077 = vsub.s32 5, %v1076
        %v1078 = vrot.slane %v1053, %v1077
        %v1079 = vlaneseq
        %v1080 = vshrl.u32 %v1079, 7
        %v1081 = vsub.s32 6, %v1080
        %v1082 = vrot.slane %v1053, %v1081
        %v1083 = vlaneseq
        %v1084 = vshrl.u32 %v1083, 7
        %v1085 = vsub.s32 7, %v1084
        %v1086 = vrot.slane %v1053, %v1085
        %v1087 = vcombine.low %v1058, %v1062
        %v1088 = vcombine.low %v1066, %v1070
        %v1089 = vcombine.low %v1074, %v1078
        %v1090 = vcombine.low %v1082, %v1086
        %1091 = vrot.lane.b32.xlu0 %v1087, 2
        %v1092 = vpop.permute.xlu0 %1091
        %1093 = vrot.lane.b32.xlu0 %v1088, 2
        %v1094 = vpop.permute.xlu0 %1093
        %1095 = vrot.lane.b32.xlu0 %v1089, 2
        %v1096 = vpop.permute.xlu0 %1095
        %1097 = vrot.lane.b32.xlu0 %v1090, 2
        %v1098 = vpop.permute.xlu0 %1097
        %v1099 = vrot.slane %v1092, 4
        %v1100 = vrot.slane %v1094, 4
        %v1101 = vrot.slane %v1096, 4
        %v1102 = vrot.slane %v1098, 4
        %vm1103 = vcmask 15360
        %v1104 = vsel %vm1103, %v1099, %v1092
        %v1105 = vsel %vm765, %v1099, %v1100
        %v1106 = vsel %vm1103, %v1105, %v1094
        %v1107 = vsel %vm765, %v1100, %v1101
        %v1108 = vsel %vm1103, %v1107, %v1096
        %v1109 = vsel %vm765, %v1101, %v1102
        %v1110 = vsel %vm1103, %v1109, %v1098
        %v1116 = vmul.f32 %v1048, %v1104
        %v1117 = vmul.f32 %v1049, %v1106
        %v1118 = vmul.f32 %v1050, %v1108
        %v1119 = vmul.f32 %v1051, %v1110
        %v1120 = vmul.f32 %v1052, %v1102
        %v1126 = vcombine.high %v1116, %v1116
        %v1127 = vcombine.high %v1117, %v1117
        %v1128 = vcombine.high %v1118, %v1118
        %v1129 = vcombine.high %v1119, %v1119
        %1130 = vrot.lane.b32.xlu0 %v1116, 126
        %v1131 = vpop.permute.xlu0 %1130
        %1132 = vrot.lane.b32.xlu0 %v1126, 126
        %v1133 = vpop.permute.xlu0 %1132
        %1134 = vrot.lane.b32.xlu0 %v1117, 126
        %v1135 = vpop.permute.xlu0 %1134
        %1136 = vrot.lane.b32.xlu0 %v1127, 126
        %v1137 = vpop.permute.xlu0 %1136
        %1138 = vrot.lane.b32.xlu0 %v1118, 126
        %v1139 = vpop.permute.xlu0 %1138
        %1140 = vrot.lane.b32.xlu0 %v1128, 126
        %v1141 = vpop.permute.xlu0 %1140
        %1142 = vrot.lane.b32.xlu0 %v1119, 126
        %v1143 = vpop.permute.xlu0 %1142
        %1144 = vrot.lane.b32.xlu0 %v1129, 126
        %v1145 = vpop.permute.xlu0 %1144
        %1146 = vrot.lane.b32.xlu0 %v1120, 126
        %v1147 = vpop.permute.xlu0 %1146
        %vm1148 = vcmask 1031168
        %v1149 = vsel %vm1148, %v1131, %v1133
        %v1150 = vsel %vm1148, %v1133, %v1135
        %v1151 = vsel %vm1148, %v1135, %v1137
        %v1152 = vsel %vm1148, %v1137, %v1139
        %v1153 = vsel %vm1148, %v1139, %v1141
        %v1154 = vsel %vm1148, %v1141, %v1143
        %v1155 = vsel %vm1148, %v1143, %v1145
        %v1156 = vsel %vm1148, %v1145, %v1147
        %1165 = vst [vmem:[#allocation3 + $0x80] sm:$0xf] %v1149
        %1166 = vst [vmem:[#allocation3 + $0x88] sm:$0xf] %v1150
        %1167 = vst [vmem:[#allocation3 + $0x90] sm:$0xf] %v1151
        %1168 = vst [vmem:[#allocation3 + $0x98] sm:$0xf] %v1152
        %1169 = vst [vmem:[#allocation3 + $0xa0] sm:$0xf] %v1153
        %1170 = vst [vmem:[#allocation3 + $0xa8] sm:$0xf] %v1154
        %1171 = vst [vmem:[#allocation3 + $0xb0] sm:$0xf] %v1155
        %1172 = vst [vmem:[#allocation3 + $0xb8] sm:$0xf] %v1156
        %v1173 = vld [vmem:[#allocation2] sm:$0xff]
        %v1174 = vld [vmem:[#allocation2 + $0x8] sm:$0xff]
        %v1175 = vld [vmem:[#allocation2 + $0x10] sm:$0xff]
        %v1176 = vld [vmem:[#allocation2 + $0x18] sm:$0xff]
        %v1177 = vld [vmem:[#allocation2 + $0x20] sm:$0xf]
        %v1178 = vmul.f32 %v836, %v852
        %v1180 = vlaneseq
        %v1181 = vshrl.u32 %v1180, 7
        %v1182 = vsub.s32 0, %v1181
        %v1183 = vrot.slane %v1178, %v1182
        %v1184 = vlaneseq
        %v1185 = vshrl.u32 %v1184, 7
        %v1186 = vsub.s32 1, %v1185
        %v1187 = vrot.slane %v1178, %v1186
        %v1188 = vlaneseq
        %v1189 = vshrl.u32 %v1188, 7
        %v1190 = vsub.s32 2, %v1189
        %v1191 = vrot.slane %v1178, %v1190
        %v1192 = vlaneseq
        %v1193 = vshrl.u32 %v1192, 7
        %v1194 = vsub.s32 3, %v1193
        %v1195 = vrot.slane %v1178, %v1194
        %v1196 = vlaneseq
        %v1197 = vshrl.u32 %v1196, 7
        %v1198 = vsub.s32 4, %v1197
        %v1199 = vrot.slane %v1178, %v1198
        %v1200 = vlaneseq
        %v1201 = vshrl.u32 %v1200, 7
        %v1202 = vsub.s32 5, %v1201
        %v1203 = vrot.slane %v1178, %v1202
        %v1204 = vlaneseq
        %v1205 = vshrl.u32 %v1204, 7
        %v1206 = vsub.s32 6, %v1205
        %v1207 = vrot.slane %v1178, %v1206
        %v1208 = vlaneseq
        %v1209 = vshrl.u32 %v1208, 7
        %v1210 = vsub.s32 7, %v1209
        %v1211 = vrot.slane %v1178, %v1210
        %v1212 = vcombine.low %v1183, %v1187
        %v1213 = vcombine.low %v1191, %v1195
        %v1214 = vcombine.low %v1199, %v1203
        %v1215 = vcombine.low %v1207, %v1211
        %1216 = vrot.lane.b32.xlu0 %v1212, 16
        %v1217 = vpop.permute.xlu0 %1216
        %1218 = vrot.lane.b32.xlu0 %v1213, 16
        %v1219 = vpop.permute.xlu0 %1218
        %1220 = vrot.lane.b32.xlu0 %v1214, 16
        %v1221 = vpop.permute.xlu0 %1220
        %1222 = vrot.lane.b32.xlu0 %v1215, 16
        %v1223 = vpop.permute.xlu0 %1222
        %v1224 = vrot.slane %v1217, 4
        %v1225 = vrot.slane %v1219, 4
        %v1226 = vrot.slane %v1221, 4
        %v1227 = vrot.slane %v1223, 4
        %vm1228 = vcmask 130048
        %v1229 = vsel %vm1228, %v1224, %v1217
        %v1230 = vsel %vm765, %v1224, %v1225
        %v1231 = vsel %vm1228, %v1230, %v1219
        %v1232 = vsel %vm765, %v1225, %v1226
        %v1233 = vsel %vm1228, %v1232, %v1221
        %v1234 = vsel %vm765, %v1226, %v1227
        %v1235 = vsel %vm1228, %v1234, %v1223
        %v1241 = vmul.f32 %v1173, %v1229
        %v1242 = vmul.f32 %v1174, %v1231
        %v1243 = vmul.f32 %v1175, %v1233
        %v1244 = vmul.f32 %v1176, %v1235
        %v1245 = vmul.f32 %v1177, %v1227
        %v1251 = vcombine.high %v1241, %v1241
        %v1252 = vcombine.high %v1242, %v1242
        %v1253 = vcombine.high %v1243, %v1243
        %v1254 = vcombine.high %v1244, %v1244
        %1255 = vrot.lane.b32.xlu0 %v1241, 112
        %v1256 = vpop.permute.xlu0 %1255
        %1257 = vrot.lane.b32.xlu0 %v1251, 112
        %v1258 = vpop.permute.xlu0 %1257
        %1259 = vrot.lane.b32.xlu0 %v1242, 112
        %v1260 = vpop.permute.xlu0 %1259
        %1261 = vrot.lane.b32.xlu0 %v1252, 112
        %v1262 = vpop.permute.xlu0 %1261
        %1263 = vrot.lane.b32.xlu0 %v1243, 112
        %v1264 = vpop.permute.xlu0 %1263
        %1265 = vrot.lane.b32.xlu0 %v1253, 112
        %v1266 = vpop.permute.xlu0 %1265
        %1267 = vrot.lane.b32.xlu0 %v1244, 112
        %v1268 = vpop.permute.xlu0 %1267
        %1269 = vrot.lane.b32.xlu0 %v1254, 112
        %v1270 = vpop.permute.xlu0 %1269
        %1271 = vrot.lane.b32.xlu0 %v1245, 112
        %v1272 = vpop.permute.xlu0 %1271
        %vm1273 = vcmask 916480
        %v1274 = vsel %vm1273, %v1256, %v1258
        %v1275 = vsel %vm1273, %v1258, %v1260
        %v1276 = vsel %vm1273, %v1260, %v1262
        %v1277 = vsel %vm1273, %v1262, %v1264
        %v1278 = vsel %vm1273, %v1264, %v1266
        %v1279 = vsel %vm1273, %v1266, %v1268
        %v1280 = vsel %vm1273, %v1268, %v1270
        %v1281 = vsel %vm1273, %v1270, %v1272
        %1290 = vst [vmem:[#allocation3 + $0xc0] sm:$0xf] %v1274
        %1291 = vst [vmem:[#allocation3 + $0xc8] sm:$0xf] %v1275
        %1292 = vst [vmem:[#allocation3 + $0xd0] sm:$0xf] %v1276
        %1293 = vst [vmem:[#allocation3 + $0xd8] sm:$0xf] %v1277
        %1294 = vst [vmem:[#allocation3 + $0xe0] sm:$0xf] %v1278
        %1295 = vst [vmem:[#allocation3 + $0xe8] sm:$0xf] %v1279
        %1296 = vst [vmem:[#allocation3 + $0xf0] sm:$0xf] %v1280
        %1297 = vst [vmem:[#allocation3 + $0xf8] sm:$0xf] %v1281
        %v1298 = vld [vmem:[#allocation2] sm:$0xff]
        %v1299 = vld [vmem:[#allocation2 + $0x8] sm:$0xff]
        %v1300 = vld [vmem:[#allocation2 + $0x10] sm:$0xff]
        %v1301 = vld [vmem:[#allocation2 + $0x18] sm:$0xff]
        %v1302 = vld [vmem:[#allocation2 + $0x20] sm:$0xf]
        %v1304 = vlaneseq
        %v1305 = vshrl.u32 %v1304, 7
        %v1306 = vsub.s32 0, %v1305
        %v1307 = vrot.slane %v836, %v1306
        %v1308 = vlaneseq
        %v1309 = vshrl.u32 %v1308, 7
        %v1310 = vsub.s32 1, %v1309
        %v1311 = vrot.slane %v836, %v1310
        %v1312 = vlaneseq
        %v1313 = vshrl.u32 %v1312, 7
        %v1314 = vsub.s32 2, %v1313
        %v1315 = vrot.slane %v836, %v1314
        %v1316 = vlaneseq
        %v1317 = vshrl.u32 %v1316, 7
        %v1318 = vsub.s32 3, %v1317
        %v1319 = vrot.slane %v836, %v1318
        %v1320 = vlaneseq
        %v1321 = vshrl.u32 %v1320, 7
        %v1322 = vsub.s32 4, %v1321
        %v1323 = vrot.slane %v836, %v1322
        %v1324 = vlaneseq
        %v1325 = vshrl.u32 %v1324, 7
        %v1326 = vsub.s32 5, %v1325
        %v1327 = vrot.slane %v836, %v1326
        %v1328 = vlaneseq
        %v1329 = vshrl.u32 %v1328, 7
        %v1330 = vsub.s32 6, %v1329
        %v1331 = vrot.slane %v836, %v1330
        %v1332 = vlaneseq
        %v1333 = vshrl.u32 %v1332, 7
        %v1334 = vsub.s32 7, %v1333
        %v1335 = vrot.slane %v836, %v1334
        %v1336 = vcombine.low %v1307, %v1311
        %v1337 = vcombine.low %v1315, %v1319
        %v1338 = vcombine.low %v1323, %v1327
        %v1339 = vcombine.low %v1331, %v1335
        %1340 = vrot.lane.b32.xlu0 %v1336, 17
        %v1341 = vpop.permute.xlu0 %1340
        %1342 = vrot.lane.b32.xlu0 %v1337, 17
        %v1343 = vpop.permute.xlu0 %1342
        %1344 = vrot.lane.b32.xlu0 %v1338, 17
        %v1345 = vpop.permute.xlu0 %1344
        %1346 = vrot.lane.b32.xlu0 %v1339, 17
        %v1347 = vpop.permute.xlu0 %1346
        %v1348 = vrot.slane %v1341, 4
        %v1349 = vrot.slane %v1343, 4
        %v1350 = vrot.slane %v1345, 4
        %v1351 = vrot.slane %v1347, 4
        %v1352 = vsel %vm767, %v1348, %v1341
        %v1353 = vsel %vm765, %v1348, %v1349
        %v1354 = vsel %vm767, %v1353, %v1343
        %v1355 = vsel %vm765, %v1349, %v1350
        %v1356 = vsel %vm767, %v1355, %v1345
        %v1357 = vsel %vm765, %v1350, %v1351
        %v1358 = vsel %vm767, %v1357, %v1347
        %v1364 = vmul.f32 %v1298, %v1352
        %v1365 = vmul.f32 %v1299, %v1354
        %v1366 = vmul.f32 %v1300, %v1356
        %v1367 = vmul.f32 %v1301, %v1358
        %v1368 = vmul.f32 %v1302, %v1351
        %v1374 = vcombine.high %v1364, %v1364
        %v1375 = vcombine.high %v1365, %v1365
        %v1376 = vcombine.high %v1366, %v1366
        %v1377 = vcombine.high %v1367, %v1367
        %1378 = vrot.lane.b32.xlu0 %v1364, 111
        %v1379 = vpop.permute.xlu0 %1378
        %1380 = vrot.lane.b32.xlu0 %v1374, 111
        %v1381 = vpop.permute.xlu0 %1380
        %1382 = vrot.lane.b32.xlu0 %v1365, 111
        %v1383 = vpop.permute.xlu0 %1382
        %1384 = vrot.lane.b32.xlu0 %v1375, 111
        %v1385 = vpop.permute.xlu0 %1384
        %1386 = vrot.lane.b32.xlu0 %v1366, 111
        %v1387 = vpop.permute.xlu0 %1386
        %1388 = vrot.lane.b32.xlu0 %v1376, 111
        %v1389 = vpop.permute.xlu0 %1388
        %1390 = vrot.lane.b32.xlu0 %v1367, 111
        %v1391 = vpop.permute.xlu0 %1390
        %1392 = vrot.lane.b32.xlu0 %v1377, 111
        %v1393 = vpop.permute.xlu0 %1392
        %1394 = vrot.lane.b32.xlu0 %v1368, 111
        %v1395 = vpop.permute.xlu0 %1394
        %vm1396 = vcmask 908288
        %v1397 = vsel %vm1396, %v1379, %v1381
        %v1398 = vsel %vm1396, %v1381, %v1383
        %v1399 = vsel %vm1396, %v1383, %v1385
        %v1400 = vsel %vm1396, %v1385, %v1387
        %v1401 = vsel %vm1396, %v1387, %v1389
        %v1402 = vsel %vm1396, %v1389, %v1391
        %v1403 = vsel %vm1396, %v1391, %v1393
        %v1404 = vsel %vm1396, %v1393, %v1395
        %1413 = vst [vmem:[#allocation3 + $0x100] sm:$0xf] %v1397
        %1414 = vst [vmem:[#allocation3 + $0x108] sm:$0xf] %v1398
        %1415 = vst [vmem:[#allocation3 + $0x110] sm:$0xf] %v1399
        %1416 = vst [vmem:[#allocation3 + $0x118] sm:$0xf] %v1400
        %1417 = vst [vmem:[#allocation3 + $0x120] sm:$0xf] %v1401
        %1418 = vst [vmem:[#allocation3 + $0x128] sm:$0xf] %v1402
        %1419 = vst [vmem:[#allocation3 + $0x130] sm:$0xf] %v1403
        %1420 = vst [vmem:[#allocation3 + $0x138] sm:$0xf] %v1404
        %v1421 = vld [vmem:[#allocation2] sm:$0xff]
        %v1422 = vld [vmem:[#allocation2 + $0x8] sm:$0xff]
        %v1423 = vld [vmem:[#allocation2 + $0x10] sm:$0xff]
        %v1424 = vld [vmem:[#allocation2 + $0x18] sm:$0xff]
        %v1425 = vld [vmem:[#allocation2 + $0x20] sm:$0xf]
        %v1426 = vmul.f32 %v836, %v848
        %v1428 = vlaneseq
        %v1429 = vshrl.u32 %v1428, 7
        %v1430 = vsub.s32 0, %v1429
        %v1431 = vrot.slane %v1426, %v1430
        %v1432 = vlaneseq
        %v1433 = vshrl.u32 %v1432, 7
        %v1434 = vsub.s32 1, %v1433
        %v1435 = vrot.slane %v1426, %v1434
        %v1436 = vlaneseq
        %v1437 = vshrl.u32 %v1436, 7
        %v1438 = vsub.s32 2, %v1437
        %v1439 = vrot.slane %v1426, %v1438
        %v1440 = vlaneseq
        %v1441 = vshrl.u32 %v1440, 7
        %v1442 = vsub.s32 3, %v1441
        %v1443 = vrot.slane %v1426, %v1442
        %v1444 = vlaneseq
        %v1445 = vshrl.u32 %v1444, 7
        %v1446 = vsub.s32 4, %v1445
        %v1447 = vrot.slane %v1426, %v1446
        %v1448 = vlaneseq
        %v1449 = vshrl.u32 %v1448, 7
        %v1450 = vsub.s32 5, %v1449
        %v1451 = vrot.slane %v1426, %v1450
        %v1452 = vlaneseq
        %v1453 = vshrl.u32 %v1452, 7
        %v1454 = vsub.s32 6, %v1453
        %v1455 = vrot.slane %v1426, %v1454
        %v1456 = vlaneseq
        %v1457 = vshrl.u32 %v1456, 7
        %v1458 = vsub.s32 7, %v1457
        %v1459 = vrot.slane %v1426, %v1458
        %v1460 = vcombine.low %v1431, %v1435
        %v1461 = vcombine.low %v1439, %v1443
        %v1462 = vcombine.low %v1447, %v1451
        %v1463 = vcombine.low %v1455, %v1459
        %1464 = vrot.lane.b32.xlu0 %v1460, 18
        %v1465 = vpop.permute.xlu0 %1464
        %1466 = vrot.lane.b32.xlu0 %v1461, 18
        %v1467 = vpop.permute.xlu0 %1466
        %1468 = vrot.lane.b32.xlu0 %v1462, 18
        %v1469 = vpop.permute.xlu0 %1468
        %1470 = vrot.lane.b32.xlu0 %v1463, 18
        %v1471 = vpop.permute.xlu0 %1470
        %v1472 = vrot.slane %v1465, 4
        %v1473 = vrot.slane %v1467, 4
        %v1474 = vrot.slane %v1469, 4
        %v1475 = vrot.slane %v1471, 4
        %vm1476 = vcmask 146432
        %v1477 = vsel %vm1476, %v1472, %v1465
        %v1478 = vsel %vm765, %v1472, %v1473
        %v1479 = vsel %vm1476, %v1478, %v1467
        %v1480 = vsel %vm765, %v1473, %v1474
        %v1481 = vsel %vm1476, %v1480, %v1469
        %v1482 = vsel %vm765, %v1474, %v1475
        %v1483 = vsel %vm1476, %v1482, %v1471
        %v1489 = vmul.f32 %v1421, %v1477
        %v1490 = vmul.f32 %v1422, %v1479
        %v1491 = vmul.f32 %v1423, %v1481
        %v1492 = vmul.f32 %v1424, %v1483
        %v1493 = vmul.f32 %v1425, %v1475
        %v1499 = vcombine.high %v1489, %v1489
        %v1500 = vcombine.high %v1490, %v1490
        %v1501 = vcombine.high %v1491, %v1491
        %v1502 = vcombine.high %v1492, %v1492
        %1503 = vrot.lane.b32.xlu0 %v1489, 110
        %v1504 = vpop.permute.xlu0 %1503
        %1505 = vrot.lane.b32.xlu0 %v1499, 110
        %v1506 = vpop.permute.xlu0 %1505
        %1507 = vrot.lane.b32.xlu0 %v1490, 110
        %v1508 = vpop.permute.xlu0 %1507
        %1509 = vrot.lane.b32.xlu0 %v1500, 110
        %v1510 = vpop.permute.xlu0 %1509
        %1511 = vrot.lane.b32.xlu0 %v1491, 110
        %v1512 = vpop.permute.xlu0 %1511
        %1513 = vrot.lane.b32.xlu0 %v1501, 110
        %v1514 = vpop.permute.xlu0 %1513
        %1515 = vrot.lane.b32.xlu0 %v1492, 110
        %v1516 = vpop.permute.xlu0 %1515
        %1517 = vrot.lane.b32.xlu0 %v1502, 110
        %v1518 = vpop.permute.xlu0 %1517
        %1519 = vrot.lane.b32.xlu0 %v1493, 110
        %v1520 = vpop.permute.xlu0 %1519
        %vm1521 = vcmask 900096
        %v1522 = vsel %vm1521, %v1504, %v1506
        %v1523 = vsel %vm1521, %v1506, %v1508
        %v1524 = vsel %vm1521, %v1508, %v1510
        %v1525 = vsel %vm1521, %v1510, %v1512
        %v1526 = vsel %vm1521, %v1512, %v1514
        %v1527 = vsel %vm1521, %v1514, %v1516
        %v1528 = vsel %vm1521, %v1516, %v1518
        %v1529 = vsel %vm1521, %v1518, %v1520
        %1538 = vst [vmem:[#allocation3 + $0x140] sm:$0xf] %v1522
        %1539 = vst [vmem:[#allocation3 + $0x148] sm:$0xf] %v1523
        %1540 = vst [vmem:[#allocation3 + $0x150] sm:$0xf] %v1524
        %1541 = vst [vmem:[#allocation3 + $0x158] sm:$0xf] %v1525
        %1542 = vst [vmem:[#allocation3 + $0x160] sm:$0xf] %v1526
        %1543 = vst [vmem:[#allocation3 + $0x168] sm:$0xf] %v1527
        %1544 = vst [vmem:[#allocation3 + $0x170] sm:$0xf] %v1528
        %1545 = vst [vmem:[#allocation3 + $0x178] sm:$0xf] %v1529
        %v1546 = vld [vmem:[#allocation2] sm:$0xff]
        %v1547 = vld [vmem:[#allocation2 + $0x8] sm:$0xff]
        %v1548 = vld [vmem:[#allocation2 + $0x10] sm:$0xff]
        %v1549 = vld [vmem:[#allocation2 + $0x18] sm:$0xff]
        %v1550 = vld [vmem:[#allocation2 + $0x20] sm:$0xf]
        %v1551 = vmul.f32 %v836, %v840
        %v1552 = vmul.f32 %v1551, %v852
        %v1554 = vlaneseq
        %v1555 = vshrl.u32 %v1554, 7
        %v1556 = vsub.s32 0, %v1555
        %v1557 = vrot.slane %v1552, %v1556
        %v1558 = vlaneseq
        %v1559 = vshrl.u32 %v1558, 7
        %v1560 = vsub.s32 1, %v1559
        %v1561 = vrot.slane %v1552, %v1560
        %v1562 = vlaneseq
        %v1563 = vshrl.u32 %v1562, 7
        %v1564 = vsub.s32 2, %v1563
        %v1565 = vrot.slane %v1552, %v1564
        %v1566 = vlaneseq
        %v1567 = vshrl.u32 %v1566, 7
        %v1568 = vsub.s32 3, %v1567
        %v1569 = vrot.slane %v1552, %v1568
        %v1570 = vlaneseq
        %v1571 = vshrl.u32 %v1570, 7
        %v1572 = vsub.s32 4, %v1571
        %v1573 = vrot.slane %v1552, %v1572
        %v1574 = vlaneseq
        %v1575 = vshrl.u32 %v1574, 7
        %v1576 = vsub.s32 5, %v1575
        %v1577 = vrot.slane %v1552, %v1576
        %v1578 = vlaneseq
        %v1579 = vshrl.u32 %v1578, 7
        %v1580 = vsub.s32 6, %v1579
        %v1581 = vrot.slane %v1552, %v1580
        %v1582 = vlaneseq
        %v1583 = vshrl.u32 %v1582, 7
        %v1584 = vsub.s32 7, %v1583
        %v1585 = vrot.slane %v1552, %v1584
        %v1586 = vcombine.low %v1557, %v1561
        %v1587 = vcombine.low %v1565, %v1569
        %v1588 = vcombine.low %v1573, %v1577
        %v1589 = vcombine.low %v1581, %v1585
        %1590 = vrot.lane.b32.xlu0 %v1586, 32
        %v1591 = vpop.permute.xlu0 %1590
        %1592 = vrot.lane.b32.xlu0 %v1587, 32
        %v1593 = vpop.permute.xlu0 %1592
        %1594 = vrot.lane.b32.xlu0 %v1588, 32
        %v1595 = vpop.permute.xlu0 %1594
        %1596 = vrot.lane.b32.xlu0 %v1589, 32
        %v1597 = vpop.permute.xlu0 %1596
        %v1598 = vrot.slane %v1591, 4
        %v1599 = vrot.slane %v1593, 4
        %v1600 = vrot.slane %v1595, 4
        %v1601 = vrot.slane %v1597, 4
        %vm1602 = vcmask 261120
        %v1603 = vsel %vm1602, %v1598, %v1591
        %v1604 = vsel %vm765, %v1598, %v1599
        %v1605 = vsel %vm1602, %v1604, %v1593
        %v1606 = vsel %vm765, %v1599, %v1600
        %v1607 = vsel %vm1602, %v1606, %v1595
        %v1608 = vsel %vm765, %v1600, %v1601
        %v1609 = vsel %vm1602, %v1608, %v1597
        %v1615 = vmul.f32 %v1546, %v1603
        %v1616 = vmul.f32 %v1547, %v1605
        %v1617 = vmul.f32 %v1548, %v1607
        %v1618 = vmul.f32 %v1549, %v1609
        %v1619 = vmul.f32 %v1550, %v1601
        %v1625 = vcombine.high %v1615, %v1615
        %v1626 = vcombine.high %v1616, %v1616
        %v1627 = vcombine.high %v1617, %v1617
        %v1628 = vcombine.high %v1618, %v1618
        %1629 = vrot.lane.b32.xlu0 %v1615, 96
        %v1630 = vpop.permute.xlu0 %1629
        %1631 = vrot.lane.b32.xlu0 %v1625, 96
        %v1632 = vpop.permute.xlu0 %1631
        %1633 = vrot.lane.b32.xlu0 %v1616, 96
        %v1634 = vpop.permute.xlu0 %1633
        %1635 = vrot.lane.b32.xlu0 %v1626, 96
        %v1636 = vpop.permute.xlu0 %1635
        %1637 = vrot.lane.b32.xlu0 %v1617, 96
        %v1638 = vpop.permute.xlu0 %1637
        %1639 = vrot.lane.b32.xlu0 %v1627, 96
        %v1640 = vpop.permute.xlu0 %1639
        %1641 = vrot.lane.b32.xlu0 %v1618, 96
        %v1642 = vpop.permute.xlu0 %1641
        %1643 = vrot.lane.b32.xlu0 %v1628, 96
        %v1644 = vpop.permute.xlu0 %1643
        %1645 = vrot.lane.b32.xlu0 %v1619, 96
        %v1646 = vpop.permute.xlu0 %1645
        %vm1647 = vcmask 785408
        %v1648 = vsel %vm1647, %v1630, %v1632
        %v1649 = vsel %vm1647, %v1632, %v1634
        %v1650 = vsel %vm1647, %v1634, %v1636
        %v1651 = vsel %vm1647, %v1636, %v1638
        %v1652 = vsel %vm1647, %v1638, %v1640
        %v1653 = vsel %vm1647, %v1640, %v1642
        %v1654 = vsel %vm1647, %v1642, %v1644
        %v1655 = vsel %vm1647, %v1644, %v1646
        %1664 = vst [vmem:[#allocation3 + $0x180] sm:$0xf] %v1648
        %1665 = vst [vmem:[#allocation3 + $0x188] sm:$0xf] %v1649
        %1666 = vst [vmem:[#allocation3 + $0x190] sm:$0xf] %v1650
        %1667 = vst [vmem:[#allocation3 + $0x198] sm:$0xf] %v1651
        %1668 = vst [vmem:[#allocation3 + $0x1a0] sm:$0xf] %v1652
        %1669 = vst [vmem:[#allocation3 + $0x1a8] sm:$0xf] %v1653
        %1670 = vst [vmem:[#allocation3 + $0x1b0] sm:$0xf] %v1654
        %1671 = vst [vmem:[#allocation3 + $0x1b8] sm:$0xf] %v1655
        %v1672 = vld [vmem:[#allocation2] sm:$0xff]
        %v1673 = vld [vmem:[#allocation2 + $0x8] sm:$0xff]
        %v1674 = vld [vmem:[#allocation2 + $0x10] sm:$0xff]
        %v1675 = vld [vmem:[#allocation2 + $0x18] sm:$0xff]
        %v1676 = vld [vmem:[#allocation2 + $0x20] sm:$0xf]
        %v1678 = vlaneseq
        %v1679 = vshrl.u32 %v1678, 7
        %v1680 = vsub.s32 0, %v1679
        %v1681 = vrot.slane %v1551, %v1680
        %v1682 = vlaneseq
        %v1683 = vshrl.u32 %v1682, 7
        %v1684 = vsub.s32 1, %v1683
        %v1685 = vrot.slane %v1551, %v1684
        %v1686 = vlaneseq
        %v1687 = vshrl.u32 %v1686, 7
        %v1688 = vsub.s32 2, %v1687
        %v1689 = vrot.slane %v1551, %v1688
        %v1690 = vlaneseq
        %v1691 = vshrl.u32 %v1690, 7
        %v1692 = vsub.s32 3, %v1691
        %v1693 = vrot.slane %v1551, %v1692
        %v1694 = vlaneseq
        %v1695 = vshrl.u32 %v1694, 7
        %v1696 = vsub.s32 4, %v1695
        %v1697 = vrot.slane %v1551, %v1696
        %v1698 = vlaneseq
        %v1699 = vshrl.u32 %v1698, 7
        %v1700 = vsub.s32 5, %v1699
        %v1701 = vrot.slane %v1551, %v1700
        %v1702 = vlaneseq
        %v1703 = vshrl.u32 %v1702, 7
        %v1704 = vsub.s32 6, %v1703
        %v1705 = vrot.slane %v1551, %v1704
        %v1706 = vlaneseq
        %v1707 = vshrl.u32 %v1706, 7
        %v1708 = vsub.s32 7, %v1707
        %v1709 = vrot.slane %v1551, %v1708
        %v1710 = vcombine.low %v1681, %v1685
        %v1711 = vcombine.low %v1689, %v1693
        %v1712 = vcombine.low %v1697, %v1701
        %v1713 = vcombine.low %v1705, %v1709
        %1714 = vrot.lane.b32.xlu0 %v1710, 33
        %v1715 = vpop.permute.xlu0 %1714
        %1716 = vrot.lane.b32.xlu0 %v1711, 33
        %v1717 = vpop.permute.xlu0 %1716
        %1718 = vrot.lane.b32.xlu0 %v1712, 33
        %v1719 = vpop.permute.xlu0 %1718
        %1720 = vrot.lane.b32.xlu0 %v1713, 33
        %v1721 = vpop.permute.xlu0 %1720
        %v1722 = vrot.slane %v1715, 4
        %v1723 = vrot.slane %v1717, 4
        %v1724 = vrot.slane %v1719, 4
        %v1725 = vrot.slane %v1721, 4
        %vm1726 = vcmask 269312
        %v1727 = vsel %vm1726, %v1722, %v1715
        %v1728 = vsel %vm765, %v1722, %v1723
        %v1729 = vsel %vm1726, %v1728, %v1717
        %v1730 = vsel %vm765, %v1723, %v1724
        %v1731 = vsel %vm1726, %v1730, %v1719
        %v1732 = vsel %vm765, %v1724, %v1725
        %v1733 = vsel %vm1726, %v1732, %v1721
        %v1739 = vmul.f32 %v1672, %v1727
        %v1740 = vmul.f32 %v1673, %v1729
        %v1741 = vmul.f32 %v1674, %v1731
        %v1742 = vmul.f32 %v1675, %v1733
        %v1743 = vmul.f32 %v1676, %v1725
        %v1749 = vcombine.high %v1739, %v1739
        %v1750 = vcombine.high %v1740, %v1740
        %v1751 = vcombine.high %v1741, %v1741
        %v1752 = vcombine.high %v1742, %v1742
        %1753 = vrot.lane.b32.xlu0 %v1739, 95
        %v1754 = vpop.permute.xlu0 %1753
        %1755 = vrot.lane.b32.xlu0 %v1749, 95
        %v1756 = vpop.permute.xlu0 %1755
        %1757 = vrot.lane.b32.xlu0 %v1740, 95
        %v1758 = vpop.permute.xlu0 %1757
        %1759 = vrot.lane.b32.xlu0 %v1750, 95
        %v1760 = vpop.permute.xlu0 %1759
        %1761 = vrot.lane.b32.xlu0 %v1741, 95
        %v1762 = vpop.permute.xlu0 %1761
        %1763 = vrot.lane.b32.xlu0 %v1751, 95
        %v1764 = vpop.permute.xlu0 %1763
        %1765 = vrot.lane.b32.xlu0 %v1742, 95
        %v1766 = vpop.permute.xlu0 %1765
        %1767 = vrot.lane.b32.xlu0 %v1752, 95
        %v1768 = vpop.permute.xlu0 %1767
        %1769 = vrot.lane.b32.xlu0 %v1743, 95
        %v1770 = vpop.permute.xlu0 %1769
        %vm1771 = vcmask 777216
        %v1772 = vsel %vm1771, %v1754, %v1756
        %v1773 = vsel %vm1771, %v1756, %v1758
        %v1774 = vsel %vm1771, %v1758, %v1760
        %v1775 = vsel %vm1771, %v1760, %v1762
        %v1776 = vsel %vm1771, %v1762, %v1764
        %v1777 = vsel %vm1771, %v1764, %v1766
        %v1778 = vsel %vm1771, %v1766, %v1768
        %v1779 = vsel %vm1771, %v1768, %v1770
        %1788 = vst [vmem:[#allocation3 + $0x1c0] sm:$0xf] %v1772
        %1789 = vst [vmem:[#allocation3 + $0x1c8] sm:$0xf] %v1773
        %1790 = vst [vmem:[#allocation3 + $0x1d0] sm:$0xf] %v1774
        %1791 = vst [vmem:[#allocation3 + $0x1d8] sm:$0xf] %v1775
        %1792 = vst [vmem:[#allocation3 + $0x1e0] sm:$0xf] %v1776
        %1793 = vst [vmem:[#allocation3 + $0x1e8] sm:$0xf] %v1777
        %1794 = vst [vmem:[#allocation3 + $0x1f0] sm:$0xf] %v1778
        %1795 = vst [vmem:[#allocation3 + $0x1f8] sm:$0xf] %v1779
        %v1796 = vld [vmem:[#allocation2] sm:$0xff]
        %v1797 = vld [vmem:[#allocation2 + $0x8] sm:$0xff]
        %v1798 = vld [vmem:[#allocation2 + $0x10] sm:$0xff]
        %v1799 = vld [vmem:[#allocation2 + $0x18] sm:$0xff]
        %v1800 = vld [vmem:[#allocation2 + $0x20] sm:$0xf]
        %v1801 = vmul.f32 %v1551, %v848
        %v1803 = vlaneseq
        %v1804 = vshrl.u32 %v1803, 7
        %v1805 = vsub.s32 0, %v1804
        %v1806 = vrot.slane %v1801, %v1805
        %v1807 = vlaneseq
        %v1808 = vshrl.u32 %v1807, 7
        %v1809 = vsub.s32 1, %v1808
        %v1810 = vrot.slane %v1801, %v1809
        %v1811 = vlaneseq
        %v1812 = vshrl.u32 %v1811, 7
        %v1813 = vsub.s32 2, %v1812
        %v1814 = vrot.slane %v1801, %v1813
        %v1815 = vlaneseq
        %v1816 = vshrl.u32 %v1815, 7
        %v1817 = vsub.s32 3, %v1816
        %v1818 = vrot.slane %v1801, %v1817
        %v1819 = vlaneseq
        %v1820 = vshrl.u32 %v1819, 7
        %v1821 = vsub.s32 4, %v1820
        %v1822 = vrot.slane %v1801, %v1821
        %v1823 = vlaneseq
        %v1824 = vshrl.u32 %v1823, 7
        %v1825 = vsub.s32 5, %v1824
        %v1826 = vrot.slane %v1801, %v1825
        %v1827 = vlaneseq
        %v1828 = vshrl.u32 %v1827, 7
        %v1829 = vsub.s32 6, %v1828
        %v1830 = vrot.slane %v1801, %v1829
        %v1831 = vlaneseq
        %v1832 = vshrl.u32 %v1831, 7
        %v1833 = vsub.s32 7, %v1832
        %v1834 = vrot.slane %v1801, %v1833
        %v1835 = vcombine.low %v1806, %v1810
        %v1836 = vcombine.low %v1814, %v1818
        %v1837 = vcombine.low %v1822, %v1826
        %v1838 = vcombine.low %v1830, %v1834
        %1839 = vrot.lane.b32.xlu0 %v1835, 34
        %v1840 = vpop.permute.xlu0 %1839
        %1841 = vrot.lane.b32.xlu0 %v1836, 34
        %v1842 = vpop.permute.xlu0 %1841
        %1843 = vrot.lane.b32.xlu0 %v1837, 34
        %v1844 = vpop.permute.xlu0 %1843
        %1845 = vrot.lane.b32.xlu0 %v1838, 34
        %v1846 = vpop.permute.xlu0 %1845
        %v1847 = vrot.slane %v1840, 4
        %v1848 = vrot.slane %v1842, 4
        %v1849 = vrot.slane %v1844, 4
        %v1850 = vrot.slane %v1846, 4
        %vm1851 = vcmask 277504
        %v1852 = vsel %vm1851, %v1847, %v1840
        %v1853 = vsel %vm765, %v1847, %v1848
        %v1854 = vsel %vm1851, %v1853, %v1842
        %v1855 = vsel %vm765, %v1848, %v1849
        %v1856 = vsel %vm1851, %v1855, %v1844
        %v1857 = vsel %vm765, %v1849, %v1850
        %v1858 = vsel %vm1851, %v1857, %v1846
        %v1864 = vmul.f32 %v1796, %v1852
        %v1865 = vmul.f32 %v1797, %v1854
        %v1866 = vmul.f32 %v1798, %v1856
        %v1867 = vmul.f32 %v1799, %v1858
        %v1868 = vmul.f32 %v1800, %v1850
        %v1874 = vcombine.high %v1864, %v1864
        %v1875 = vcombine.high %v1865, %v1865
        %v1876 = vcombine.high %v1866, %v1866
        %v1877 = vcombine.high %v1867, %v1867
        %1878 = vrot.lane.b32.xlu0 %v1864, 94
        %v1879 = vpop.permute.xlu0 %1878
        %1880 = vrot.lane.b32.xlu0 %v1874, 94
        %v1881 = vpop.permute.xlu0 %1880
        %1882 = vrot.lane.b32.xlu0 %v1865, 94
        %v1883 = vpop.permute.xlu0 %1882
        %1884 = vrot.lane.b32.xlu0 %v1875, 94
        %v1885 = vpop.permute.xlu0 %1884
        %1886 = vrot.lane.b32.xlu0 %v1866, 94
        %v1887 = vpop.permute.xlu0 %1886
        %1888 = vrot.lane.b32.xlu0 %v1876, 94
        %v1889 = vpop.permute.xlu0 %1888
        %1890 = vrot.lane.b32.xlu0 %v1867, 94
        %v1891 = vpop.permute.xlu0 %1890
        %1892 = vrot.lane.b32.xlu0 %v1877, 94
        %v1893 = vpop.permute.xlu0 %1892
        %1894 = vrot.lane.b32.xlu0 %v1868, 94
        %v1895 = vpop.permute.xlu0 %1894
        %vm1896 = vcmask 769024
        %v1897 = vsel %vm1896, %v1879, %v1881
        %v1898 = vsel %vm1896, %v1881, %v1883
        %v1899 = vsel %vm1896, %v1883, %v1885
        %v1900 = vsel %vm1896, %v1885, %v1887
        %v1901 = vsel %vm1896, %v1887, %v1889
        %v1902 = vsel %vm1896, %v1889, %v1891
        %v1903 = vsel %vm1896, %v1891, %v1893
        %v1904 = vsel %vm1896, %v1893, %v1895
        %1913 = vst [vmem:[#allocation3 + $0x200] sm:$0xf] %v1897
        %1914 = vst [vmem:[#allocation3 + $0x208] sm:$0xf] %v1898
        %1915 = vst [vmem:[#allocation3 + $0x210] sm:$0xf] %v1899
        %1916 = vst [vmem:[#allocation3 + $0x218] sm:$0xf] %v1900
        %1917 = vst [vmem:[#allocation3 + $0x220] sm:$0xf] %v1901
        %1918 = vst [vmem:[#allocation3 + $0x228] sm:$0xf] %v1902
        %1919 = vst [vmem:[#allocation3 + $0x230] sm:$0xf] %v1903
        %1920 = vst [vmem:[#allocation3 + $0x238] sm:$0xf] %v1904
        %v1921 = vld [vmem:[#allocation2 + $0x8] sm:$0xff]
        %v1922 = vld [vmem:[#allocation2 + $0x10] sm:$0xff]
        %v1923 = vld [vmem:[#allocation2 + $0x18] sm:$0xff]
        %v1924 = vld [vmem:[#allocation2 + $0x20] sm:$0xff]
        %v1925 = vmul.f32 %v844, %v852
        %v1927 = vlaneseq
        %v1928 = vshrl.u32 %v1927, 7
        %v1929 = vsub.s32 0, %v1928
        %v1930 = vrot.slane %v1925, %v1929
        %v1931 = vlaneseq
        %v1932 = vshrl.u32 %v1931, 7
        %v1933 = vsub.s32 1, %v1932
        %v1934 = vrot.slane %v1925, %v1933
        %v1935 = vlaneseq
        %v1936 = vshrl.u32 %v1935, 7
        %v1937 = vsub.s32 2, %v1936
        %v1938 = vrot.slane %v1925, %v1937
        %v1939 = vlaneseq
        %v1940 = vshrl.u32 %v1939, 7
        %v1941 = vsub.s32 3, %v1940
        %v1942 = vrot.slane %v1925, %v1941
        %v1943 = vlaneseq
        %v1944 = vshrl.u32 %v1943, 7
        %v1945 = vsub.s32 4, %v1944
        %v1946 = vrot.slane %v1925, %v1945
        %v1947 = vlaneseq
        %v1948 = vshrl.u32 %v1947, 7
        %v1949 = vsub.s32 5, %v1948
        %v1950 = vrot.slane %v1925, %v1949
        %v1951 = vlaneseq
        %v1952 = vshrl.u32 %v1951, 7
        %v1953 = vsub.s32 6, %v1952
        %v1954 = vrot.slane %v1925, %v1953
        %v1955 = vlaneseq
        %v1956 = vshrl.u32 %v1955, 7
        %v1957 = vsub.s32 7, %v1956
        %v1958 = vrot.slane %v1925, %v1957
        %v1959 = vcombine.low %v1930, %v1934
        %v1960 = vcombine.low %v1938, %v1942
        %v1961 = vcombine.low %v1946, %v1950
        %v1962 = vcombine.low %v1954, %v1958
        %v1967 = vmul.f32 %v1921, %v1959
        %v1968 = vmul.f32 %v1922, %v1960
        %v1969 = vmul.f32 %v1923, %v1961
        %v1970 = vmul.f32 %v1924, %v1962
        %v1975 = vcombine.high %v1967, %v1967
        %v1976 = vcombine.high %v1968, %v1968
        %v1977 = vcombine.high %v1969, %v1969
        %v1978 = vcombine.high %v1970, %v1970
        %1983 = vst [vmem:[#allocation3 + $0x240] sm:$0xf] %v1967
        %1984 = vst [vmem:[#allocation3 + $0x248] sm:$0xf] %v1975
        %1985 = vst [vmem:[#allocation3 + $0x250] sm:$0xf] %v1968
        %1986 = vst [vmem:[#allocation3 + $0x258] sm:$0xf] %v1976
        %1987 = vst [vmem:[#allocation3 + $0x260] sm:$0xf] %v1969
        %1988 = vst [vmem:[#allocation3 + $0x268] sm:$0xf] %v1977
        %1989 = vst [vmem:[#allocation3 + $0x270] sm:$0xf] %v1970
        %1990 = vst [vmem:[#allocation3 + $0x278] sm:$0xf] %v1978
        %v1991 = vld [vmem:[#allocation2 + $0x8] sm:$0xff]
        %v1992 = vld [vmem:[#allocation2 + $0x10] sm:$0xff]
        %v1993 = vld [vmem:[#allocation2 + $0x18] sm:$0xff]
        %v1994 = vld [vmem:[#allocation2 + $0x20] sm:$0xff]
        %v1995 = vld [vmem:[#allocation2 + $0x28] sm:$0xf]
        %v1997 = vlaneseq
        %v1998 = vshrl.u32 %v1997, 7
        %v1999 = vsub.s32 0, %v1998
        %v2000 = vrot.slane %v844, %v1999
        %v2001 = vlaneseq
        %v2002 = vshrl.u32 %v2001, 7
        %v2003 = vsub.s32 1, %v2002
        %v2004 = vrot.slane %v844, %v2003
        %v2005 = vlaneseq
        %v2006 = vshrl.u32 %v2005, 7
        %v2007 = vsub.s32 2, %v2006
        %v2008 = vrot.slane %v844, %v2007
        %v2009 = vlaneseq
        %v2010 = vshrl.u32 %v2009, 7
        %v2011 = vsub.s32 3, %v2010
        %v2012 = vrot.slane %v844, %v2011
        %v2013 = vlaneseq
        %v2014 = vshrl.u32 %v2013, 7
        %v2015 = vsub.s32 4, %v2014
        %v2016 = vrot.slane %v844, %v2015
        %v2017 = vlaneseq
        %v2018 = vshrl.u32 %v2017, 7
        %v2019 = vsub.s32 5, %v2018
        %v2020 = vrot.slane %v844, %v2019
        %v2021 = vlaneseq
        %v2022 = vshrl.u32 %v2021, 7
        %v2023 = vsub.s32 6, %v2022
        %v2024 = vrot.slane %v844, %v2023
        %v2025 = vlaneseq
        %v2026 = vshrl.u32 %v2025, 7
        %v2027 = vsub.s32 7, %v2026
        %v2028 = vrot.slane %v844, %v2027
        %v2029 = vcombine.low %v2000, %v2004
        %v2030 = vcombine.low %v2008, %v2012
        %v2031 = vcombine.low %v2016, %v2020
        %v2032 = vcombine.low %v2024, %v2028
        %2033 = vrot.lane.b32.xlu0 %v2029, 1
        %v2034 = vpop.permute.xlu0 %2033
        %2035 = vrot.lane.b32.xlu0 %v2030, 1
        %v2036 = vpop.permute.xlu0 %2035
        %2037 = vrot.lane.b32.xlu0 %v2031, 1
        %v2038 = vpop.permute.xlu0 %2037
        %2039 = vrot.lane.b32.xlu0 %v2032, 1
        %v2040 = vpop.permute.xlu0 %2039
        %v2041 = vrot.slane %v2034, 4
        %v2042 = vrot.slane %v2036, 4
        %v2043 = vrot.slane %v2038, 4
        %v2044 = vrot.slane %v2040, 4
        %v2045 = vsel %vm978, %v2041, %v2034
        %v2046 = vsel %vm765, %v2041, %v2042
        %v2047 = vsel %vm978, %v2046, %v2036
        %v2048 = vsel %vm765, %v2042, %v2043
        %v2049 = vsel %vm978, %v2048, %v2038
        %v2050 = vsel %vm765, %v2043, %v2044
        %v2051 = vsel %vm978, %v2050, %v2040
        %v2057 = vmul.f32 %v1991, %v2045
        %v2058 = vmul.f32 %v1992, %v2047
        %v2059 = vmul.f32 %v1993, %v2049
        %v2060 = vmul.f32 %v1994, %v2051
        %v2061 = vmul.f32 %v1995, %v2044
        %v2067 = vcombine.high %v2057, %v2057
        %v2068 = vcombine.high %v2058, %v2058
        %v2069 = vcombine.high %v2059, %v2059
        %v2070 = vcombine.high %v2060, %v2060
        %2071 = vrot.lane.b32.xlu0 %v2057, 127
        %v2072 = vpop.permute.xlu0 %2071
        %2073 = vrot.lane.b32.xlu0 %v2067, 127
        %v2074 = vpop.permute.xlu0 %2073
        %2075 = vrot.lane.b32.xlu0 %v2058, 127
        %v2076 = vpop.permute.xlu0 %2075
        %2077 = vrot.lane.b32.xlu0 %v2068, 127
        %v2078 = vpop.permute.xlu0 %2077
        %2079 = vrot.lane.b32.xlu0 %v2059, 127
        %v2080 = vpop.permute.xlu0 %2079
        %2081 = vrot.lane.b32.xlu0 %v2069, 127
        %v2082 = vpop.permute.xlu0 %2081
        %2083 = vrot.lane.b32.xlu0 %v2060, 127
        %v2084 = vpop.permute.xlu0 %2083
        %2085 = vrot.lane.b32.xlu0 %v2070, 127
        %v2086 = vpop.permute.xlu0 %2085
        %2087 = vrot.lane.b32.xlu0 %v2061, 127
        %v2088 = vpop.permute.xlu0 %2087
        %v2089 = vsel %vm1023, %v2072, %v2074
        %v2090 = vsel %vm1023, %v2074, %v2076
        %v2091 = vsel %vm1023, %v2076, %v2078
        %v2092 = vsel %vm1023, %v2078, %v2080
        %v2093 = vsel %vm1023, %v2080, %v2082
        %v2094 = vsel %vm1023, %v2082, %v2084
        %v2095 = vsel %vm1023, %v2084, %v2086
        %v2096 = vsel %vm1023, %v2086, %v2088
        %2105 = vst [vmem:[#allocation3 + $0x280] sm:$0xf] %v2089
        %2106 = vst [vmem:[#allocation3 + $0x288] sm:$0xf] %v2090
        %2107 = vst [vmem:[#allocation3 + $0x290] sm:$0xf] %v2091
        %2108 = vst [vmem:[#allocation3 + $0x298] sm:$0xf] %v2092
        %2109 = vst [vmem:[#allocation3 + $0x2a0] sm:$0xf] %v2093
        %2110 = vst [vmem:[#allocation3 + $0x2a8] sm:$0xf] %v2094
        %2111 = vst [vmem:[#allocation3 + $0x2b0] sm:$0xf] %v2095
        %2112 = vst [vmem:[#allocation3 + $0x2b8] sm:$0xf] %v2096
        %v2113 = vld [vmem:[#allocation2 + $0x8] sm:$0xff]
        %v2114 = vld [vmem:[#allocation2 + $0x10] sm:$0xff]
        %v2115 = vld [vmem:[#allocation2 + $0x18] sm:$0xff]
        %v2116 = vld [vmem:[#allocation2 + $0x20] sm:$0xff]
        %v2117 = vld [vmem:[#allocation2 + $0x28] sm:$0xf]
        %v2118 = vmul.f32 %v844, %v848
        %v2120 = vlaneseq
        %v2121 = vshrl.u32 %v2120, 7
        %v2122 = vsub.s32 0, %v2121
        %v2123 = vrot.slane %v2118, %v2122
        %v2124 = vlaneseq
        %v2125 = vshrl.u32 %v2124, 7
        %v2126 = vsub.s32 1, %v2125
        %v2127 = vrot.slane %v2118, %v2126
        %v2128 = vlaneseq
        %v2129 = vshrl.u32 %v2128, 7
        %v2130 = vsub.s32 2, %v2129
        %v2131 = vrot.slane %v2118, %v2130
        %v2132 = vlaneseq
        %v2133 = vshrl.u32 %v2132, 7
        %v2134 = vsub.s32 3, %v2133
        %v2135 = vrot.slane %v2118, %v2134
        %v2136 = vlaneseq
        %v2137 = vshrl.u32 %v2136, 7
        %v2138 = vsub.s32 4, %v2137
        %v2139 = vrot.slane %v2118, %v2138
        %v2140 = vlaneseq
        %v2141 = vshrl.u32 %v2140, 7
        %v2142 = vsub.s32 5, %v2141
        %v2143 = vrot.slane %v2118, %v2142
        %v2144 = vlaneseq
        %v2145 = vshrl.u32 %v2144, 7
        %v2146 = vsub.s32 6, %v2145
        %v2147 = vrot.slane %v2118, %v2146
        %v2148 = vlaneseq
        %v2149 = vshrl.u32 %v2148, 7
        %v2150 = vsub.s32 7, %v2149
        %v2151 = vrot.slane %v2118, %v2150
        %v2152 = vcombine.low %v2123, %v2127
        %v2153 = vcombine.low %v2131, %v2135
        %v2154 = vcombine.low %v2139, %v2143
        %v2155 = vcombine.low %v2147, %v2151
        %2156 = vrot.lane.b32.xlu0 %v2152, 2
        %v2157 = vpop.permute.xlu0 %2156
        %2158 = vrot.lane.b32.xlu0 %v2153, 2
        %v2159 = vpop.permute.xlu0 %2158
        %2160 = vrot.lane.b32.xlu0 %v2154, 2
        %v2161 = vpop.permute.xlu0 %2160
        %2162 = vrot.lane.b32.xlu0 %v2155, 2
        %v2163 = vpop.permute.xlu0 %2162
        %v2164 = vrot.slane %v2157, 4
        %v2165 = vrot.slane %v2159, 4
        %v2166 = vrot.slane %v2161, 4
        %v2167 = vrot.slane %v2163, 4
        %v2168 = vsel %vm1103, %v2164, %v2157
        %v2169 = vsel %vm765, %v2164, %v2165
        %v2170 = vsel %vm1103, %v2169, %v2159
        %v2171 = vsel %vm765, %v2165, %v2166
        %v2172 = vsel %vm1103, %v2171, %v2161
        %v2173 = vsel %vm765, %v2166, %v2167
        %v2174 = vsel %vm1103, %v2173, %v2163
        %v2180 = vmul.f32 %v2113, %v2168
        %v2181 = vmul.f32 %v2114, %v2170
        %v2182 = vmul.f32 %v2115, %v2172
        %v2183 = vmul.f32 %v2116, %v2174
        %v2184 = vmul.f32 %v2117, %v2167
        %v2190 = vcombine.high %v2180, %v2180
        %v2191 = vcombine.high %v2181, %v2181
        %v2192 = vcombine.high %v2182, %v2182
        %v2193 = vcombine.high %v2183, %v2183
        %2194 = vrot.lane.b32.xlu0 %v2180, 126
        %v2195 = vpop.permute.xlu0 %2194
        %2196 = vrot.lane.b32.xlu0 %v2190, 126
        %v2197 = vpop.permute.xlu0 %2196
        %2198 = vrot.lane.b32.xlu0 %v2181, 126
        %v2199 = vpop.permute.xlu0 %2198
        %2200 = vrot.lane.b32.xlu0 %v2191, 126
        %v2201 = vpop.permute.xlu0 %2200
        %2202 = vrot.lane.b32.xlu0 %v2182, 126
        %v2203 = vpop.permute.xlu0 %2202
        %2204 = vrot.lane.b32.xlu0 %v2192, 126
        %v2205 = vpop.permute.xlu0 %2204
        %2206 = vrot.lane.b32.xlu0 %v2183, 126
        %v2207 = vpop.permute.xlu0 %2206
        %2208 = vrot.lane.b32.xlu0 %v2193, 126
        %v2209 = vpop.permute.xlu0 %2208
        %2210 = vrot.lane.b32.xlu0 %v2184, 126
        %v2211 = vpop.permute.xlu0 %2210
        %v2212 = vsel %vm1148, %v2195, %v2197
        %v2213 = vsel %vm1148, %v2197, %v2199
        %v2214 = vsel %vm1148, %v2199, %v2201
        %v2215 = vsel %vm1148, %v2201, %v2203
        %v2216 = vsel %vm1148, %v2203, %v2205
        %v2217 = vsel %vm1148, %v2205, %v2207
        %v2218 = vsel %vm1148, %v2207, %v2209
        %v2219 = vsel %vm1148, %v2209, %v2211
        %2228 = vst [vmem:[#allocation3 + $0x2c0] sm:$0xf] %v2212
        %2229 = vst [vmem:[#allocation3 + $0x2c8] sm:$0xf] %v2213
        %2230 = vst [vmem:[#allocation3 + $0x2d0] sm:$0xf] %v2214
        %2231 = vst [vmem:[#allocation3 + $0x2d8] sm:$0xf] %v2215
        %2232 = vst [vmem:[#allocation3 + $0x2e0] sm:$0xf] %v2216
        %2233 = vst [vmem:[#allocation3 + $0x2e8] sm:$0xf] %v2217
        %2234 = vst [vmem:[#allocation3 + $0x2f0] sm:$0xf] %v2218
        %2235 = vst [vmem:[#allocation3 + $0x2f8] sm:$0xf] %v2219
        %v2236 = vld [vmem:[#allocation2 + $0x8] sm:$0xff]
        %v2237 = vld [vmem:[#allocation2 + $0x10] sm:$0xff]
        %v2238 = vld [vmem:[#allocation2 + $0x18] sm:$0xff]
        %v2239 = vld [vmem:[#allocation2 + $0x20] sm:$0xff]
        %v2240 = vld [vmem:[#allocation2 + $0x28] sm:$0xf]
        %v2242 = vlaneseq
        %v2243 = vshrl.u32 %v2242, 7
        %v2244 = vsub.s32 0, %v2243
        %v2245 = vrot.slane %v852, %v2244
        %v2246 = vlaneseq
        %v2247 = vshrl.u32 %v2246, 7
        %v2248 = vsub.s32 1, %v2247
        %v2249 = vrot.slane %v852, %v2248
        %v2250 = vlaneseq
        %v2251 = vshrl.u32 %v2250, 7
        %v2252 = vsub.s32 2, %v2251
        %v2253 = vrot.slane %v852, %v2252
        %v2254 = vlaneseq
        %v2255 = vshrl.u32 %v2254, 7
        %v2256 = vsub.s32 3, %v2255
        %v2257 = vrot.slane %v852, %v2256
        %v2258 = vlaneseq
        %v2259 = vshrl.u32 %v2258, 7
        %v2260 = vsub.s32 4, %v2259
        %v2261 = vrot.slane %v852, %v2260
        %v2262 = vlaneseq
        %v2263 = vshrl.u32 %v2262, 7
        %v2264 = vsub.s32 5, %v2263
        %v2265 = vrot.slane %v852, %v2264
        %v2266 = vlaneseq
        %v2267 = vshrl.u32 %v2266, 7
        %v2268 = vsub.s32 6, %v2267
        %v2269 = vrot.slane %v852, %v2268
        %v2270 = vlaneseq
        %v2271 = vshrl.u32 %v2270, 7
        %v2272 = vsub.s32 7, %v2271
        %v2273 = vrot.slane %v852, %v2272
        %v2274 = vcombine.low %v2245, %v2249
        %v2275 = vcombine.low %v2253, %v2257
        %v2276 = vcombine.low %v2261, %v2265
        %v2277 = vcombine.low %v2269, %v2273
        %2278 = vrot.lane.b32.xlu0 %v2274, 16
        %v2279 = vpop.permute.xlu0 %2278
        %2280 = vrot.lane.b32.xlu0 %v2275, 16
        %v2281 = vpop.permute.xlu0 %2280
        %2282 = vrot.lane.b32.xlu0 %v2276, 16
        %v2283 = vpop.permute.xlu0 %2282
        %2284 = vrot.lane.b32.xlu0 %v2277, 16
        %v2285 = vpop.permute.xlu0 %2284
        %v2286 = vrot.slane %v2279, 4
        %v2287 = vrot.slane %v2281, 4
        %v2288 = vrot.slane %v2283, 4
        %v2289 = vrot.slane %v2285, 4
        %v2290 = vsel %vm1228, %v2286, %v2279
        %v2291 = vsel %vm765, %v2286, %v2287
        %v2292 = vsel %vm1228, %v2291, %v2281
        %v2293 = vsel %vm765, %v2287, %v2288
        %v2294 = vsel %vm1228, %v2293, %v2283
        %v2295 = vsel %vm765, %v2288, %v2289
        %v2296 = vsel %vm1228, %v2295, %v2285
        %v2302 = vmul.f32 %v2236, %v2290
        %v2303 = vmul.f32 %v2237, %v2292
        %v2304 = vmul.f32 %v2238, %v2294
        %v2305 = vmul.f32 %v2239, %v2296
        %v2306 = vmul.f32 %v2240, %v2289
        %v2312 = vcombine.high %v2302, %v2302
        %v2313 = vcombine.high %v2303, %v2303
        %v2314 = vcombine.high %v2304, %v2304
        %v2315 = vcombine.high %v2305, %v2305
        %2316 = vrot.lane.b32.xlu0 %v2302, 112
        %v2317 = vpop.permute.xlu0 %2316
        %2318 = vrot.lane.b32.xlu0 %v2312, 112
        %v2319 = vpop.permute.xlu0 %2318
        %2320 = vrot.lane.b32.xlu0 %v2303, 112
        %v2321 = vpop.permute.xlu0 %2320
        %2322 = vrot.lane.b32.xlu0 %v2313, 112
        %v2323 = vpop.permute.xlu0 %2322
        %2324 = vrot.lane.b32.xlu0 %v2304, 112
        %v2325 = vpop.permute.xlu0 %2324
        %2326 = vrot.lane.b32.xlu0 %v2314, 112
        %v2327 = vpop.permute.xlu0 %2326
        %2328 = vrot.lane.b32.xlu0 %v2305, 112
        %v2329 = vpop.permute.xlu0 %2328
        %2330 = vrot.lane.b32.xlu0 %v2315, 112
        %v2331 = vpop.permute.xlu0 %2330
        %2332 = vrot.lane.b32.xlu0 %v2306, 112
        %v2333 = vpop.permute.xlu0 %2332
        %v2334 = vsel %vm1273, %v2317, %v2319
        %v2335 = vsel %vm1273, %v2319, %v2321
        %v2336 = vsel %vm1273, %v2321, %v2323
        %v2337 = vsel %vm1273, %v2323, %v2325
        %v2338 = vsel %vm1273, %v2325, %v2327
        %v2339 = vsel %vm1273, %v2327, %v2329
        %v2340 = vsel %vm1273, %v2329, %v2331
        %v2341 = vsel %vm1273, %v2331, %v2333
        %2350 = vst [vmem:[#allocation3 + $0x300] sm:$0xf] %v2334
        %2351 = vst [vmem:[#allocation3 + $0x308] sm:$0xf] %v2335
        %2352 = vst [vmem:[#allocation3 + $0x310] sm:$0xf] %v2336
        %2353 = vst [vmem:[#allocation3 + $0x318] sm:$0xf] %v2337
        %2354 = vst [vmem:[#allocation3 + $0x320] sm:$0xf] %v2338
        %2355 = vst [vmem:[#allocation3 + $0x328] sm:$0xf] %v2339
        %2356 = vst [vmem:[#allocation3 + $0x330] sm:$0xf] %v2340
        %2357 = vst [vmem:[#allocation3 + $0x338] sm:$0xf] %v2341
        %v2358 = vld [vmem:[#allocation2 + $0x8] sm:$0xff]
        %v2359 = vld [vmem:[#allocation2 + $0x10] sm:$0xff]
        %v2360 = vld [vmem:[#allocation2 + $0x18] sm:$0xff]
        %v2361 = vld [vmem:[#allocation2 + $0x20] sm:$0xff]
        %v2362 = vld [vmem:[#allocation2 + $0x28] sm:$0xf]
        %v2368 = vcombine.high %v2358, %v2358
        %v2369 = vcombine.high %v2359, %v2359
        %v2370 = vcombine.high %v2360, %v2360
        %v2371 = vcombine.high %v2361, %v2361
        %2372 = vrot.lane.b32.xlu0 %v2358, 111
        %v2373 = vpop.permute.xlu0 %2372
        %2374 = vrot.lane.b32.xlu0 %v2368, 111
        %v2375 = vpop.permute.xlu0 %2374
        %2376 = vrot.lane.b32.xlu0 %v2359, 111
        %v2377 = vpop.permute.xlu0 %2376
        %2378 = vrot.lane.b32.xlu0 %v2369, 111
        %v2379 = vpop.permute.xlu0 %2378
        %2380 = vrot.lane.b32.xlu0 %v2360, 111
        %v2381 = vpop.permute.xlu0 %2380
        %2382 = vrot.lane.b32.xlu0 %v2370, 111
        %v2383 = vpop.permute.xlu0 %2382
        %2384 = vrot.lane.b32.xlu0 %v2361, 111
        %v2385 = vpop.permute.xlu0 %2384
        %2386 = vrot.lane.b32.xlu0 %v2371, 111
        %v2387 = vpop.permute.xlu0 %2386
        %2388 = vrot.lane.b32.xlu0 %v2362, 111
        %v2389 = vpop.permute.xlu0 %2388
        %v2390 = vsel %vm1396, %v2373, %v2375
        %v2391 = vsel %vm1396, %v2375, %v2377
        %v2392 = vsel %vm1396, %v2377, %v2379
        %v2393 = vsel %vm1396, %v2379, %v2381
        %v2394 = vsel %vm1396, %v2381, %v2383
        %v2395 = vsel %vm1396, %v2383, %v2385
        %v2396 = vsel %vm1396, %v2385, %v2387
        %v2397 = vsel %vm1396, %v2387, %v2389
        %2406 = vst [vmem:[#allocation3 + $0x340] sm:$0xf] %v2390
        %2407 = vst [vmem:[#allocation3 + $0x348] sm:$0xf] %v2391
        %2408 = vst [vmem:[#allocation3 + $0x350] sm:$0xf] %v2392
        %2409 = vst [vmem:[#allocation3 + $0x358] sm:$0xf] %v2393
        %2410 = vst [vmem:[#allocation3 + $0x360] sm:$0xf] %v2394
        %2411 = vst [vmem:[#allocation3 + $0x368] sm:$0xf] %v2395
        %2412 = vst [vmem:[#allocation3 + $0x370] sm:$0xf] %v2396
        %2413 = vst [vmem:[#allocation3 + $0x378] sm:$0xf] %v2397
        %v2414 = vld [vmem:[#allocation2 + $0x8] sm:$0xff]
        %v2415 = vld [vmem:[#allocation2 + $0x10] sm:$0xff]
        %v2416 = vld [vmem:[#allocation2 + $0x18] sm:$0xff]
        %v2417 = vld [vmem:[#allocation2 + $0x20] sm:$0xff]
        %v2418 = vld [vmem:[#allocation2 + $0x28] sm:$0xf]
        %v2420 = vlaneseq
        %v2421 = vshrl.u32 %v2420, 7
        %v2422 = vsub.s32 0, %v2421
        %v2423 = vrot.slane %v848, %v2422
        %v2424 = vlaneseq
        %v2425 = vshrl.u32 %v2424, 7
        %v2426 = vsub.s32 1, %v2425
        %v2427 = vrot.slane %v848, %v2426
        %v2428 = vlaneseq
        %v2429 = vshrl.u32 %v2428, 7
        %v2430 = vsub.s32 2, %v2429
        %v2431 = vrot.slane %v848, %v2430
        %v2432 = vlaneseq
        %v2433 = vshrl.u32 %v2432, 7
        %v2434 = vsub.s32 3, %v2433
        %v2435 = vrot.slane %v848, %v2434
        %v2436 = vlaneseq
        %v2437 = vshrl.u32 %v2436, 7
        %v2438 = vsub.s32 4, %v2437
        %v2439 = vrot.slane %v848, %v2438
        %v2440 = vlaneseq
        %v2441 = vshrl.u32 %v2440, 7
        %v2442 = vsub.s32 5, %v2441
        %v2443 = vrot.slane %v848, %v2442
        %v2444 = vlaneseq
        %v2445 = vshrl.u32 %v2444, 7
        %v2446 = vsub.s32 6, %v2445
        %v2447 = vrot.slane %v848, %v2446
        %v2448 = vlaneseq
        %v2449 = vshrl.u32 %v2448, 7
        %v2450 = vsub.s32 7, %v2449
        %v2451 = vrot.slane %v848, %v2450
        %v2452 = vcombine.low %v2423, %v2427
        %v2453 = vcombine.low %v2431, %v2435
        %v2454 = vcombine.low %v2439, %v2443
        %v2455 = vcombine.low %v2447, %v2451
        %2456 = vrot.lane.b32.xlu0 %v2452, 18
        %v2457 = vpop.permute.xlu0 %2456
        %2458 = vrot.lane.b32.xlu0 %v2453, 18
        %v2459 = vpop.permute.xlu0 %2458
        %2460 = vrot.lane.b32.xlu0 %v2454, 18
        %v2461 = vpop.permute.xlu0 %2460
        %2462 = vrot.lane.b32.xlu0 %v2455, 18
        %v2463 = vpop.permute.xlu0 %2462
        %v2464 = vrot.slane %v2457, 4
        %v2465 = vrot.slane %v2459, 4
        %v2466 = vrot.slane %v2461, 4
        %v2467 = vrot.slane %v2463, 4
        %v2468 = vsel %vm1476, %v2464, %v2457
        %v2469 = vsel %vm765, %v2464, %v2465
        %v2470 = vsel %vm1476, %v2469, %v2459
        %v2471 = vsel %vm765, %v2465, %v2466
        %v2472 = vsel %vm1476, %v2471, %v2461
        %v2473 = vsel %vm765, %v2466, %v2467
        %v2474 = vsel %vm1476, %v2473, %v2463
        %v2480 = vmul.f32 %v2414, %v2468
        %v2481 = vmul.f32 %v2415, %v2470
        %v2482 = vmul.f32 %v2416, %v2472
        %v2483 = vmul.f32 %v2417, %v2474
        %v2484 = vmul.f32 %v2418, %v2467
        %v2490 = vcombine.high %v2480, %v2480
        %v2491 = vcombine.high %v2481, %v2481
        %v2492 = vcombine.high %v2482, %v2482
        %v2493 = vcombine.high %v2483, %v2483
        %2494 = vrot.lane.b32.xlu0 %v2480, 110
        %v2495 = vpop.permute.xlu0 %2494
        %2496 = vrot.lane.b32.xlu0 %v2490, 110
        %v2497 = vpop.permute.xlu0 %2496
        %2498 = vrot.lane.b32.xlu0 %v2481, 110
        %v2499 = vpop.permute.xlu0 %2498
        %2500 = vrot.lane.b32.xlu0 %v2491, 110
        %v2501 = vpop.permute.xlu0 %2500
        %2502 = vrot.lane.b32.xlu0 %v2482, 110
        %v2503 = vpop.permute.xlu0 %2502
        %2504 = vrot.lane.b32.xlu0 %v2492, 110
        %v2505 = vpop.permute.xlu0 %2504
        %2506 = vrot.lane.b32.xlu0 %v2483, 110
        %v2507 = vpop.permute.xlu0 %2506
        %2508 = vrot.lane.b32.xlu0 %v2493, 110
        %v2509 = vpop.permute.xlu0 %2508
        %2510 = vrot.lane.b32.xlu0 %v2484, 110
        %v2511 = vpop.permute.xlu0 %2510
        %v2512 = vsel %vm1521, %v2495, %v2497
        %v2513 = vsel %vm1521, %v2497, %v2499
        %v2514 = vsel %vm1521, %v2499, %v2501
        %v2515 = vsel %vm1521, %v2501, %v2503
        %v2516 = vsel %vm1521, %v2503, %v2505
        %v2517 = vsel %vm1521, %v2505, %v2507
        %v2518 = vsel %vm1521, %v2507, %v2509
        %v2519 = vsel %vm1521, %v2509, %v2511
        %2528 = vst [vmem:[#allocation3 + $0x380] sm:$0xf] %v2512
        %2529 = vst [vmem:[#allocation3 + $0x388] sm:$0xf] %v2513
        %2530 = vst [vmem:[#allocation3 + $0x390] sm:$0xf] %v2514
        %2531 = vst [vmem:[#allocation3 + $0x398] sm:$0xf] %v2515
        %2532 = vst [vmem:[#allocation3 + $0x3a0] sm:$0xf] %v2516
        %2533 = vst [vmem:[#allocation3 + $0x3a8] sm:$0xf] %v2517
        %2534 = vst [vmem:[#allocation3 + $0x3b0] sm:$0xf] %v2518
        %2535 = vst [vmem:[#allocation3 + $0x3b8] sm:$0xf] %v2519
        %v2536 = vld [vmem:[#allocation2 + $0x8] sm:$0xff]
        %v2537 = vld [vmem:[#allocation2 + $0x10] sm:$0xff]
        %v2538 = vld [vmem:[#allocation2 + $0x18] sm:$0xff]
        %v2539 = vld [vmem:[#allocation2 + $0x20] sm:$0xff]
        %v2540 = vld [vmem:[#allocation2 + $0x28] sm:$0xf]
        %v2541 = vmul.f32 %v840, %v852
        %v2543 = vlaneseq
        %v2544 = vshrl.u32 %v2543, 7
        %v2545 = vsub.s32 0, %v2544
        %v2546 = vrot.slane %v2541, %v2545
        %v2547 = vlaneseq
        %v2548 = vshrl.u32 %v2547, 7
        %v2549 = vsub.s32 1, %v2548
        %v2550 = vrot.slane %v2541, %v2549
        %v2551 = vlaneseq
        %v2552 = vshrl.u32 %v2551, 7
        %v2553 = vsub.s32 2, %v2552
        %v2554 = vrot.slane %v2541, %v2553
        %v2555 = vlaneseq
        %v2556 = vshrl.u32 %v2555, 7
        %v2557 = vsub.s32 3, %v2556
        %v2558 = vrot.slane %v2541, %v2557
        %v2559 = vlaneseq
        %v2560 = vshrl.u32 %v2559, 7
        %v2561 = vsub.s32 4, %v2560
        %v2562 = vrot.slane %v2541, %v2561
        %v2563 = vlaneseq
        %v2564 = vshrl.u32 %v2563, 7
        %v2565 = vsub.s32 5, %v2564
        %v2566 = vrot.slane %v2541, %v2565
        %v2567 = vlaneseq
        %v2568 = vshrl.u32 %v2567, 7
        %v2569 = vsub.s32 6, %v2568
        %v2570 = vrot.slane %v2541, %v2569
        %v2571 = vlaneseq
        %v2572 = vshrl.u32 %v2571, 7
        %v2573 = vsub.s32 7, %v2572
        %v2574 = vrot.slane %v2541, %v2573
        %v2575 = vcombine.low %v2546, %v2550
        %v2576 = vcombine.low %v2554, %v2558
        %v2577 = vcombine.low %v2562, %v2566
        %v2578 = vcombine.low %v2570, %v2574
        %2579 = vrot.lane.b32.xlu0 %v2575, 32
        %v2580 = vpop.permute.xlu0 %2579
        %2581 = vrot.lane.b32.xlu0 %v2576, 32
        %v2582 = vpop.permute.xlu0 %2581
        %2583 = vrot.lane.b32.xlu0 %v2577, 32
        %v2584 = vpop.permute.xlu0 %2583
        %2585 = vrot.lane.b32.xlu0 %v2578, 32
        %v2586 = vpop.permute.xlu0 %2585
        %v2587 = vrot.slane %v2580, 4
        %v2588 = vrot.slane %v2582, 4
        %v2589 = vrot.slane %v2584, 4
        %v2590 = vrot.slane %v2586, 4
        %v2591 = vsel %vm1602, %v2587, %v2580
        %v2592 = vsel %vm765, %v2587, %v2588
        %v2593 = vsel %vm1602, %v2592, %v2582
        %v2594 = vsel %vm765, %v2588, %v2589
        %v2595 = vsel %vm1602, %v2594, %v2584
        %v2596 = vsel %vm765, %v2589, %v2590
        %v2597 = vsel %vm1602, %v2596, %v2586
        %v2603 = vmul.f32 %v2536, %v2591
        %v2604 = vmul.f32 %v2537, %v2593
        %v2605 = vmul.f32 %v2538, %v2595
        %v2606 = vmul.f32 %v2539, %v2597
        %v2607 = vmul.f32 %v2540, %v2590
        %v2613 = vcombine.high %v2603, %v2603
        %v2614 = vcombine.high %v2604, %v2604
        %v2615 = vcombine.high %v2605, %v2605
        %v2616 = vcombine.high %v2606, %v2606
        %2617 = vrot.lane.b32.xlu0 %v2603, 96
        %v2618 = vpop.permute.xlu0 %2617
        %2619 = vrot.lane.b32.xlu0 %v2613, 96
        %v2620 = vpop.permute.xlu0 %2619
        %2621 = vrot.lane.b32.xlu0 %v2604, 96
        %v2622 = vpop.permute.xlu0 %2621
        %2623 = vrot.lane.b32.xlu0 %v2614, 96
        %v2624 = vpop.permute.xlu0 %2623
        %2625 = vrot.lane.b32.xlu0 %v2605, 96
        %v2626 = vpop.permute.xlu0 %2625
        %2627 = vrot.lane.b32.xlu0 %v2615, 96
        %v2628 = vpop.permute.xlu0 %2627
        %2629 = vrot.lane.b32.xlu0 %v2606, 96
        %v2630 = vpop.permute.xlu0 %2629
        %2631 = vrot.lane.b32.xlu0 %v2616, 96
        %v2632 = vpop.permute.xlu0 %2631
        %2633 = vrot.lane.b32.xlu0 %v2607, 96
        %v2634 = vpop.permute.xlu0 %2633
        %v2635 = vsel %vm1647, %v2618, %v2620
        %v2636 = vsel %vm1647, %v2620, %v2622
        %v2637 = vsel %vm1647, %v2622, %v2624
        %v2638 = vsel %vm1647, %v2624, %v2626
        %v2639 = vsel %vm1647, %v2626, %v2628
        %v2640 = vsel %vm1647, %v2628, %v2630
        %v2641 = vsel %vm1647, %v2630, %v2632
        %v2642 = vsel %vm1647, %v2632, %v2634
        %2651 = vst [vmem:[#allocation3 + $0x3c0] sm:$0xf] %v2635
        %2652 = vst [vmem:[#allocation3 + $0x3c8] sm:$0xf] %v2636
        %2653 = vst [vmem:[#allocation3 + $0x3d0] sm:$0xf] %v2637
        %2654 = vst [vmem:[#allocation3 + $0x3d8] sm:$0xf] %v2638
        %2655 = vst [vmem:[#allocation3 + $0x3e0] sm:$0xf] %v2639
        %2656 = vst [vmem:[#allocation3 + $0x3e8] sm:$0xf] %v2640
        %2657 = vst [vmem:[#allocation3 + $0x3f0] sm:$0xf] %v2641
        %2658 = vst [vmem:[#allocation3 + $0x3f8] sm:$0xf] %v2642
        %v2659 = vld [vmem:[#allocation2 + $0x8] sm:$0xff]
        %v2660 = vld [vmem:[#allocation2 + $0x10] sm:$0xff]
        %v2661 = vld [vmem:[#allocation2 + $0x18] sm:$0xff]
        %v2662 = vld [vmem:[#allocation2 + $0x20] sm:$0xff]
        %v2663 = vld [vmem:[#allocation2 + $0x28] sm:$0xf]
        %v2665 = vlaneseq
        %v2666 = vshrl.u32 %v2665, 7
        %v2667 = vsub.s32 0, %v2666
        %v2668 = vrot.slane %v840, %v2667
        %v2669 = vlaneseq
        %v2670 = vshrl.u32 %v2669, 7
        %v2671 = vsub.s32 1, %v2670
        %v2672 = vrot.slane %v840, %v2671
        %v2673 = vlaneseq
        %v2674 = vshrl.u32 %v2673, 7
        %v2675 = vsub.s32 2, %v2674
        %v2676 = vrot.slane %v840, %v2675
        %v2677 = vlaneseq
        %v2678 = vshrl.u32 %v2677, 7
        %v2679 = vsub.s32 3, %v2678
        %v2680 = vrot.slane %v840, %v2679
        %v2681 = vlaneseq
        %v2682 = vshrl.u32 %v2681, 7
        %v2683 = vsub.s32 4, %v2682
        %v2684 = vrot.slane %v840, %v2683
        %v2685 = vlaneseq
        %v2686 = vshrl.u32 %v2685, 7
        %v2687 = vsub.s32 5, %v2686
        %v2688 = vrot.slane %v840, %v2687
        %v2689 = vlaneseq
        %v2690 = vshrl.u32 %v2689, 7
        %v2691 = vsub.s32 6, %v2690
        %v2692 = vrot.slane %v840, %v2691
        %v2693 = vlaneseq
        %v2694 = vshrl.u32 %v2693, 7
        %v2695 = vsub.s32 7, %v2694
        %v2696 = vrot.slane %v840, %v2695
        %v2697 = vcombine.low %v2668, %v2672
        %v2698 = vcombine.low %v2676, %v2680
        %v2699 = vcombine.low %v2684, %v2688
        %v2700 = vcombine.low %v2692, %v2696
        %2701 = vrot.lane.b32.xlu0 %v2697, 33
        %v2702 = vpop.permute.xlu0 %2701
        %2703 = vrot.lane.b32.xlu0 %v2698, 33
        %v2704 = vpop.permute.xlu0 %2703
        %2705 = vrot.lane.b32.xlu0 %v2699, 33
        %v2706 = vpop.permute.xlu0 %2705
        %2707 = vrot.lane.b32.xlu0 %v2700, 33
        %v2708 = vpop.permute.xlu0 %2707
        %v2709 = vrot.slane %v2702, 4
        %v2710 = vrot.slane %v2704, 4
        %v2711 = vrot.slane %v2706, 4
        %v2712 = vrot.slane %v2708, 4
        %v2713 = vsel %vm1726, %v2709, %v2702
        %v2714 = vsel %vm765, %v2709, %v2710
        %v2715 = vsel %vm1726, %v2714, %v2704
        %v2716 = vsel %vm765, %v2710, %v2711
        %v2717 = vsel %vm1726, %v2716, %v2706
        %v2718 = vsel %vm765, %v2711, %v2712
        %v2719 = vsel %vm1726, %v2718, %v2708
        %v2725 = vmul.f32 %v2659, %v2713
        %v2726 = vmul.f32 %v2660, %v2715
        %v2727 = vmul.f32 %v2661, %v2717
        %v2728 = vmul.f32 %v2662, %v2719
        %v2729 = vmul.f32 %v2663, %v2712
        %v2735 = vcombine.high %v2725, %v2725
        %v2736 = vcombine.high %v2726, %v2726
        %v2737 = vcombine.high %v2727, %v2727
        %v2738 = vcombine.high %v2728, %v2728
        %2739 = vrot.lane.b32.xlu0 %v2725, 95
        %v2740 = vpop.permute.xlu0 %2739
        %2741 = vrot.lane.b32.xlu0 %v2735, 95
        %v2742 = vpop.permute.xlu0 %2741
        %2743 = vrot.lane.b32.xlu0 %v2726, 95
        %v2744 = vpop.permute.xlu0 %2743
        %2745 = vrot.lane.b32.xlu0 %v2736, 95
        %v2746 = vpop.permute.xlu0 %2745
        %2747 = vrot.lane.b32.xlu0 %v2727, 95
        %v2748 = vpop.permute.xlu0 %2747
        %2749 = vrot.lane.b32.xlu0 %v2737, 95
        %v2750 = vpop.permute.xlu0 %2749
        %2751 = vrot.lane.b32.xlu0 %v2728, 95
        %v2752 = vpop.permute.xlu0 %2751
        %2753 = vrot.lane.b32.xlu0 %v2738, 95
        %v2754 = vpop.permute.xlu0 %2753
        %2755 = vrot.lane.b32.xlu0 %v2729, 95
        %v2756 = vpop.permute.xlu0 %2755
        %v2757 = vsel %vm1771, %v2740, %v2742
        %v2758 = vsel %vm1771, %v2742, %v2744
        %v2759 = vsel %vm1771, %v2744, %v2746
        %v2760 = vsel %vm1771, %v2746, %v2748
        %v2761 = vsel %vm1771, %v2748, %v2750
        %v2762 = vsel %vm1771, %v2750, %v2752
        %v2763 = vsel %vm1771, %v2752, %v2754
        %v2764 = vsel %vm1771, %v2754, %v2756
        %2773 = vst [vmem:[#allocation3 + $0x400] sm:$0xf] %v2757
        %2774 = vst [vmem:[#allocation3 + $0x408] sm:$0xf] %v2758
        %2775 = vst [vmem:[#allocation3 + $0x410] sm:$0xf] %v2759
        %2776 = vst [vmem:[#allocation3 + $0x418] sm:$0xf] %v2760
        %2777 = vst [vmem:[#allocation3 + $0x420] sm:$0xf] %v2761
        %2778 = vst [vmem:[#allocation3 + $0x428] sm:$0xf] %v2762
        %2779 = vst [vmem:[#allocation3 + $0x430] sm:$0xf] %v2763
        %2780 = vst [vmem:[#allocation3 + $0x438] sm:$0xf] %v2764
        %v2781 = vld [vmem:[#allocation2 + $0x8] sm:$0xff]
        %v2782 = vld [vmem:[#allocation2 + $0x10] sm:$0xff]
        %v2783 = vld [vmem:[#allocation2 + $0x18] sm:$0xff]
        %v2784 = vld [vmem:[#allocation2 + $0x20] sm:$0xff]
        %v2785 = vld [vmem:[#allocation2 + $0x28] sm:$0xf]
        %v2786 = vmul.f32 %v840, %v848
        %v2788 = vlaneseq
        %v2789 = vshrl.u32 %v2788, 7
        %v2790 = vsub.s32 0, %v2789
        %v2791 = vrot.slane %v2786, %v2790
        %v2792 = vlaneseq
        %v2793 = vshrl.u32 %v2792, 7
        %v2794 = vsub.s32 1, %v2793
        %v2795 = vrot.slane %v2786, %v2794
        %v2796 = vlaneseq
        %v2797 = vshrl.u32 %v2796, 7
        %v2798 = vsub.s32 2, %v2797
        %v2799 = vrot.slane %v2786, %v2798
        %v2800 = vlaneseq
        %v2801 = vshrl.u32 %v2800, 7
        %v2802 = vsub.s32 3, %v2801
        %v2803 = vrot.slane %v2786, %v2802
        %v2804 = vlaneseq
        %v2805 = vshrl.u32 %v2804, 7
        %v2806 = vsub.s32 4, %v2805
        %v2807 = vrot.slane %v2786, %v2806
        %v2808 = vlaneseq
        %v2809 = vshrl.u32 %v2808, 7
        %v2810 = vsub.s32 5, %v2809
        %v2811 = vrot.slane %v2786, %v2810
        %v2812 = vlaneseq
        %v2813 = vshrl.u32 %v2812, 7
        %v2814 = vsub.s32 6, %v2813
        %v2815 = vrot.slane %v2786, %v2814
        %v2816 = vlaneseq
        %v2817 = vshrl.u32 %v2816, 7
        %v2818 = vsub.s32 7, %v2817
        %v2819 = vrot.slane %v2786, %v2818
        %v2820 = vcombine.low %v2791, %v2795
        %v2821 = vcombine.low %v2799, %v2803
        %v2822 = vcombine.low %v2807, %v2811
        %v2823 = vcombine.low %v2815, %v2819
        %2824 = vrot.lane.b32.xlu0 %v2820, 34
        %v2825 = vpop.permute.xlu0 %2824
        %2826 = vrot.lane.b32.xlu0 %v2821, 34
        %v2827 = vpop.permute.xlu0 %2826
        %2828 = vrot.lane.b32.xlu0 %v2822, 34
        %v2829 = vpop.permute.xlu0 %2828
        %2830 = vrot.lane.b32.xlu0 %v2823, 34
        %v2831 = vpop.permute.xlu0 %2830
        %v2832 = vrot.slane %v2825, 4
        %v2833 = vrot.slane %v2827, 4
        %v2834 = vrot.slane %v2829, 4
        %v2835 = vrot.slane %v2831, 4
        %v2836 = vsel %vm1851, %v2832, %v2825
        %v2837 = vsel %vm765, %v2832, %v2833
        %v2838 = vsel %vm1851, %v2837, %v2827
        %v2839 = vsel %vm765, %v2833, %v2834
        %v2840 = vsel %vm1851, %v2839, %v2829
        %v2841 = vsel %vm765, %v2834, %v2835
        %v2842 = vsel %vm1851, %v2841, %v2831
        %v2848 = vmul.f32 %v2781, %v2836
        %v2849 = vmul.f32 %v2782, %v2838
        %v2850 = vmul.f32 %v2783, %v2840
        %v2851 = vmul.f32 %v2784, %v2842
        %v2852 = vmul.f32 %v2785, %v2835
        %v2858 = vcombine.high %v2848, %v2848
        %v2859 = vcombine.high %v2849, %v2849
        %v2860 = vcombine.high %v2850, %v2850
        %v2861 = vcombine.high %v2851, %v2851
        %2862 = vrot.lane.b32.xlu0 %v2848, 94
        %v2863 = vpop.permute.xlu0 %2862
        %2864 = vrot.lane.b32.xlu0 %v2858, 94
        %v2865 = vpop.permute.xlu0 %2864
        %2866 = vrot.lane.b32.xlu0 %v2849, 94
        %v2867 = vpop.permute.xlu0 %2866
        %2868 = vrot.lane.b32.xlu0 %v2859, 94
        %v2869 = vpop.permute.xlu0 %2868
        %2870 = vrot.lane.b32.xlu0 %v2850, 94
        %v2871 = vpop.permute.xlu0 %2870
        %2872 = vrot.lane.b32.xlu0 %v2860, 94
        %v2873 = vpop.permute.xlu0 %2872
        %2874 = vrot.lane.b32.xlu0 %v2851, 94
        %v2875 = vpop.permute.xlu0 %2874
        %2876 = vrot.lane.b32.xlu0 %v2861, 94
        %v2877 = vpop.permute.xlu0 %2876
        %2878 = vrot.lane.b32.xlu0 %v2852, 94
        %v2879 = vpop.permute.xlu0 %2878
        %v2880 = vsel %vm1896, %v2863, %v2865
        %v2881 = vsel %vm1896, %v2865, %v2867
        %v2882 = vsel %vm1896, %v2867, %v2869
        %v2883 = vsel %vm1896, %v2869, %v2871
        %v2884 = vsel %vm1896, %v2871, %v2873
        %v2885 = vsel %vm1896, %v2873, %v2875
        %v2886 = vsel %vm1896, %v2875, %v2877
        %v2887 = vsel %vm1896, %v2877, %v2879
        %2896 = vst [vmem:[#allocation3 + $0x440] sm:$0xf] %v2880
        %2897 = vst [vmem:[#allocation3 + $0x448] sm:$0xf] %v2881
        %2898 = vst [vmem:[#allocation3 + $0x450] sm:$0xf] %v2882
        %2899 = vst [vmem:[#allocation3 + $0x458] sm:$0xf] %v2883
        %2900 = vst [vmem:[#allocation3 + $0x460] sm:$0xf] %v2884
        %2901 = vst [vmem:[#allocation3 + $0x468] sm:$0xf] %v2885
        %2902 = vst [vmem:[#allocation3 + $0x470] sm:$0xf] %v2886
        %2903 = vst [vmem:[#allocation3 + $0x478] sm:$0xf] %v2887
        %v2904 = vld [vmem:[#allocation2 + $0x10] sm:$0xff]
        %v2905 = vld [vmem:[#allocation2 + $0x18] sm:$0xff]
        %v2906 = vld [vmem:[#allocation2 + $0x20] sm:$0xff]
        %v2907 = vld [vmem:[#allocation2 + $0x28] sm:$0xff]
        %v2908 = vmul.f32 %v833, %v844
        %v2909 = vmul.f32 %v2908, %v852
        %v2911 = vlaneseq
        %v2912 = vshrl.u32 %v2911, 7
        %v2913 = vsub.s32 0, %v2912
        %v2914 = vrot.slane %v2909, %v2913
        %v2915 = vlaneseq
        %v2916 = vshrl.u32 %v2915, 7
        %v2917 = vsub.s32 1, %v2916
        %v2918 = vrot.slane %v2909, %v2917
        %v2919 = vlaneseq
        %v2920 = vshrl.u32 %v2919, 7
        %v2921 = vsub.s32 2, %v2920
        %v2922 = vrot.slane %v2909, %v2921
        %v2923 = vlaneseq
        %v2924 = vshrl.u32 %v2923, 7
        %v2925 = vsub.s32 3, %v2924
        %v2926 = vrot.slane %v2909, %v2925
        %v2927 = vlaneseq
        %v2928 = vshrl.u32 %v2927, 7
        %v2929 = vsub.s32 4, %v2928
        %v2930 = vrot.slane %v2909, %v2929
        %v2931 = vlaneseq
        %v2932 = vshrl.u32 %v2931, 7
        %v2933 = vsub.s32 5, %v2932
        %v2934 = vrot.slane %v2909, %v2933
        %v2935 = vlaneseq
        %v2936 = vshrl.u32 %v2935, 7
        %v2937 = vsub.s32 6, %v2936
        %v2938 = vrot.slane %v2909, %v2937
        %v2939 = vlaneseq
        %v2940 = vshrl.u32 %v2939, 7
        %v2941 = vsub.s32 7, %v2940
        %v2942 = vrot.slane %v2909, %v2941
        %v2943 = vcombine.low %v2914, %v2918
        %v2944 = vcombine.low %v2922, %v2926
        %v2945 = vcombine.low %v2930, %v2934
        %v2946 = vcombine.low %v2938, %v2942
        %v2951 = vmul.f32 %v2904, %v2943
        %v2952 = vmul.f32 %v2905, %v2944
        %v2953 = vmul.f32 %v2906, %v2945
        %v2954 = vmul.f32 %v2907, %v2946
        %v2959 = vcombine.high %v2951, %v2951
        %v2960 = vcombine.high %v2952, %v2952
        %v2961 = vcombine.high %v2953, %v2953
        %v2962 = vcombine.high %v2954, %v2954
        %2967 = vst [vmem:[#allocation3 + $0x480] sm:$0xf] %v2951
        %2968 = vst [vmem:[#allocation3 + $0x488] sm:$0xf] %v2959
        %2969 = vst [vmem:[#allocation3 + $0x490] sm:$0xf] %v2952
        %2970 = vst [vmem:[#allocation3 + $0x498] sm:$0xf] %v2960
        %2971 = vst [vmem:[#allocation3 + $0x4a0] sm:$0xf] %v2953
        %2972 = vst [vmem:[#allocation3 + $0x4a8] sm:$0xf] %v2961
        %2973 = vst [vmem:[#allocation3 + $0x4b0] sm:$0xf] %v2954
        %2974 = vst [vmem:[#allocation3 + $0x4b8] sm:$0xf] %v2962
        %v2975 = vld [vmem:[#allocation2 + $0x10] sm:$0xff]
        %v2976 = vld [vmem:[#allocation2 + $0x18] sm:$0xff]
        %v2977 = vld [vmem:[#allocation2 + $0x20] sm:$0xff]
        %v2978 = vld [vmem:[#allocation2 + $0x28] sm:$0xff]
        %v2979 = vld [vmem:[#allocation2 + $0x30] sm:$0xf]
        %v2981 = vlaneseq
        %v2982 = vshrl.u32 %v2981, 7
        %v2983 = vsub.s32 0, %v2982
        %v2984 = vrot.slane %v2908, %v2983
        %v2985 = vlaneseq
        %v2986 = vshrl.u32 %v2985, 7
        %v2987 = vsub.s32 1, %v2986
        %v2988 = vrot.slane %v2908, %v2987
        %v2989 = vlaneseq
        %v2990 = vshrl.u32 %v2989, 7
        %v2991 = vsub.s32 2, %v2990
        %v2992 = vrot.slane %v2908, %v2991
        %v2993 = vlaneseq
        %v2994 = vshrl.u32 %v2993, 7
        %v2995 = vsub.s32 3, %v2994
        %v2996 = vrot.slane %v2908, %v2995
        %v2997 = vlaneseq
        %v2998 = vshrl.u32 %v2997, 7
        %v2999 = vsub.s32 4, %v2998
        %v3000 = vrot.slane %v2908, %v2999
        %v3001 = vlaneseq
        %v3002 = vshrl.u32 %v3001, 7
        %v3003 = vsub.s32 5, %v3002
        %v3004 = vrot.slane %v2908, %v3003
        %v3005 = vlaneseq
        %v3006 = vshrl.u32 %v3005, 7
        %v3007 = vsub.s32 6, %v3006
        %v3008 = vrot.slane %v2908, %v3007
        %v3009 = vlaneseq
        %v3010 = vshrl.u32 %v3009, 7
        %v3011 = vsub.s32 7, %v3010
        %v3012 = vrot.slane %v2908, %v3011
        %v3013 = vcombine.low %v2984, %v2988
        %v3014 = vcombine.low %v2992, %v2996
        %v3015 = vcombine.low %v3000, %v3004
        %v3016 = vcombine.low %v3008, %v3012
        %3017 = vrot.lane.b32.xlu0 %v3013, 1
        %v3018 = vpop.permute.xlu0 %3017
        %3019 = vrot.lane.b32.xlu0 %v3014, 1
        %v3020 = vpop.permute.xlu0 %3019
        %3021 = vrot.lane.b32.xlu0 %v3015, 1
        %v3022 = vpop.permute.xlu0 %3021
        %3023 = vrot.lane.b32.xlu0 %v3016, 1
        %v3024 = vpop.permute.xlu0 %3023
        %v3025 = vrot.slane %v3018, 4
        %v3026 = vrot.slane %v3020, 4
        %v3027 = vrot.slane %v3022, 4
        %v3028 = vrot.slane %v3024, 4
        %v3029 = vsel %vm978, %v3025, %v3018
        %v3030 = vsel %vm765, %v3025, %v3026
        %v3031 = vsel %vm978, %v3030, %v3020
        %v3032 = vsel %vm765, %v3026, %v3027
        %v3033 = vsel %vm978, %v3032, %v3022
        %v3034 = vsel %vm765, %v3027, %v3028
        %v3035 = vsel %vm978, %v3034, %v3024
        %v3041 = vmul.f32 %v2975, %v3029
        %v3042 = vmul.f32 %v2976, %v3031
        %v3043 = vmul.f32 %v2977, %v3033
        %v3044 = vmul.f32 %v2978, %v3035
        %v3045 = vmul.f32 %v2979, %v3028
        %v3051 = vcombine.high %v3041, %v3041
        %v3052 = vcombine.high %v3042, %v3042
        %v3053 = vcombine.high %v3043, %v3043
        %v3054 = vcombine.high %v3044, %v3044
        %3055 = vrot.lane.b32.xlu0 %v3041, 127
        %v3056 = vpop.permute.xlu0 %3055
        %3057 = vrot.lane.b32.xlu0 %v3051, 127
        %v3058 = vpop.permute.xlu0 %3057
        %3059 = vrot.lane.b32.xlu0 %v3042, 127
        %v3060 = vpop.permute.xlu0 %3059
        %3061 = vrot.lane.b32.xlu0 %v3052, 127
        %v3062 = vpop.permute.xlu0 %3061
        %3063 = vrot.lane.b32.xlu0 %v3043, 127
        %v3064 = vpop.permute.xlu0 %3063
        %3065 = vrot.lane.b32.xlu0 %v3053, 127
        %v3066 = vpop.permute.xlu0 %3065
        %3067 = vrot.lane.b32.xlu0 %v3044, 127
        %v3068 = vpop.permute.xlu0 %3067
        %3069 = vrot.lane.b32.xlu0 %v3054, 127
        %v3070 = vpop.permute.xlu0 %3069
        %3071 = vrot.lane.b32.xlu0 %v3045, 127
        %v3072 = vpop.permute.xlu0 %3071
        %v3073 = vsel %vm1023, %v3056, %v3058
        %v3074 = vsel %vm1023, %v3058, %v3060
        %v3075 = vsel %vm1023, %v3060, %v3062
        %v3076 = vsel %vm1023, %v3062, %v3064
        %v3077 = vsel %vm1023, %v3064, %v3066
        %v3078 = vsel %vm1023, %v3066, %v3068
        %v3079 = vsel %vm1023, %v3068, %v3070
        %v3080 = vsel %vm1023, %v3070, %v3072
        %3089 = vst [vmem:[#allocation3 + $0x4c0] sm:$0xf] %v3073
        %3090 = vst [vmem:[#allocation3 + $0x4c8] sm:$0xf] %v3074
        %3091 = vst [vmem:[#allocation3 + $0x4d0] sm:$0xf] %v3075
        %3092 = vst [vmem:[#allocation3 + $0x4d8] sm:$0xf] %v3076
        %3093 = vst [vmem:[#allocation3 + $0x4e0] sm:$0xf] %v3077
        %3094 = vst [vmem:[#allocation3 + $0x4e8] sm:$0xf] %v3078
        %3095 = vst [vmem:[#allocation3 + $0x4f0] sm:$0xf] %v3079
        %3096 = vst [vmem:[#allocation3 + $0x4f8] sm:$0xf] %v3080
        %v3097 = vld [vmem:[#allocation2 + $0x10] sm:$0xff]
        %v3098 = vld [vmem:[#allocation2 + $0x18] sm:$0xff]
        %v3099 = vld [vmem:[#allocation2 + $0x20] sm:$0xff]
        %v3100 = vld [vmem:[#allocation2 + $0x28] sm:$0xff]
        %v3101 = vld [vmem:[#allocation2 + $0x30] sm:$0xf]
        %v3102 = vmul.f32 %v2908, %v848
        %v3104 = vlaneseq
        %v3105 = vshrl.u32 %v3104, 7
        %v3106 = vsub.s32 0, %v3105
        %v3107 = vrot.slane %v3102, %v3106
        %v3108 = vlaneseq
        %v3109 = vshrl.u32 %v3108, 7
        %v3110 = vsub.s32 1, %v3109
        %v3111 = vrot.slane %v3102, %v3110
        %v3112 = vlaneseq
        %v3113 = vshrl.u32 %v3112, 7
        %v3114 = vsub.s32 2, %v3113
        %v3115 = vrot.slane %v3102, %v3114
        %v3116 = vlaneseq
        %v3117 = vshrl.u32 %v3116, 7
        %v3118 = vsub.s32 3, %v3117
        %v3119 = vrot.slane %v3102, %v3118
        %v3120 = vlaneseq
        %v3121 = vshrl.u32 %v3120, 7
        %v3122 = vsub.s32 4, %v3121
        %v3123 = vrot.slane %v3102, %v3122
        %v3124 = vlaneseq
        %v3125 = vshrl.u32 %v3124, 7
        %v3126 = vsub.s32 5, %v3125
        %v3127 = vrot.slane %v3102, %v3126
        %v3128 = vlaneseq
        %v3129 = vshrl.u32 %v3128, 7
        %v3130 = vsub.s32 6, %v3129
        %v3131 = vrot.slane %v3102, %v3130
        %v3132 = vlaneseq
        %v3133 = vshrl.u32 %v3132, 7
        %v3134 = vsub.s32 7, %v3133
        %v3135 = vrot.slane %v3102, %v3134
        %v3136 = vcombine.low %v3107, %v3111
        %v3137 = vcombine.low %v3115, %v3119
        %v3138 = vcombine.low %v3123, %v3127
        %v3139 = vcombine.low %v3131, %v3135
        %3140 = vrot.lane.b32.xlu0 %v3136, 2
        %v3141 = vpop.permute.xlu0 %3140
        %3142 = vrot.lane.b32.xlu0 %v3137, 2
        %v3143 = vpop.permute.xlu0 %3142
        %3144 = vrot.lane.b32.xlu0 %v3138, 2
        %v3145 = vpop.permute.xlu0 %3144
        %3146 = vrot.lane.b32.xlu0 %v3139, 2
        %v3147 = vpop.permute.xlu0 %3146
        %v3148 = vrot.slane %v3141, 4
        %v3149 = vrot.slane %v3143, 4
        %v3150 = vrot.slane %v3145, 4
        %v3151 = vrot.slane %v3147, 4
        %v3152 = vsel %vm1103, %v3148, %v3141
        %v3153 = vsel %vm765, %v3148, %v3149
        %v3154 = vsel %vm1103, %v3153, %v3143
        %v3155 = vsel %vm765, %v3149, %v3150
        %v3156 = vsel %vm1103, %v3155, %v3145
        %v3157 = vsel %vm765, %v3150, %v3151
        %v3158 = vsel %vm1103, %v3157, %v3147
        %v3164 = vmul.f32 %v3097, %v3152
        %v3165 = vmul.f32 %v3098, %v3154
        %v3166 = vmul.f32 %v3099, %v3156
        %v3167 = vmul.f32 %v3100, %v3158
        %v3168 = vmul.f32 %v3101, %v3151
        %v3174 = vcombine.high %v3164, %v3164
        %v3175 = vcombine.high %v3165, %v3165
        %v3176 = vcombine.high %v3166, %v3166
        %v3177 = vcombine.high %v3167, %v3167
        %3178 = vrot.lane.b32.xlu0 %v3164, 126
        %v3179 = vpop.permute.xlu0 %3178
        %3180 = vrot.lane.b32.xlu0 %v3174, 126
        %v3181 = vpop.permute.xlu0 %3180
        %3182 = vrot.lane.b32.xlu0 %v3165, 126
        %v3183 = vpop.permute.xlu0 %3182
        %3184 = vrot.lane.b32.xlu0 %v3175, 126
        %v3185 = vpop.permute.xlu0 %3184
        %3186 = vrot.lane.b32.xlu0 %v3166, 126
        %v3187 = vpop.permute.xlu0 %3186
        %3188 = vrot.lane.b32.xlu0 %v3176, 126
        %v3189 = vpop.permute.xlu0 %3188
        %3190 = vrot.lane.b32.xlu0 %v3167, 126
        %v3191 = vpop.permute.xlu0 %3190
        %3192 = vrot.lane.b32.xlu0 %v3177, 126
        %v3193 = vpop.permute.xlu0 %3192
        %3194 = vrot.lane.b32.xlu0 %v3168, 126
        %v3195 = vpop.permute.xlu0 %3194
        %v3196 = vsel %vm1148, %v3179, %v3181
        %v3197 = vsel %vm1148, %v3181, %v3183
        %v3198 = vsel %vm1148, %v3183, %v3185
        %v3199 = vsel %vm1148, %v3185, %v3187
        %v3200 = vsel %vm1148, %v3187, %v3189
        %v3201 = vsel %vm1148, %v3189, %v3191
        %v3202 = vsel %vm1148, %v3191, %v3193
        %v3203 = vsel %vm1148, %v3193, %v3195
        %3212 = vst [vmem:[#allocation3 + $0x500] sm:$0xf] %v3196
        %3213 = vst [vmem:[#allocation3 + $0x508] sm:$0xf] %v3197
        %3214 = vst [vmem:[#allocation3 + $0x510] sm:$0xf] %v3198
        %3215 = vst [vmem:[#allocation3 + $0x518] sm:$0xf] %v3199
        %3216 = vst [vmem:[#allocation3 + $0x520] sm:$0xf] %v3200
        %3217 = vst [vmem:[#allocation3 + $0x528] sm:$0xf] %v3201
        %3218 = vst [vmem:[#allocation3 + $0x530] sm:$0xf] %v3202
        %3219 = vst [vmem:[#allocation3 + $0x538] sm:$0xf] %v3203
        %v3220 = vld [vmem:[#allocation2 + $0x10] sm:$0xff]
        %v3221 = vld [vmem:[#allocation2 + $0x18] sm:$0xff]
        %v3222 = vld [vmem:[#allocation2 + $0x20] sm:$0xff]
        %v3223 = vld [vmem:[#allocation2 + $0x28] sm:$0xff]
        %v3224 = vld [vmem:[#allocation2 + $0x30] sm:$0xf]
        %v3225 = vmul.f32 %v833, %v852
        %v3227 = vlaneseq
        %v3228 = vshrl.u32 %v3227, 7
        %v3229 = vsub.s32 0, %v3228
        %v3230 = vrot.slane %v3225, %v3229
        %v3231 = vlaneseq
        %v3232 = vshrl.u32 %v3231, 7
        %v3233 = vsub.s32 1, %v3232
        %v3234 = vrot.slane %v3225, %v3233
        %v3235 = vlaneseq
        %v3236 = vshrl.u32 %v3235, 7
        %v3237 = vsub.s32 2, %v3236
        %v3238 = vrot.slane %v3225, %v3237
        %v3239 = vlaneseq
        %v3240 = vshrl.u32 %v3239, 7
        %v3241 = vsub.s32 3, %v3240
        %v3242 = vrot.slane %v3225, %v3241
        %v3243 = vlaneseq
        %v3244 = vshrl.u32 %v3243, 7
        %v3245 = vsub.s32 4, %v3244
        %v3246 = vrot.slane %v3225, %v3245
        %v3247 = vlaneseq
        %v3248 = vshrl.u32 %v3247, 7
        %v3249 = vsub.s32 5, %v3248
        %v3250 = vrot.slane %v3225, %v3249
        %v3251 = vlaneseq
        %v3252 = vshrl.u32 %v3251, 7
        %v3253 = vsub.s32 6, %v3252
        %v3254 = vrot.slane %v3225, %v3253
        %v3255 = vlaneseq
        %v3256 = vshrl.u32 %v3255, 7
        %v3257 = vsub.s32 7, %v3256
        %v3258 = vrot.slane %v3225, %v3257
        %v3259 = vcombine.low %v3230, %v3234
        %v3260 = vcombine.low %v3238, %v3242
        %v3261 = vcombine.low %v3246, %v3250
        %v3262 = vcombine.low %v3254, %v3258
        %3263 = vrot.lane.b32.xlu0 %v3259, 16
        %v3264 = vpop.permute.xlu0 %3263
        %3265 = vrot.lane.b32.xlu0 %v3260, 16
        %v3266 = vpop.permute.xlu0 %3265
        %3267 = vrot.lane.b32.xlu0 %v3261, 16
        %v3268 = vpop.permute.xlu0 %3267
        %3269 = vrot.lane.b32.xlu0 %v3262, 16
        %v3270 = vpop.permute.xlu0 %3269
        %v3271 = vrot.slane %v3264, 4
        %v3272 = vrot.slane %v3266, 4
        %v3273 = vrot.slane %v3268, 4
        %v3274 = vrot.slane %v3270, 4
        %v3275 = vsel %vm1228, %v3271, %v3264
        %v3276 = vsel %vm765, %v3271, %v3272
        %v3277 = vsel %vm1228, %v3276, %v3266
        %v3278 = vsel %vm765, %v3272, %v3273
        %v3279 = vsel %vm1228, %v3278, %v3268
        %v3280 = vsel %vm765, %v3273, %v3274
        %v3281 = vsel %vm1228, %v3280, %v3270
        %v3287 = vmul.f32 %v3220, %v3275
        %v3288 = vmul.f32 %v3221, %v3277
        %v3289 = vmul.f32 %v3222, %v3279
        %v3290 = vmul.f32 %v3223, %v3281
        %v3291 = vmul.f32 %v3224, %v3274
        %v3297 = vcombine.high %v3287, %v3287
        %v3298 = vcombine.high %v3288, %v3288
        %v3299 = vcombine.high %v3289, %v3289
        %v3300 = vcombine.high %v3290, %v3290
        %3301 = vrot.lane.b32.xlu0 %v3287, 112
        %v3302 = vpop.permute.xlu0 %3301
        %3303 = vrot.lane.b32.xlu0 %v3297, 112
        %v3304 = vpop.permute.xlu0 %3303
        %3305 = vrot.lane.b32.xlu0 %v3288, 112
        %v3306 = vpop.permute.xlu0 %3305
        %3307 = vrot.lane.b32.xlu0 %v3298, 112
        %v3308 = vpop.permute.xlu0 %3307
        %3309 = vrot.lane.b32.xlu0 %v3289, 112
        %v3310 = vpop.permute.xlu0 %3309
        %3311 = vrot.lane.b32.xlu0 %v3299, 112
        %v3312 = vpop.permute.xlu0 %3311
        %3313 = vrot.lane.b32.xlu0 %v3290, 112
        %v3314 = vpop.permute.xlu0 %3313
        %3315 = vrot.lane.b32.xlu0 %v3300, 112
        %v3316 = vpop.permute.xlu0 %3315
        %3317 = vrot.lane.b32.xlu0 %v3291, 112
        %v3318 = vpop.permute.xlu0 %3317
        %v3319 = vsel %vm1273, %v3302, %v3304
        %v3320 = vsel %vm1273, %v3304, %v3306
        %v3321 = vsel %vm1273, %v3306, %v3308
        %v3322 = vsel %vm1273, %v3308, %v3310
        %v3323 = vsel %vm1273, %v3310, %v3312
        %v3324 = vsel %vm1273, %v3312, %v3314
        %v3325 = vsel %vm1273, %v3314, %v3316
        %v3326 = vsel %vm1273, %v3316, %v3318
        %3335 = vst [vmem:[#allocation3 + $0x540] sm:$0xf] %v3319
        %3336 = vst [vmem:[#allocation3 + $0x548] sm:$0xf] %v3320
        %3337 = vst [vmem:[#allocation3 + $0x550] sm:$0xf] %v3321
        %3338 = vst [vmem:[#allocation3 + $0x558] sm:$0xf] %v3322
        %3339 = vst [vmem:[#allocation3 + $0x560] sm:$0xf] %v3323
        %3340 = vst [vmem:[#allocation3 + $0x568] sm:$0xf] %v3324
        %3341 = vst [vmem:[#allocation3 + $0x570] sm:$0xf] %v3325
        %3342 = vst [vmem:[#allocation3 + $0x578] sm:$0xf] %v3326
        %v3343 = vld [vmem:[#allocation2 + $0x10] sm:$0xff]
        %v3344 = vld [vmem:[#allocation2 + $0x18] sm:$0xff]
        %v3345 = vld [vmem:[#allocation2 + $0x20] sm:$0xff]
        %v3346 = vld [vmem:[#allocation2 + $0x28] sm:$0xff]
        %v3347 = vld [vmem:[#allocation2 + $0x30] sm:$0xf]
        %v3349 = vlaneseq
        %v3350 = vshrl.u32 %v3349, 7
        %v3351 = vsub.s32 0, %v3350
        %v3352 = vrot.slane %v833, %v3351
        %v3353 = vlaneseq
        %v3354 = vshrl.u32 %v3353, 7
        %v3355 = vsub.s32 1, %v3354
        %v3356 = vrot.slane %v833, %v3355
        %v3357 = vlaneseq
        %v3358 = vshrl.u32 %v3357, 7
        %v3359 = vsub.s32 2, %v3358
        %v3360 = vrot.slane %v833, %v3359
        %v3361 = vlaneseq
        %v3362 = vshrl.u32 %v3361, 7
        %v3363 = vsub.s32 3, %v3362
        %v3364 = vrot.slane %v833, %v3363
        %v3365 = vlaneseq
        %v3366 = vshrl.u32 %v3365, 7
        %v3367 = vsub.s32 4, %v3366
        %v3368 = vrot.slane %v833, %v3367
        %v3369 = vlaneseq
        %v3370 = vshrl.u32 %v3369, 7
        %v3371 = vsub.s32 5, %v3370
        %v3372 = vrot.slane %v833, %v3371
        %v3373 = vlaneseq
        %v3374 = vshrl.u32 %v3373, 7
        %v3375 = vsub.s32 6, %v3374
        %v3376 = vrot.slane %v833, %v3375
        %v3377 = vlaneseq
        %v3378 = vshrl.u32 %v3377, 7
        %v3379 = vsub.s32 7, %v3378
        %v3380 = vrot.slane %v833, %v3379
        %v3381 = vcombine.low %v3352, %v3356
        %v3382 = vcombine.low %v3360, %v3364
        %v3383 = vcombine.low %v3368, %v3372
        %v3384 = vcombine.low %v3376, %v3380
        %3385 = vrot.lane.b32.xlu0 %v3381, 17
        %v3386 = vpop.permute.xlu0 %3385
        %3387 = vrot.lane.b32.xlu0 %v3382, 17
        %v3388 = vpop.permute.xlu0 %3387
        %3389 = vrot.lane.b32.xlu0 %v3383, 17
        %v3390 = vpop.permute.xlu0 %3389
        %3391 = vrot.lane.b32.xlu0 %v3384, 17
        %v3392 = vpop.permute.xlu0 %3391
        %v3393 = vrot.slane %v3386, 4
        %v3394 = vrot.slane %v3388, 4
        %v3395 = vrot.slane %v3390, 4
        %v3396 = vrot.slane %v3392, 4
        %v3397 = vsel %vm767, %v3393, %v3386
        %v3398 = vsel %vm765, %v3393, %v3394
        %v3399 = vsel %vm767, %v3398, %v3388
        %v3400 = vsel %vm765, %v3394, %v3395
        %v3401 = vsel %vm767, %v3400, %v3390
        %v3402 = vsel %vm765, %v3395, %v3396
        %v3403 = vsel %vm767, %v3402, %v3392
        %v3409 = vmul.f32 %v3343, %v3397
        %v3410 = vmul.f32 %v3344, %v3399
        %v3411 = vmul.f32 %v3345, %v3401
        %v3412 = vmul.f32 %v3346, %v3403
        %v3413 = vmul.f32 %v3347, %v3396
        %v3419 = vcombine.high %v3409, %v3409
        %v3420 = vcombine.high %v3410, %v3410
        %v3421 = vcombine.high %v3411, %v3411
        %v3422 = vcombine.high %v3412, %v3412
        %3423 = vrot.lane.b32.xlu0 %v3409, 111
        %v3424 = vpop.permute.xlu0 %3423
        %3425 = vrot.lane.b32.xlu0 %v3419, 111
        %v3426 = vpop.permute.xlu0 %3425
        %3427 = vrot.lane.b32.xlu0 %v3410, 111
        %v3428 = vpop.permute.xlu0 %3427
        %3429 = vrot.lane.b32.xlu0 %v3420, 111
        %v3430 = vpop.permute.xlu0 %3429
        %3431 = vrot.lane.b32.xlu0 %v3411, 111
        %v3432 = vpop.permute.xlu0 %3431
        %3433 = vrot.lane.b32.xlu0 %v3421, 111
        %v3434 = vpop.permute.xlu0 %3433
        %3435 = vrot.lane.b32.xlu0 %v3412, 111
        %v3436 = vpop.permute.xlu0 %3435
        %3437 = vrot.lane.b32.xlu0 %v3422, 111
        %v3438 = vpop.permute.xlu0 %3437
        %3439 = vrot.lane.b32.xlu0 %v3413, 111
        %v3440 = vpop.permute.xlu0 %3439
        %v3441 = vsel %vm1396, %v3424, %v3426
        %v3442 = vsel %vm1396, %v3426, %v3428
        %v3443 = vsel %vm1396, %v3428, %v3430
        %v3444 = vsel %vm1396, %v3430, %v3432
        %v3445 = vsel %vm1396, %v3432, %v3434
        %v3446 = vsel %vm1396, %v3434, %v3436
        %v3447 = vsel %vm1396, %v3436, %v3438
        %v3448 = vsel %vm1396, %v3438, %v3440
        %3457 = vst [vmem:[#allocation3 + $0x580] sm:$0xf] %v3441
        %3458 = vst [vmem:[#allocation3 + $0x588] sm:$0xf] %v3442
        %3459 = vst [vmem:[#allocation3 + $0x590] sm:$0xf] %v3443
        %3460 = vst [vmem:[#allocation3 + $0x598] sm:$0xf] %v3444
        %3461 = vst [vmem:[#allocation3 + $0x5a0] sm:$0xf] %v3445
        %3462 = vst [vmem:[#allocation3 + $0x5a8] sm:$0xf] %v3446
        %3463 = vst [vmem:[#allocation3 + $0x5b0] sm:$0xf] %v3447
        %3464 = vst [vmem:[#allocation3 + $0x5b8] sm:$0xf] %v3448
        %v3465 = vld [vmem:[#allocation2 + $0x10] sm:$0xff]
        %v3466 = vld [vmem:[#allocation2 + $0x18] sm:$0xff]
        %v3467 = vld [vmem:[#allocation2 + $0x20] sm:$0xff]
        %v3468 = vld [vmem:[#allocation2 + $0x28] sm:$0xff]
        %v3469 = vld [vmem:[#allocation2 + $0x30] sm:$0xf]
        %v3470 = vmul.f32 %v833, %v848
        %v3472 = vlaneseq
        %v3473 = vshrl.u32 %v3472, 7
        %v3474 = vsub.s32 0, %v3473
        %v3475 = vrot.slane %v3470, %v3474
        %v3476 = vlaneseq
        %v3477 = vshrl.u32 %v3476, 7
        %v3478 = vsub.s32 1, %v3477
        %v3479 = vrot.slane %v3470, %v3478
        %v3480 = vlaneseq
        %v3481 = vshrl.u32 %v3480, 7
        %v3482 = vsub.s32 2, %v3481
        %v3483 = vrot.slane %v3470, %v3482
        %v3484 = vlaneseq
        %v3485 = vshrl.u32 %v3484, 7
        %v3486 = vsub.s32 3, %v3485
        %v3487 = vrot.slane %v3470, %v3486
        %v3488 = vlaneseq
        %v3489 = vshrl.u32 %v3488, 7
        %v3490 = vsub.s32 4, %v3489
        %v3491 = vrot.slane %v3470, %v3490
        %v3492 = vlaneseq
        %v3493 = vshrl.u32 %v3492, 7
        %v3494 = vsub.s32 5, %v3493
        %v3495 = vrot.slane %v3470, %v3494
        %v3496 = vlaneseq
        %v3497 = vshrl.u32 %v3496, 7
        %v3498 = vsub.s32 6, %v3497
        %v3499 = vrot.slane %v3470, %v3498
        %v3500 = vlaneseq
        %v3501 = vshrl.u32 %v3500, 7
        %v3502 = vsub.s32 7, %v3501
        %v3503 = vrot.slane %v3470, %v3502
        %v3504 = vcombine.low %v3475, %v3479
        %v3505 = vcombine.low %v3483, %v3487
        %v3506 = vcombine.low %v3491, %v3495
        %v3507 = vcombine.low %v3499, %v3503
        %3508 = vrot.lane.b32.xlu0 %v3504, 18
        %v3509 = vpop.permute.xlu0 %3508
        %3510 = vrot.lane.b32.xlu0 %v3505, 18
        %v3511 = vpop.permute.xlu0 %3510
        %3512 = vrot.lane.b32.xlu0 %v3506, 18
        %v3513 = vpop.permute.xlu0 %3512
        %3514 = vrot.lane.b32.xlu0 %v3507, 18
        %v3515 = vpop.permute.xlu0 %3514
        %v3516 = vrot.slane %v3509, 4
        %v3517 = vrot.slane %v3511, 4
        %v3518 = vrot.slane %v3513, 4
        %v3519 = vrot.slane %v3515, 4
        %v3520 = vsel %vm1476, %v3516, %v3509
        %v3521 = vsel %vm765, %v3516, %v3517
        %v3522 = vsel %vm1476, %v3521, %v3511
        %v3523 = vsel %vm765, %v3517, %v3518
        %v3524 = vsel %vm1476, %v3523, %v3513
        %v3525 = vsel %vm765, %v3518, %v3519
        %v3526 = vsel %vm1476, %v3525, %v3515
        %v3532 = vmul.f32 %v3465, %v3520
        %v3533 = vmul.f32 %v3466, %v3522
        %v3534 = vmul.f32 %v3467, %v3524
        %v3535 = vmul.f32 %v3468, %v3526
        %v3536 = vmul.f32 %v3469, %v3519
        %v3542 = vcombine.high %v3532, %v3532
        %v3543 = vcombine.high %v3533, %v3533
        %v3544 = vcombine.high %v3534, %v3534
        %v3545 = vcombine.high %v3535, %v3535
        %3546 = vrot.lane.b32.xlu0 %v3532, 110
        %v3547 = vpop.permute.xlu0 %3546
        %3548 = vrot.lane.b32.xlu0 %v3542, 110
        %v3549 = vpop.permute.xlu0 %3548
        %3550 = vrot.lane.b32.xlu0 %v3533, 110
        %v3551 = vpop.permute.xlu0 %3550
        %3552 = vrot.lane.b32.xlu0 %v3543, 110
        %v3553 = vpop.permute.xlu0 %3552
        %3554 = vrot.lane.b32.xlu0 %v3534, 110
        %v3555 = vpop.permute.xlu0 %3554
        %3556 = vrot.lane.b32.xlu0 %v3544, 110
        %v3557 = vpop.permute.xlu0 %3556
        %3558 = vrot.lane.b32.xlu0 %v3535, 110
        %v3559 = vpop.permute.xlu0 %3558
        %3560 = vrot.lane.b32.xlu0 %v3545, 110
        %v3561 = vpop.permute.xlu0 %3560
        %3562 = vrot.lane.b32.xlu0 %v3536, 110
        %v3563 = vpop.permute.xlu0 %3562
        %v3564 = vsel %vm1521, %v3547, %v3549
        %v3565 = vsel %vm1521, %v3549, %v3551
        %v3566 = vsel %vm1521, %v3551, %v3553
        %v3567 = vsel %vm1521, %v3553, %v3555
        %v3568 = vsel %vm1521, %v3555, %v3557
        %v3569 = vsel %vm1521, %v3557, %v3559
        %v3570 = vsel %vm1521, %v3559, %v3561
        %v3571 = vsel %vm1521, %v3561, %v3563
        %3580 = vst [vmem:[#allocation3 + $0x5c0] sm:$0xf] %v3564
        %3581 = vst [vmem:[#allocation3 + $0x5c8] sm:$0xf] %v3565
        %3582 = vst [vmem:[#allocation3 + $0x5d0] sm:$0xf] %v3566
        %3583 = vst [vmem:[#allocation3 + $0x5d8] sm:$0xf] %v3567
        %3584 = vst [vmem:[#allocation3 + $0x5e0] sm:$0xf] %v3568
        %3585 = vst [vmem:[#allocation3 + $0x5e8] sm:$0xf] %v3569
        %3586 = vst [vmem:[#allocation3 + $0x5f0] sm:$0xf] %v3570
        %3587 = vst [vmem:[#allocation3 + $0x5f8] sm:$0xf] %v3571
        %v3588 = vld [vmem:[#allocation2 + $0x10] sm:$0xff]
        %v3589 = vld [vmem:[#allocation2 + $0x18] sm:$0xff]
        %v3590 = vld [vmem:[#allocation2 + $0x20] sm:$0xff]
        %v3591 = vld [vmem:[#allocation2 + $0x28] sm:$0xff]
        %v3592 = vld [vmem:[#allocation2 + $0x30] sm:$0xf]
        %v3593 = vmul.f32 %v833, %v840
        %v3594 = vmul.f32 %v3593, %v852
        %v3596 = vlaneseq
        %v3597 = vshrl.u32 %v3596, 7
        %v3598 = vsub.s32 0, %v3597
        %v3599 = vrot.slane %v3594, %v3598
        %v3600 = vlaneseq
        %v3601 = vshrl.u32 %v3600, 7
        %v3602 = vsub.s32 1, %v3601
        %v3603 = vrot.slane %v3594, %v3602
        %v3604 = vlaneseq
        %v3605 = vshrl.u32 %v3604, 7
        %v3606 = vsub.s32 2, %v3605
        %v3607 = vrot.slane %v3594, %v3606
        %v3608 = vlaneseq
        %v3609 = vshrl.u32 %v3608, 7
        %v3610 = vsub.s32 3, %v3609
        %v3611 = vrot.slane %v3594, %v3610
        %v3612 = vlaneseq
        %v3613 = vshrl.u32 %v3612, 7
        %v3614 = vsub.s32 4, %v3613
        %v3615 = vrot.slane %v3594, %v3614
        %v3616 = vlaneseq
        %v3617 = vshrl.u32 %v3616, 7
        %v3618 = vsub.s32 5, %v3617
        %v3619 = vrot.slane %v3594, %v3618
        %v3620 = vlaneseq
        %v3621 = vshrl.u32 %v3620, 7
        %v3622 = vsub.s32 6, %v3621
        %v3623 = vrot.slane %v3594, %v3622
        %v3624 = vlaneseq
        %v3625 = vshrl.u32 %v3624, 7
        %v3626 = vsub.s32 7, %v3625
        %v3627 = vrot.slane %v3594, %v3626
        %v3628 = vcombine.low %v3599, %v3603
        %v3629 = vcombine.low %v3607, %v3611
        %v3630 = vcombine.low %v3615, %v3619
        %v3631 = vcombine.low %v3623, %v3627
        %3632 = vrot.lane.b32.xlu0 %v3628, 32
        %v3633 = vpop.permute.xlu0 %3632
        %3634 = vrot.lane.b32.xlu0 %v3629, 32
        %v3635 = vpop.permute.xlu0 %3634
        %3636 = vrot.lane.b32.xlu0 %v3630, 32
        %v3637 = vpop.permute.xlu0 %3636
        %3638 = vrot.lane.b32.xlu0 %v3631, 32
        %v3639 = vpop.permute.xlu0 %3638
        %v3640 = vrot.slane %v3633, 4
        %v3641 = vrot.slane %v3635, 4
        %v3642 = vrot.slane %v3637, 4
        %v3643 = vrot.slane %v3639, 4
        %v3644 = vsel %vm1602, %v3640, %v3633
        %v3645 = vsel %vm765, %v3640, %v3641
        %v3646 = vsel %vm1602, %v3645, %v3635
        %v3647 = vsel %vm765, %v3641, %v3642
        %v3648 = vsel %vm1602, %v3647, %v3637
        %v3649 = vsel %vm765, %v3642, %v3643
        %v3650 = vsel %vm1602, %v3649, %v3639
        %v3656 = vmul.f32 %v3588, %v3644
        %v3657 = vmul.f32 %v3589, %v3646
        %v3658 = vmul.f32 %v3590, %v3648
        %v3659 = vmul.f32 %v3591, %v3650
        %v3660 = vmul.f32 %v3592, %v3643
        %v3666 = vcombine.high %v3656, %v3656
        %v3667 = vcombine.high %v3657, %v3657
        %v3668 = vcombine.high %v3658, %v3658
        %v3669 = vcombine.high %v3659, %v3659
        %3670 = vrot.lane.b32.xlu0 %v3656, 96
        %v3671 = vpop.permute.xlu0 %3670
        %3672 = vrot.lane.b32.xlu0 %v3666, 96
        %v3673 = vpop.permute.xlu0 %3672
        %3674 = vrot.lane.b32.xlu0 %v3657, 96
        %v3675 = vpop.permute.xlu0 %3674
        %3676 = vrot.lane.b32.xlu0 %v3667, 96
        %v3677 = vpop.permute.xlu0 %3676
        %3678 = vrot.lane.b32.xlu0 %v3658, 96
        %v3679 = vpop.permute.xlu0 %3678
        %3680 = vrot.lane.b32.xlu0 %v3668, 96
        %v3681 = vpop.permute.xlu0 %3680
        %3682 = vrot.lane.b32.xlu0 %v3659, 96
        %v3683 = vpop.permute.xlu0 %3682
        %3684 = vrot.lane.b32.xlu0 %v3669, 96
        %v3685 = vpop.permute.xlu0 %3684
        %3686 = vrot.lane.b32.xlu0 %v3660, 96
        %v3687 = vpop.permute.xlu0 %3686
        %v3688 = vsel %vm1647, %v3671, %v3673
        %v3689 = vsel %vm1647, %v3673, %v3675
        %v3690 = vsel %vm1647, %v3675, %v3677
        %v3691 = vsel %vm1647, %v3677, %v3679
        %v3692 = vsel %vm1647, %v3679, %v3681
        %v3693 = vsel %vm1647, %v3681, %v3683
        %v3694 = vsel %vm1647, %v3683, %v3685
        %v3695 = vsel %vm1647, %v3685, %v3687
        %3704 = vst [vmem:[#allocation3 + $0x600] sm:$0xf] %v3688
        %3705 = vst [vmem:[#allocation3 + $0x608] sm:$0xf] %v3689
        %3706 = vst [vmem:[#allocation3 + $0x610] sm:$0xf] %v3690
        %3707 = vst [vmem:[#allocation3 + $0x618] sm:$0xf] %v3691
        %3708 = vst [vmem:[#allocation3 + $0x620] sm:$0xf] %v3692
        %3709 = vst [vmem:[#allocation3 + $0x628] sm:$0xf] %v3693
        %3710 = vst [vmem:[#allocation3 + $0x630] sm:$0xf] %v3694
        %3711 = vst [vmem:[#allocation3 + $0x638] sm:$0xf] %v3695
        %v3712 = vld [vmem:[#allocation2 + $0x10] sm:$0xff]
        %v3713 = vld [vmem:[#allocation2 + $0x18] sm:$0xff]
        %v3714 = vld [vmem:[#allocation2 + $0x20] sm:$0xff]
        %v3715 = vld [vmem:[#allocation2 + $0x28] sm:$0xff]
        %v3716 = vld [vmem:[#allocation2 + $0x30] sm:$0xf]
        %v3718 = vlaneseq
        %v3719 = vshrl.u32 %v3718, 7
        %v3720 = vsub.s32 0, %v3719
        %v3721 = vrot.slane %v3593, %v3720
        %v3722 = vlaneseq
        %v3723 = vshrl.u32 %v3722, 7
        %v3724 = vsub.s32 1, %v3723
        %v3725 = vrot.slane %v3593, %v3724
        %v3726 = vlaneseq
        %v3727 = vshrl.u32 %v3726, 7
        %v3728 = vsub.s32 2, %v3727
        %v3729 = vrot.slane %v3593, %v3728
        %v3730 = vlaneseq
        %v3731 = vshrl.u32 %v3730, 7
        %v3732 = vsub.s32 3, %v3731
        %v3733 = vrot.slane %v3593, %v3732
        %v3734 = vlaneseq
        %v3735 = vshrl.u32 %v3734, 7
        %v3736 = vsub.s32 4, %v3735
        %v3737 = vrot.slane %v3593, %v3736
        %v3738 = vlaneseq
        %v3739 = vshrl.u32 %v3738, 7
        %v3740 = vsub.s32 5, %v3739
        %v3741 = vrot.slane %v3593, %v3740
        %v3742 = vlaneseq
        %v3743 = vshrl.u32 %v3742, 7
        %v3744 = vsub.s32 6, %v3743
        %v3745 = vrot.slane %v3593, %v3744
        %v3746 = vlaneseq
        %v3747 = vshrl.u32 %v3746, 7
        %v3748 = vsub.s32 7, %v3747
        %v3749 = vrot.slane %v3593, %v3748
        %v3750 = vcombine.low %v3721, %v3725
        %v3751 = vcombine.low %v3729, %v3733
        %v3752 = vcombine.low %v3737, %v3741
        %v3753 = vcombine.low %v3745, %v3749
        %3754 = vrot.lane.b32.xlu0 %v3750, 33
        %v3755 = vpop.permute.xlu0 %3754
        %3756 = vrot.lane.b32.xlu0 %v3751, 33
        %v3757 = vpop.permute.xlu0 %3756
        %3758 = vrot.lane.b32.xlu0 %v3752, 33
        %v3759 = vpop.permute.xlu0 %3758
        %3760 = vrot.lane.b32.xlu0 %v3753, 33
        %v3761 = vpop.permute.xlu0 %3760
        %v3762 = vrot.slane %v3755, 4
        %v3763 = vrot.slane %v3757, 4
        %v3764 = vrot.slane %v3759, 4
        %v3765 = vrot.slane %v3761, 4
        %v3766 = vsel %vm1726, %v3762, %v3755
        %v3767 = vsel %vm765, %v3762, %v3763
        %v3768 = vsel %vm1726, %v3767, %v3757
        %v3769 = vsel %vm765, %v3763, %v3764
        %v3770 = vsel %vm1726, %v3769, %v3759
        %v3771 = vsel %vm765, %v3764, %v3765
        %v3772 = vsel %vm1726, %v3771, %v3761
        %v3778 = vmul.f32 %v3712, %v3766
        %v3779 = vmul.f32 %v3713, %v3768
        %v3780 = vmul.f32 %v3714, %v3770
        %v3781 = vmul.f32 %v3715, %v3772
        %v3782 = vmul.f32 %v3716, %v3765
        %v3788 = vcombine.high %v3778, %v3778
        %v3789 = vcombine.high %v3779, %v3779
        %v3790 = vcombine.high %v3780, %v3780
        %v3791 = vcombine.high %v3781, %v3781
        %3792 = vrot.lane.b32.xlu0 %v3778, 95
        %v3793 = vpop.permute.xlu0 %3792
        %3794 = vrot.lane.b32.xlu0 %v3788, 95
        %v3795 = vpop.permute.xlu0 %3794
        %3796 = vrot.lane.b32.xlu0 %v3779, 95
        %v3797 = vpop.permute.xlu0 %3796
        %3798 = vrot.lane.b32.xlu0 %v3789, 95
        %v3799 = vpop.permute.xlu0 %3798
        %3800 = vrot.lane.b32.xlu0 %v3780, 95
        %v3801 = vpop.permute.xlu0 %3800
        %3802 = vrot.lane.b32.xlu0 %v3790, 95
        %v3803 = vpop.permute.xlu0 %3802
        %3804 = vrot.lane.b32.xlu0 %v3781, 95
        %v3805 = vpop.permute.xlu0 %3804
        %3806 = vrot.lane.b32.xlu0 %v3791, 95
        %v3807 = vpop.permute.xlu0 %3806
        %3808 = vrot.lane.b32.xlu0 %v3782, 95
        %v3809 = vpop.permute.xlu0 %3808
        %v3810 = vsel %vm1771, %v3793, %v3795
        %v3811 = vsel %vm1771, %v3795, %v3797
        %v3812 = vsel %vm1771, %v3797, %v3799
        %v3813 = vsel %vm1771, %v3799, %v3801
        %v3814 = vsel %vm1771, %v3801, %v3803
        %v3815 = vsel %vm1771, %v3803, %v3805
        %v3816 = vsel %vm1771, %v3805, %v3807
        %v3817 = vsel %vm1771, %v3807, %v3809
        %3826 = vst [vmem:[#allocation3 + $0x640] sm:$0xf] %v3810
        %3827 = vst [vmem:[#allocation3 + $0x648] sm:$0xf] %v3811
        %3828 = vst [vmem:[#allocation3 + $0x650] sm:$0xf] %v3812
        %3829 = vst [vmem:[#allocation3 + $0x658] sm:$0xf] %v3813
        %3830 = vst [vmem:[#allocation3 + $0x660] sm:$0xf] %v3814
        %3831 = vst [vmem:[#allocation3 + $0x668] sm:$0xf] %v3815
        %3832 = vst [vmem:[#allocation3 + $0x670] sm:$0xf] %v3816
        %3833 = vst [vmem:[#allocation3 + $0x678] sm:$0xf] %v3817
        %v3834 = vld [vmem:[#allocation2 + $0x10] sm:$0xff]
        %v3835 = vld [vmem:[#allocation2 + $0x18] sm:$0xff]
        %v3836 = vld [vmem:[#allocation2 + $0x20] sm:$0xff]
        %v3837 = vld [vmem:[#allocation2 + $0x28] sm:$0xff]
        %v3838 = vld [vmem:[#allocation2 + $0x30] sm:$0xf]
        %v3839 = vmul.f32 %v3593, %v848
        %v3841 = vlaneseq
        %v3842 = vshrl.u32 %v3841, 7
        %v3843 = vsub.s32 0, %v3842
        %v3844 = vrot.slane %v3839, %v3843
        %v3845 = vlaneseq
        %v3846 = vshrl.u32 %v3845, 7
        %v3847 = vsub.s32 1, %v3846
        %v3848 = vrot.slane %v3839, %v3847
        %v3849 = vlaneseq
        %v3850 = vshrl.u32 %v3849, 7
        %v3851 = vsub.s32 2, %v3850
        %v3852 = vrot.slane %v3839, %v3851
        %v3853 = vlaneseq
        %v3854 = vshrl.u32 %v3853, 7
        %v3855 = vsub.s32 3, %v3854
        %v3856 = vrot.slane %v3839, %v3855
        %v3857 = vlaneseq
        %v3858 = vshrl.u32 %v3857, 7
        %v3859 = vsub.s32 4, %v3858
        %v3860 = vrot.slane %v3839, %v3859
        %v3861 = vlaneseq
        %v3862 = vshrl.u32 %v3861, 7
        %v3863 = vsub.s32 5, %v3862
        %v3864 = vrot.slane %v3839, %v3863
        %v3865 = vlaneseq
        %v3866 = vshrl.u32 %v3865, 7
        %v3867 = vsub.s32 6, %v3866
        %v3868 = vrot.slane %v3839, %v3867
        %v3869 = vlaneseq
        %v3870 = vshrl.u32 %v3869, 7
        %v3871 = vsub.s32 7, %v3870
        %v3872 = vrot.slane %v3839, %v3871
        %v3873 = vcombine.low %v3844, %v3848
        %v3874 = vcombine.low %v3852, %v3856
        %v3875 = vcombine.low %v3860, %v3864
        %v3876 = vcombine.low %v3868, %v3872
        %3877 = vrot.lane.b32.xlu0 %v3873, 34
        %v3878 = vpop.permute.xlu0 %3877
        %3879 = vrot.lane.b32.xlu0 %v3874, 34
        %v3880 = vpop.permute.xlu0 %3879
        %3881 = vrot.lane.b32.xlu0 %v3875, 34
        %v3882 = vpop.permute.xlu0 %3881
        %3883 = vrot.lane.b32.xlu0 %v3876, 34
        %v3884 = vpop.permute.xlu0 %3883
        %v3885 = vrot.slane %v3878, 4
        %v3886 = vrot.slane %v3880, 4
        %v3887 = vrot.slane %v3882, 4
        %v3888 = vrot.slane %v3884, 4
        %v3889 = vsel %vm1851, %v3885, %v3878
        %v3890 = vsel %vm765, %v3885, %v3886
        %v3891 = vsel %vm1851, %v3890, %v3880
        %v3892 = vsel %vm765, %v3886, %v3887
        %v3893 = vsel %vm1851, %v3892, %v3882
        %v3894 = vsel %vm765, %v3887, %v3888
        %v3895 = vsel %vm1851, %v3894, %v3884
        %v3901 = vmul.f32 %v3834, %v3889
        %v3902 = vmul.f32 %v3835, %v3891
        %v3903 = vmul.f32 %v3836, %v3893
        %v3904 = vmul.f32 %v3837, %v3895
        %v3905 = vmul.f32 %v3838, %v3888
        %v3911 = vcombine.high %v3901, %v3901
        %v3912 = vcombine.high %v3902, %v3902
        %v3913 = vcombine.high %v3903, %v3903
        %v3914 = vcombine.high %v3904, %v3904
        %3915 = vrot.lane.b32.xlu0 %v3901, 94
        %v3916 = vpop.permute.xlu0 %3915
        %3917 = vrot.lane.b32.xlu0 %v3911, 94
        %v3918 = vpop.permute.xlu0 %3917
        %3919 = vrot.lane.b32.xlu0 %v3902, 94
        %v3920 = vpop.permute.xlu0 %3919
        %3921 = vrot.lane.b32.xlu0 %v3912, 94
        %v3922 = vpop.permute.xlu0 %3921
        %3923 = vrot.lane.b32.xlu0 %v3903, 94
        %v3924 = vpop.permute.xlu0 %3923
        %3925 = vrot.lane.b32.xlu0 %v3913, 94
        %v3926 = vpop.permute.xlu0 %3925
        %3927 = vrot.lane.b32.xlu0 %v3904, 94
        %v3928 = vpop.permute.xlu0 %3927
        %3929 = vrot.lane.b32.xlu0 %v3914, 94
        %v3930 = vpop.permute.xlu0 %3929
        %3931 = vrot.lane.b32.xlu0 %v3905, 94
        %v3932 = vpop.permute.xlu0 %3931
        %v3933 = vsel %vm1896, %v3916, %v3918
        %v3934 = vsel %vm1896, %v3918, %v3920
        %v3935 = vsel %vm1896, %v3920, %v3922
        %v3936 = vsel %vm1896, %v3922, %v3924
        %v3937 = vsel %vm1896, %v3924, %v3926
        %v3938 = vsel %vm1896, %v3926, %v3928
        %v3939 = vsel %vm1896, %v3928, %v3930
        %v3940 = vsel %vm1896, %v3930, %v3932
        %3949 = vst [vmem:[#allocation3 + $0x680] sm:$0xf] %v3933
        %3950 = vst [vmem:[#allocation3 + $0x688] sm:$0xf] %v3934
        %3951 = vst [vmem:[#allocation3 + $0x690] sm:$0xf] %v3935
        %3952 = vst [vmem:[#allocation3 + $0x698] sm:$0xf] %v3936
        %3953 = vst [vmem:[#allocation3 + $0x6a0] sm:$0xf] %v3937
        %3954 = vst [vmem:[#allocation3 + $0x6a8] sm:$0xf] %v3938
        %3955 = vst [vmem:[#allocation3 + $0x6b0] sm:$0xf] %v3939
        %3956 = vst [vmem:[#allocation3 + $0x6b8] sm:$0xf] %v3940
        %v3957 = vld [vmem:[#allocation10] sm:$0xff]
        %v3958 = vld [vmem:[#allocation10 + $0x8] sm:$0xff]
        %v3959 = vld [vmem:[#allocation3] sm:$0xff]
        %v3960 = vld [vmem:[#allocation3 + $0x8] sm:$0xff]
        %v3961 = vld [vmem:[#allocation3 + $0x10] sm:$0xff]
        %v3962 = vld [vmem:[#allocation3 + $0x18] sm:$0xff]
        %v3963 = vld [vmem:[#allocation3 + $0x20] sm:$0xff]
        %v3964 = vld [vmem:[#allocation3 + $0x28] sm:$0xff]
        %v3965 = vld [vmem:[#allocation3 + $0x30] sm:$0xff]
        %v3966 = vld [vmem:[#allocation3 + $0x38] sm:$0xff]
        %v3967 = vld [vmem:[#allocation3 + $0x40] sm:$0xff]
        %v3968 = vld [vmem:[#allocation3 + $0x48] sm:$0xff]
        %v3969 = vld [vmem:[#allocation3 + $0x50] sm:$0xff]
        %v3970 = vld [vmem:[#allocation3 + $0x58] sm:$0xff]
        %v3971 = vld [vmem:[#allocation3 + $0x60] sm:$0xff]
        %v3972 = vld [vmem:[#allocation3 + $0x68] sm:$0xff]
        %v3973 = vld [vmem:[#allocation3 + $0x70] sm:$0xff]
        %v3974 = vld [vmem:[#allocation3 + $0x78] sm:$0xff]
        %v3975 = vld [vmem:[#allocation3 + $0x80] sm:$0xff]
        %v3976 = vld [vmem:[#allocation3 + $0x88] sm:$0xff]
        %v3977 = vld [vmem:[#allocation3 + $0x90] sm:$0xff]
        %v3978 = vld [vmem:[#allocation3 + $0x98] sm:$0xff]
        %v3979 = vld [vmem:[#allocation3 + $0xa0] sm:$0xff]
        %v3980 = vld [vmem:[#allocation3 + $0xa8] sm:$0xff]
        %v3981 = vld [vmem:[#allocation3 + $0xb0] sm:$0xff]
        %v3982 = vld [vmem:[#allocation3 + $0xb8] sm:$0xff]
        %v3983 = vld [vmem:[#allocation3 + $0xc0] sm:$0xff]
        %v3984 = vld [vmem:[#allocation3 + $0xc8] sm:$0xff]
        %v3985 = vld [vmem:[#allocation3 + $0xd0] sm:$0xff]
        %v3986 = vld [vmem:[#allocation3 + $0xd8] sm:$0xff]
        %v3987 = vld [vmem:[#allocation3 + $0xe0] sm:$0xff]
        %v3988 = vld [vmem:[#allocation3 + $0xe8] sm:$0xff]
        %v3989 = vld [vmem:[#allocation3 + $0xf0] sm:$0xff]
        %v3990 = vld [vmem:[#allocation3 + $0xf8] sm:$0xff]
        %v3991 = vld [vmem:[#allocation3 + $0x100] sm:$0xff]
        %v3992 = vld [vmem:[#allocation3 + $0x108] sm:$0xff]
        %v3993 = vld [vmem:[#allocation3 + $0x110] sm:$0xff]
        %v3994 = vld [vmem:[#allocation3 + $0x118] sm:$0xff]
        %v3995 = vld [vmem:[#allocation3 + $0x120] sm:$0xff]
        %v3996 = vld [vmem:[#allocation3 + $0x128] sm:$0xff]
        %v3997 = vld [vmem:[#allocation3 + $0x130] sm:$0xff]
        %v3998 = vld [vmem:[#allocation3 + $0x138] sm:$0xff]
        %v3999 = vld [vmem:[#allocation3 + $0x140] sm:$0xff]
        %v4000 = vld [vmem:[#allocation3 + $0x148] sm:$0xff]
        %v4001 = vld [vmem:[#allocation3 + $0x150] sm:$0xff]
        %v4002 = vld [vmem:[#allocation3 + $0x158] sm:$0xff]
        %v4003 = vld [vmem:[#allocation3 + $0x160] sm:$0xff]
        %v4004 = vld [vmem:[#allocation3 + $0x168] sm:$0xff]
        %v4005 = vld [vmem:[#allocation3 + $0x170] sm:$0xff]
        %v4006 = vld [vmem:[#allocation3 + $0x178] sm:$0xff]
        %v4007 = vld [vmem:[#allocation3 + $0x180] sm:$0xff]
        %v4008 = vld [vmem:[#allocation3 + $0x188] sm:$0xff]
        %v4009 = vld [vmem:[#allocation3 + $0x190] sm:$0xff]
        %v4010 = vld [vmem:[#allocation3 + $0x198] sm:$0xff]
        %v4011 = vld [vmem:[#allocation3 + $0x1a0] sm:$0xff]
        %v4012 = vld [vmem:[#allocation3 + $0x1a8] sm:$0xff]
        %v4013 = vld [vmem:[#allocation3 + $0x1b0] sm:$0xff]
        %v4014 = vld [vmem:[#allocation3 + $0x1b8] sm:$0xff]
        %v4015 = vld [vmem:[#allocation3 + $0x1c0] sm:$0xff]
        %v4016 = vld [vmem:[#allocation3 + $0x1c8] sm:$0xff]
        %v4017 = vld [vmem:[#allocation3 + $0x1d0] sm:$0xff]
        %v4018 = vld [vmem:[#allocation3 + $0x1d8] sm:$0xff]
        %v4019 = vld [vmem:[#allocation3 + $0x1e0] sm:$0xff]
        %v4020 = vld [vmem:[#allocation3 + $0x1e8] sm:$0xff]
        %v4021 = vld [vmem:[#allocation3 + $0x1f0] sm:$0xff]
        %v4022 = vld [vmem:[#allocation3 + $0x1f8] sm:$0xff]
        %v4023 = vld [vmem:[#allocation3 + $0x200] sm:$0xff]
        %v4024 = vld [vmem:[#allocation3 + $0x208] sm:$0xff]
        %v4025 = vld [vmem:[#allocation3 + $0x210] sm:$0xff]
        %v4026 = vld [vmem:[#allocation3 + $0x218] sm:$0xff]
        %v4027 = vld [vmem:[#allocation3 + $0x220] sm:$0xff]
        %v4028 = vld [vmem:[#allocation3 + $0x228] sm:$0xff]
        %v4029 = vld [vmem:[#allocation3 + $0x230] sm:$0xff]
        %v4030 = vld [vmem:[#allocation3 + $0x238] sm:$0xff]
        %v4031 = vld [vmem:[#allocation3 + $0x240] sm:$0xff]
        %v4032 = vld [vmem:[#allocation3 + $0x248] sm:$0xff]
        %v4033 = vld [vmem:[#allocation3 + $0x250] sm:$0xff]
        %v4034 = vld [vmem:[#allocation3 + $0x258] sm:$0xff]
        %v4035 = vld [vmem:[#allocation3 + $0x260] sm:$0xff]
        %v4036 = vld [vmem:[#allocation3 + $0x268] sm:$0xff]
        %v4037 = vld [vmem:[#allocation3 + $0x270] sm:$0xff]
        %v4038 = vld [vmem:[#allocation3 + $0x278] sm:$0xff]
        %v4039 = vld [vmem:[#allocation3 + $0x280] sm:$0xff]
        %v4040 = vld [vmem:[#allocation3 + $0x288] sm:$0xff]
        %v4041 = vld [vmem:[#allocation3 + $0x290] sm:$0xff]
        %v4042 = vld [vmem:[#allocation3 + $0x298] sm:$0xff]
        %v4043 = vld [vmem:[#allocation3 + $0x2a0] sm:$0xff]
        %v4044 = vld [vmem:[#allocation3 + $0x2a8] sm:$0xff]
        %v4045 = vld [vmem:[#allocation3 + $0x2b0] sm:$0xff]
        %v4046 = vld [vmem:[#allocation3 + $0x2b8] sm:$0xff]
        %v4047 = vld [vmem:[#allocation3 + $0x2c0] sm:$0xff]
        %v4048 = vld [vmem:[#allocation3 + $0x2c8] sm:$0xff]
        %v4049 = vld [vmem:[#allocation3 + $0x2d0] sm:$0xff]
        %v4050 = vld [vmem:[#allocation3 + $0x2d8] sm:$0xff]
        %v4051 = vld [vmem:[#allocation3 + $0x2e0] sm:$0xff]
        %v4052 = vld [vmem:[#allocation3 + $0x2e8] sm:$0xff]
        %v4053 = vld [vmem:[#allocation3 + $0x2f0] sm:$0xff]
        %v4054 = vld [vmem:[#allocation3 + $0x2f8] sm:$0xff]
        %v4055 = vld [vmem:[#allocation3 + $0x300] sm:$0xff]
        %v4056 = vld [vmem:[#allocation3 + $0x308] sm:$0xff]
        %v4057 = vld [vmem:[#allocation3 + $0x310] sm:$0xff]
        %v4058 = vld [vmem:[#allocation3 + $0x318] sm:$0xff]
        %v4059 = vld [vmem:[#allocation3 + $0x320] sm:$0xff]
        %v4060 = vld [vmem:[#allocation3 + $0x328] sm:$0xff]
        %v4061 = vld [vmem:[#allocation3 + $0x330] sm:$0xff]
        %v4062 = vld [vmem:[#allocation3 + $0x338] sm:$0xff]
        %v4063 = vld [vmem:[#allocation3 + $0x340] sm:$0xff]
        %v4064 = vld [vmem:[#allocation3 + $0x348] sm:$0xff]
        %v4065 = vld [vmem:[#allocation3 + $0x350] sm:$0xff]
        %v4066 = vld [vmem:[#allocation3 + $0x358] sm:$0xff]
        %v4067 = vld [vmem:[#allocation3 + $0x360] sm:$0xff]
        %v4068 = vld [vmem:[#allocation3 + $0x368] sm:$0xff]
        %v4069 = vld [vmem:[#allocation3 + $0x370] sm:$0xff]
        %v4070 = vld [vmem:[#allocation3 + $0x378] sm:$0xff]
        %v4071 = vld [vmem:[#allocation3 + $0x380] sm:$0xff]
        %v4072 = vld [vmem:[#allocation3 + $0x388] sm:$0xff]
        %v4073 = vld [vmem:[#allocation3 + $0x390] sm:$0xff]
        %v4074 = vld [vmem:[#allocation3 + $0x398] sm:$0xff]
        %v4075 = vld [vmem:[#allocation3 + $0x3a0] sm:$0xff]
        %v4076 = vld [vmem:[#allocation3 + $0x3a8] sm:$0xff]
        %v4077 = vld [vmem:[#allocation3 + $0x3b0] sm:$0xff]
        %v4078 = vld [vmem:[#allocation3 + $0x3b8] sm:$0xff]
        %v4079 = vld [vmem:[#allocation3 + $0x3c0] sm:$0xff]
        %v4080 = vld [vmem:[#allocation3 + $0x3c8] sm:$0xff]
        %v4081 = vld [vmem:[#allocation3 + $0x3d0] sm:$0xff]
        %v4082 = vld [vmem:[#allocation3 + $0x3d8] sm:$0xff]
        %v4083 = vld [vmem:[#allocation3 + $0x3e0] sm:$0xff]
        %v4084 = vld [vmem:[#allocation3 + $0x3e8] sm:$0xff]
        %v4085 = vld [vmem:[#allocation3 + $0x3f0] sm:$0xff]
        %v4086 = vld [vmem:[#allocation3 + $0x3f8] sm:$0xff]
        %v4087 = vld [vmem:[#allocation3 + $0x400] sm:$0xff]
        %v4088 = vld [vmem:[#allocation3 + $0x408] sm:$0xff]
        %v4089 = vld [vmem:[#allocation3 + $0x410] sm:$0xff]
        %v4090 = vld [vmem:[#allocation3 + $0x418] sm:$0xff]
        %v4091 = vld [vmem:[#allocation3 + $0x420] sm:$0xff]
        %v4092 = vld [vmem:[#allocation3 + $0x428] sm:$0xff]
        %v4093 = vld [vmem:[#allocation3 + $0x430] sm:$0xff]
        %v4094 = vld [vmem:[#allocation3 + $0x438] sm:$0xff]
        %v4095 = vld [vmem:[#allocation3 + $0x440] sm:$0xff]
        %v4096 = vld [vmem:[#allocation3 + $0x448] sm:$0xff]
        %v4097 = vld [vmem:[#allocation3 + $0x450] sm:$0xff]
        %v4098 = vld [vmem:[#allocation3 + $0x458] sm:$0xff]
        %v4099 = vld [vmem:[#allocation3 + $0x460] sm:$0xff]
        %v4100 = vld [vmem:[#allocation3 + $0x468] sm:$0xff]
        %v4101 = vld [vmem:[#allocation3 + $0x470] sm:$0xff]
        %v4102 = vld [vmem:[#allocation3 + $0x478] sm:$0xff]
        %v4103 = vld [vmem:[#allocation3 + $0x480] sm:$0xff]
        %v4104 = vld [vmem:[#allocation3 + $0x488] sm:$0xff]
        %v4105 = vld [vmem:[#allocation3 + $0x490] sm:$0xff]
        %v4106 = vld [vmem:[#allocation3 + $0x498] sm:$0xff]
        %v4107 = vld [vmem:[#allocation3 + $0x4a0] sm:$0xff]
        %v4108 = vld [vmem:[#allocation3 + $0x4a8] sm:$0xff]
        %v4109 = vld [vmem:[#allocation3 + $0x4b0] sm:$0xff]
        %v4110 = vld [vmem:[#allocation3 + $0x4b8] sm:$0xff]
        %v4111 = vld [vmem:[#allocation3 + $0x4c0] sm:$0xff]
        %v4112 = vld [vmem:[#allocation3 + $0x4c8] sm:$0xff]
        %v4113 = vld [vmem:[#allocation3 + $0x4d0] sm:$0xff]
        %v4114 = vld [vmem:[#allocation3 + $0x4d8] sm:$0xff]
        %v4115 = vld [vmem:[#allocation3 + $0x4e0] sm:$0xff]
        %v4116 = vld [vmem:[#allocation3 + $0x4e8] sm:$0xff]
        %v4117 = vld [vmem:[#allocation3 + $0x4f0] sm:$0xff]
        %v4118 = vld [vmem:[#allocation3 + $0x4f8] sm:$0xff]
        %v4119 = vld [vmem:[#allocation3 + $0x500] sm:$0xff]
        %v4120 = vld [vmem:[#allocation3 + $0x508] sm:$0xff]
        %v4121 = vld [vmem:[#allocation3 + $0x510] sm:$0xff]
        %v4122 = vld [vmem:[#allocation3 + $0x518] sm:$0xff]
        %v4123 = vld [vmem:[#allocation3 + $0x520] sm:$0xff]
        %v4124 = vld [vmem:[#allocation3 + $0x528] sm:$0xff]
        %v4125 = vld [vmem:[#allocation3 + $0x530] sm:$0xff]
        %v4126 = vld [vmem:[#allocation3 + $0x538] sm:$0xff]
        %v4127 = vld [vmem:[#allocation3 + $0x540] sm:$0xff]
        %v4128 = vld [vmem:[#allocation3 + $0x548] sm:$0xff]
        %v4129 = vld [vmem:[#allocation3 + $0x550] sm:$0xff]
        %v4130 = vld [vmem:[#allocation3 + $0x558] sm:$0xff]
        %v4131 = vld [vmem:[#allocation3 + $0x560] sm:$0xff]
        %v4132 = vld [vmem:[#allocation3 + $0x568] sm:$0xff]
        %v4133 = vld [vmem:[#allocation3 + $0x570] sm:$0xff]
        %v4134 = vld [vmem:[#allocation3 + $0x578] sm:$0xff]
        %v4135 = vld [vmem:[#allocation3 + $0x580] sm:$0xff]
        %v4136 = vld [vmem:[#allocation3 + $0x588] sm:$0xff]
        %v4137 = vld [vmem:[#allocation3 + $0x590] sm:$0xff]
        %v4138 = vld [vmem:[#allocation3 + $0x598] sm:$0xff]
        %v4139 = vld [vmem:[#allocation3 + $0x5a0] sm:$0xff]
        %v4140 = vld [vmem:[#allocation3 + $0x5a8] sm:$0xff]
        %v4141 = vld [vmem:[#allocation3 + $0x5b0] sm:$0xff]
        %v4142 = vld [vmem:[#allocation3 + $0x5b8] sm:$0xff]
        %v4143 = vld [vmem:[#allocation3 + $0x5c0] sm:$0xff]
        %v4144 = vld [vmem:[#allocation3 + $0x5c8] sm:$0xff]
        %v4145 = vld [vmem:[#allocation3 + $0x5d0] sm:$0xff]
        %v4146 = vld [vmem:[#allocation3 + $0x5d8] sm:$0xff]
        %v4147 = vld [vmem:[#allocation3 + $0x5e0] sm:$0xff]
        %v4148 = vld [vmem:[#allocation3 + $0x5e8] sm:$0xff]
        %v4149 = vld [vmem:[#allocation3 + $0x5f0] sm:$0xff]
        %v4150 = vld [vmem:[#allocation3 + $0x5f8] sm:$0xff]
        %v4151 = vld [vmem:[#allocation3 + $0x600] sm:$0xff]
        %v4152 = vld [vmem:[#allocation3 + $0x608] sm:$0xff]
        %v4153 = vld [vmem:[#allocation3 + $0x610] sm:$0xff]
        %v4154 = vld [vmem:[#allocation3 + $0x618] sm:$0xff]
        %v4155 = vld [vmem:[#allocation3 + $0x620] sm:$0xff]
        %v4156 = vld [vmem:[#allocation3 + $0x628] sm:$0xff]
        %v4157 = vld [vmem:[#allocation3 + $0x630] sm:$0xff]
        %v4158 = vld [vmem:[#allocation3 + $0x638] sm:$0xff]
        %v4159 = vld [vmem:[#allocation3 + $0x640] sm:$0xff]
        %v4160 = vld [vmem:[#allocation3 + $0x648] sm:$0xff]
        %v4161 = vld [vmem:[#allocation3 + $0x650] sm:$0xff]
        %v4162 = vld [vmem:[#allocation3 + $0x658] sm:$0xff]
        %v4163 = vld [vmem:[#allocation3 + $0x660] sm:$0xff]
        %v4164 = vld [vmem:[#allocation3 + $0x668] sm:$0xff]
        %v4165 = vld [vmem:[#allocation3 + $0x670] sm:$0xff]
        %v4166 = vld [vmem:[#allocation3 + $0x678] sm:$0xff]
        %v4167 = vld [vmem:[#allocation3 + $0x680] sm:$0xff]
        %v4168 = vld [vmem:[#allocation3 + $0x688] sm:$0xff]
        %v4169 = vld [vmem:[#allocation3 + $0x690] sm:$0xff]
        %v4170 = vld [vmem:[#allocation3 + $0x698] sm:$0xff]
        %v4171 = vld [vmem:[#allocation3 + $0x6a0] sm:$0xff]
        %v4172 = vld [vmem:[#allocation3 + $0x6a8] sm:$0xff]
        %v4173 = vld [vmem:[#allocation3 + $0x6b0] sm:$0xff]
        %v4174 = vld [vmem:[#allocation3 + $0x6b8] sm:$0xff]
        %v4175 = vld [vmem:[#allocation3 + $0x6c0] sm:$0xff]
        %v4176 = vld [vmem:[#allocation3 + $0x6c8] sm:$0xff]
        %v4177 = vld [vmem:[#allocation3 + $0x6d0] sm:$0xff]
        %v4178 = vld [vmem:[#allocation3 + $0x6d8] sm:$0xff]
        %v4179 = vld [vmem:[#allocation3 + $0x6e0] sm:$0xff]
        %v4180 = vld [vmem:[#allocation3 + $0x6e8] sm:$0xff]
        %v4181 = vld [vmem:[#allocation3 + $0x6f0] sm:$0xff]
        %v4182 = vld [vmem:[#allocation3 + $0x6f8] sm:$0xff]
        %v4183 = vld [vmem:[#allocation3 + $0x700] sm:$0xff]
        %v4184 = vld [vmem:[#allocation3 + $0x708] sm:$0xff]
        %v4185 = vld [vmem:[#allocation3 + $0x710] sm:$0xff]
        %v4186 = vld [vmem:[#allocation3 + $0x718] sm:$0xff]
        %v4187 = vld [vmem:[#allocation3 + $0x720] sm:$0xff]
        %v4188 = vld [vmem:[#allocation3 + $0x728] sm:$0xff]
        %v4189 = vld [vmem:[#allocation3 + $0x730] sm:$0xff]
        %v4190 = vld [vmem:[#allocation3 + $0x738] sm:$0xff]
        %v4191 = vld [vmem:[#allocation3 + $0x740] sm:$0xff]
        %v4192 = vld [vmem:[#allocation3 + $0x748] sm:$0xff]
        %v4193 = vld [vmem:[#allocation3 + $0x750] sm:$0xff]
        %v4194 = vld [vmem:[#allocation3 + $0x758] sm:$0xff]
        %v4195 = vld [vmem:[#allocation3 + $0x760] sm:$0xff]
        %v4196 = vld [vmem:[#allocation3 + $0x768] sm:$0xff]
        %v4197 = vld [vmem:[#allocation3 + $0x770] sm:$0xff]
        %v4198 = vld [vmem:[#allocation3 + $0x778] sm:$0xff]
        %v4199 = vld [vmem:[#allocation3 + $0x780] sm:$0xff]
        %v4200 = vld [vmem:[#allocation3 + $0x788] sm:$0xff]
        %v4201 = vld [vmem:[#allocation3 + $0x790] sm:$0xff]
        %v4202 = vld [vmem:[#allocation3 + $0x798] sm:$0xff]
        %v4203 = vld [vmem:[#allocation3 + $0x7a0] sm:$0xff]
        %v4204 = vld [vmem:[#allocation3 + $0x7a8] sm:$0xff]
        %v4205 = vld [vmem:[#allocation3 + $0x7b0] sm:$0xff]
        %v4206 = vld [vmem:[#allocation3 + $0x7b8] sm:$0xff]
        %v4207 = vld [vmem:[#allocation3 + $0x7c0] sm:$0xff]
        %v4208 = vld [vmem:[#allocation3 + $0x7c8] sm:$0xff]
        %v4209 = vld [vmem:[#allocation3 + $0x7d0] sm:$0xff]
        %v4210 = vld [vmem:[#allocation3 + $0x7d8] sm:$0xff]
        %v4211 = vld [vmem:[#allocation3 + $0x7e0] sm:$0xff]
        %v4212 = vld [vmem:[#allocation3 + $0x7e8] sm:$0xff]
        %v4213 = vld [vmem:[#allocation3 + $0x7f0] sm:$0xff]
        %v4214 = vld [vmem:[#allocation3 + $0x7f8] sm:$0xff]
        %4215 = vmatprep.subr.mxu0 %v3960
        %4216 = vmatpush1.msra.mxu0 %v3959
        %4217 = vmatprep.subr.mxu0 %v3968
        %4218 = vmatpush1.msra.mxu0 %v3967
        %4219 = vmatprep.subr.mxu0 %v3976
        %4220 = vmatpush1.msra.mxu0 %v3975
        %4221 = vmatprep.subr.mxu0 %v3984
        %4222 = vmatpush1.msra.mxu0 %v3983
        %4223 = vmatprep.subr.mxu0 %v3992
        %4224 = vmatpush1.msra.mxu0 %v3991
        %4225 = vmatprep.subr.mxu0 %v4000
        %4226 = vmatpush1.msra.mxu0 %v3999
        %4227 = vmatprep.subr.mxu0 %v4008
        %4228 = vmatpush1.msra.mxu0 %v4007
        %4229 = vmatprep.subr.mxu0 %v4016
        %4230 = vmatpush1.msra.mxu0 %v4015
        %4231 = vmatprep.subr.mxu0 %v4024
        %4232 = vmatpush1.msra.mxu0 %v4023
        %4233 = vmatprep.subr.mxu0 %v4032
        %4234 = vmatpush1.msra.mxu0 %v4031
        %4235 = vmatprep.subr.mxu0 %v4040
        %4236 = vmatpush1.msra.mxu0 %v4039
        %4237 = vmatprep.subr.mxu0 %v4048
        %4238 = vmatpush1.msra.mxu0 %v4047
        %4239 = vmatprep.subr.mxu0 %v4056
        %4240 = vmatpush1.msra.mxu0 %v4055
        %4241 = vmatprep.subr.mxu0 %v4064
        %4242 = vmatpush1.msra.mxu0 %v4063
        %4243 = vmatprep.subr.mxu0 %v4072
        %4244 = vmatpush1.msra.mxu0 %v4071
        %4245 = vmatprep.subr.mxu0 %v4080
        %4246 = vmatpush1.msra.mxu0 %v4079
        %4247 = vmatprep.subr.mxu0 %v4088
        %4248 = vmatpush1.msra.mxu0 %v4087
        %4249 = vmatprep.subr.mxu0 %v4096
        %4250 = vmatpush1.msra.mxu0 %v4095
        %4251 = vmatprep.subr.mxu0 %v4104
        %4252 = vmatpush1.msra.mxu0 %v4103
        %4253 = vmatprep.subr.mxu0 %v4112
        %4254 = vmatpush1.msra.mxu0 %v4111
        %4255 = vmatprep.subr.mxu0 %v4120
        %4256 = vmatpush1.msra.mxu0 %v4119
        %4257 = vmatprep.subr.mxu0 %v4128
        %4258 = vmatpush1.msra.mxu0 %v4127
        %4259 = vmatprep.subr.mxu0 %v4136
        %4260 = vmatpush1.msra.mxu0 %v4135
        %4261 = vmatprep.subr.mxu0 %v4144
        %4262 = vmatpush1.msra.mxu0 %v4143
        %4263 = vmatprep.subr.mxu0 %v4152
        %4264 = vmatpush1.msra.mxu0 %v4151
        %4265 = vmatprep.subr.mxu0 %v4160
        %4266 = vmatpush1.msra.mxu0 %v4159
        %4267 = vmatprep.subr.mxu0 %v4168
        %4268 = vmatpush1.msra.mxu0 %v4167
        %4269 = vmatprep.subr.mxu0 %v4176
        %4270 = vmatpush1.msra.mxu0 %v4175
        %4271 = vmatprep.subr.mxu0 %v4184
        %4272 = vmatpush1.msra.mxu0 %v4183
        %4273 = vmatprep.subr.mxu0 %v4192
        %4274 = vmatpush1.msra.mxu0 %v4191
        %4275 = vmatprep.subr.mxu0 %v4200
        %4276 = vmatpush1.msra.mxu0 %v4199
        %4277 = vmatprep.subr.mxu0 %v4208
        %4278 = vmatpush1.msra.mxu0 %v4207
        %4279 = vmatprep.mubr.f32.mxu0 %v3958
        %4280 = vmatmul.mubr.f32.gmra.mrb[0].mxu0 %v3957
        %v4281 = vpop.f32.mrb[0].mxu0
        %v4282 = vadd.f32 0.0, %v4281
        %v4283 = vpop.f32.mrb[0].mxu0
        %v4284 = vadd.f32 0.0, %v4283
        %4285 = vdwg.mxu0
        %4286 = vmatprep.subr.mxu0 %v3962
        %4287 = vmatpush1.msra.mxu0 %v3961
        %4288 = vmatprep.subr.mxu0 %v3970
        %4289 = vmatpush1.msra.mxu0 %v3969
        %4290 = vmatprep.subr.mxu0 %v3978
        %4291 = vmatpush1.msra.mxu0 %v3977
        %4292 = vmatprep.subr.mxu0 %v3986
        %4293 = vmatpush1.msra.mxu0 %v3985
        %4294 = vmatprep.subr.mxu0 %v3994
        %4295 = vmatpush1.msra.mxu0 %v3993
        %4296 = vmatprep.subr.mxu0 %v4002
        %4297 = vmatpush1.msra.mxu0 %v4001
        %4298 = vmatprep.subr.mxu0 %v4010
        %4299 = vmatpush1.msra.mxu0 %v4009
        %4300 = vmatprep.subr.mxu0 %v4018
        %4301 = vmatpush1.msra.mxu0 %v4017
        %4302 = vmatprep.subr.mxu0 %v4026
        %4303 = vmatpush1.msra.mxu0 %v4025
        %4304 = vmatprep.subr.mxu0 %v4034
        %4305 = vmatpush1.msra.mxu0 %v4033
        %4306 = vmatprep.subr.mxu0 %v4042
        %4307 = vmatpush1.msra.mxu0 %v4041
        %4308 = vmatprep.subr.mxu0 %v4050
        %4309 = vmatpush1.msra.mxu0 %v4049
        %4310 = vmatprep.subr.mxu0 %v4058
        %4311 = vmatpush1.msra.mxu0 %v4057
        %4312 = vmatprep.subr.mxu0 %v4066
        %4313 = vmatpush1.msra.mxu0 %v4065
        %4314 = vmatprep.subr.mxu0 %v4074
        %4315 = vmatpush1.msra.mxu0 %v4073
        %4316 = vmatprep.subr.mxu0 %v4082
        %4317 = vmatpush1.msra.mxu0 %v4081
        %4318 = vmatprep.subr.mxu0 %v4090
        %4319 = vmatpush1.msra.mxu0 %v4089
        %4320 = vmatprep.subr.mxu0 %v4098
        %4321 = vmatpush1.msra.mxu0 %v4097
        %4322 = vmatprep.subr.mxu0 %v4106
        %4323 = vmatpush1.msra.mxu0 %v4105
        %4324 = vmatprep.subr.mxu0 %v4114
        %4325 = vmatpush1.msra.mxu0 %v4113
        %4326 = vmatprep.subr.mxu0 %v4122
        %4327 = vmatpush1.msra.mxu0 %v4121
        %4328 = vmatprep.subr.mxu0 %v4130
        %4329 = vmatpush1.msra.mxu0 %v4129
        %4330 = vmatprep.subr.mxu0 %v4138
        %4331 = vmatpush1.msra.mxu0 %v4137
        %4332 = vmatprep.subr.mxu0 %v4146
        %4333 = vmatpush1.msra.mxu0 %v4145
        %4334 = vmatprep.subr.mxu0 %v4154
        %4335 = vmatpush1.msra.mxu0 %v4153
        %4336 = vmatprep.subr.mxu0 %v4162
        %4337 = vmatpush1.msra.mxu0 %v4161
        %4338 = vmatprep.subr.mxu0 %v4170
        %4339 = vmatpush1.msra.mxu0 %v4169
        %4340 = vmatprep.subr.mxu0 %v4178
        %4341 = vmatpush1.msra.mxu0 %v4177
        %4342 = vmatprep.subr.mxu0 %v4186
        %4343 = vmatpush1.msra.mxu0 %v4185
        %4344 = vmatprep.subr.mxu0 %v4194
        %4345 = vmatpush1.msra.mxu0 %v4193
        %4346 = vmatprep.subr.mxu0 %v4202
        %4347 = vmatpush1.msra.mxu0 %v4201
        %4348 = vmatprep.subr.mxu0 %v4210
        %4349 = vmatpush1.msra.mxu0 %v4209
        %4350 = vmatprep.mubr.f32.mxu0 %v3958
        %4351 = vmatmul.mubr.f32.gmra.mrb[0].mxu0 %v3957
        %v4352 = vpop.f32.mrb[0].mxu0
        %v4353 = vadd.f32 0.0, %v4352
        %v4354 = vpop.f32.mrb[0].mxu0
        %v4355 = vadd.f32 0.0, %v4354
        %4356 = vdwg.mxu0
        %4357 = vmatprep.subr.mxu0 %v3964
        %4358 = vmatpush1.msra.mxu0 %v3963
        %4359 = vmatprep.subr.mxu0 %v3972
        %4360 = vmatpush1.msra.mxu0 %v3971
        %4361 = vmatprep.subr.mxu0 %v3980
        %4362 = vmatpush1.msra.mxu0 %v3979
        %4363 = vmatprep.subr.mxu0 %v3988
        %4364 = vmatpush1.msra.mxu0 %v3987
        %4365 = vmatprep.subr.mxu0 %v3996
        %4366 = vmatpush1.msra.mxu0 %v3995
        %4367 = vmatprep.subr.mxu0 %v4004
        %4368 = vmatpush1.msra.mxu0 %v4003
        %4369 = vmatprep.subr.mxu0 %v4012
        %4370 = vmatpush1.msra.mxu0 %v4011
        %4371 = vmatprep.subr.mxu0 %v4020
        %4372 = vmatpush1.msra.mxu0 %v4019
        %4373 = vmatprep.subr.mxu0 %v4028
        %4374 = vmatpush1.msra.mxu0 %v4027
        %4375 = vmatprep.subr.mxu0 %v4036
        %4376 = vmatpush1.msra.mxu0 %v4035
        %4377 = vmatprep.subr.mxu0 %v4044
        %4378 = vmatpush1.msra.mxu0 %v4043
        %4379 = vmatprep.subr.mxu0 %v4052
        %4380 = vmatpush1.msra.mxu0 %v4051
        %4381 = vmatprep.subr.mxu0 %v4060
        %4382 = vmatpush1.msra.mxu0 %v4059
        %4383 = vmatprep.subr.mxu0 %v4068
        %4384 = vmatpush1.msra.mxu0 %v4067
        %4385 = vmatprep.subr.mxu0 %v4076
        %4386 = vmatpush1.msra.mxu0 %v4075
        %4387 = vmatprep.subr.mxu0 %v4084
        %4388 = vmatpush1.msra.mxu0 %v4083
        %4389 = vmatprep.subr.mxu0 %v4092
        %4390 = vmatpush1.msra.mxu0 %v4091
        %4391 = vmatprep.subr.mxu0 %v4100
        %4392 = vmatpush1.msra.mxu0 %v4099
        %4393 = vmatprep.subr.mxu0 %v4108
        %4394 = vmatpush1.msra.mxu0 %v4107
        %4395 = vmatprep.subr.mxu0 %v4116
        %4396 = vmatpush1.msra.mxu0 %v4115
        %4397 = vmatprep.subr.mxu0 %v4124
        %4398 = vmatpush1.msra.mxu0 %v4123
        %4399 = vmatprep.subr.mxu0 %v4132
        %4400 = vmatpush1.msra.mxu0 %v4131
        %4401 = vmatprep.subr.mxu0 %v4140
        %4402 = vmatpush1.msra.mxu0 %v4139
        %4403 = vmatprep.subr.mxu0 %v4148
        %4404 = vmatpush1.msra.mxu0 %v4147
        %4405 = vmatprep.subr.mxu0 %v4156
        %4406 = vmatpush1.msra.mxu0 %v4155
        %4407 = vmatprep.subr.mxu0 %v4164
        %4408 = vmatpush1.msra.mxu0 %v4163
        %4409 = vmatprep.subr.mxu0 %v4172
        %4410 = vmatpush1.msra.mxu0 %v4171
        %4411 = vmatprep.subr.mxu0 %v4180
        %4412 = vmatpush1.msra.mxu0 %v4179
        %4413 = vmatprep.subr.mxu0 %v4188
        %4414 = vmatpush1.msra.mxu0 %v4187
        %4415 = vmatprep.subr.mxu0 %v4196
        %4416 = vmatpush1.msra.mxu0 %v4195
        %4417 = vmatprep.subr.mxu0 %v4204
        %4418 = vmatpush1.msra.mxu0 %v4203
        %4419 = vmatprep.subr.mxu0 %v4212
        %4420 = vmatpush1.msra.mxu0 %v4211
        %4421 = vmatprep.mubr.f32.mxu0 %v3958
        %4422 = vmatmul.mubr.f32.gmra.mrb[0].mxu0 %v3957
        %v4423 = vpop.f32.mrb[0].mxu0
        %v4424 = vadd.f32 0.0, %v4423
        %v4425 = vpop.f32.mrb[0].mxu0
        %v4426 = vadd.f32 0.0, %v4425
        %4427 = vdwg.mxu0
        %4428 = vmatprep.subr.mxu0 %v3966
        %4429 = vmatpush1.msra.mxu0 %v3965
        %4430 = vmatprep.subr.mxu0 %v3974
        %4431 = vmatpush1.msra.mxu0 %v3973
        %4432 = vmatprep.subr.mxu0 %v3982
        %4433 = vmatpush1.msra.mxu0 %v3981
        %4434 = vmatprep.subr.mxu0 %v3990
        %4435 = vmatpush1.msra.mxu0 %v3989
        %4436 = vmatprep.subr.mxu0 %v3998
        %4437 = vmatpush1.msra.mxu0 %v3997
        %4438 = vmatprep.subr.mxu0 %v4006
        %4439 = vmatpush1.msra.mxu0 %v4005
        %4440 = vmatprep.subr.mxu0 %v4014
        %4441 = vmatpush1.msra.mxu0 %v4013
        %4442 = vmatprep.subr.mxu0 %v4022
        %4443 = vmatpush1.msra.mxu0 %v4021
        %4444 = vmatprep.subr.mxu0 %v4030
        %4445 = vmatpush1.msra.mxu0 %v4029
        %4446 = vmatprep.subr.mxu0 %v4038
        %4447 = vmatpush1.msra.mxu0 %v4037
        %4448 = vmatprep.subr.mxu0 %v4046
        %4449 = vmatpush1.msra.mxu0 %v4045
        %4450 = vmatprep.subr.mxu0 %v4054
        %4451 = vmatpush1.msra.mxu0 %v4053
        %4452 = vmatprep.subr.mxu0 %v4062
        %4453 = vmatpush1.msra.mxu0 %v4061
        %4454 = vmatprep.subr.mxu0 %v4070
        %4455 = vmatpush1.msra.mxu0 %v4069
        %4456 = vmatprep.subr.mxu0 %v4078
        %4457 = vmatpush1.msra.mxu0 %v4077
        %4458 = vmatprep.subr.mxu0 %v4086
        %4459 = vmatpush1.msra.mxu0 %v4085
        %4460 = vmatprep.subr.mxu0 %v4094
        %4461 = vmatpush1.msra.mxu0 %v4093
        %4462 = vmatprep.subr.mxu0 %v4102
        %4463 = vmatpush1.msra.mxu0 %v4101
        %4464 = vmatprep.subr.mxu0 %v4110
        %4465 = vmatpush1.msra.mxu0 %v4109
        %4466 = vmatprep.subr.mxu0 %v4118
        %4467 = vmatpush1.msra.mxu0 %v4117
        %4468 = vmatprep.subr.mxu0 %v4126
        %4469 = vmatpush1.msra.mxu0 %v4125
        %4470 = vmatprep.subr.mxu0 %v4134
        %4471 = vmatpush1.msra.mxu0 %v4133
        %4472 = vmatprep.subr.mxu0 %v4142
        %4473 = vmatpush1.msra.mxu0 %v4141
        %4474 = vmatprep.subr.mxu0 %v4150
        %4475 = vmatpush1.msra.mxu0 %v4149
        %4476 = vmatprep.subr.mxu0 %v4158
        %4477 = vmatpush1.msra.mxu0 %v4157
        %4478 = vmatprep.subr.mxu0 %v4166
        %4479 = vmatpush1.msra.mxu0 %v4165
        %4480 = vmatprep.subr.mxu0 %v4174
        %4481 = vmatpush1.msra.mxu0 %v4173
        %4482 = vmatprep.subr.mxu0 %v4182
        %4483 = vmatpush1.msra.mxu0 %v4181
        %4484 = vmatprep.subr.mxu0 %v4190
        %4485 = vmatpush1.msra.mxu0 %v4189
        %4486 = vmatprep.subr.mxu0 %v4198
        %4487 = vmatpush1.msra.mxu0 %v4197
        %4488 = vmatprep.subr.mxu0 %v4206
        %4489 = vmatpush1.msra.mxu0 %v4205
        %4490 = vmatprep.subr.mxu0 %v4214
        %4491 = vmatpush1.msra.mxu0 %v4213
        %4492 = vmatprep.mubr.f32.mxu0 %v3958
        %4493 = vmatmul.mubr.f32.gmra.mrb[0].mxu0 %v3957
        %v4494 = vpop.f32.mrb[0].mxu0
        %v4495 = vadd.f32 0.0, %v4494
        %v4496 = vpop.f32.mrb[0].mxu0
        %v4497 = vadd.f32 0.0, %v4496
        %4498 = vdwg.mxu0
        %4499 = vst [vmem:[%s460] sm:$0xff] %v4282
        %4500 = vst [vmem:[%s460 + $0x8] sm:$0xff] %v4284
        %4501 = vst [vmem:[%s460 + $0x10] sm:$0xff] %v4353
        %4502 = vst [vmem:[%s460 + $0x18] sm:$0xff] %v4355
        %4503 = vst [vmem:[%s460 + $0x20] sm:$0xff] %v4424
        %4504 = vst [vmem:[%s460 + $0x28] sm:$0xff] %v4426
        %4505 = vst [vmem:[%s460 + $0x30] sm:$0xff] %v4495
        %4506 = vst [vmem:[%s460 + $0x38] sm:$0xff] %v4497
        %v4507 = vld [vmem:[%s487] sm:$0xff]
        %v4508 = vadd.f32 %v4282, %v4284
        %v4509 = vadd.f32 %v4508, %v4353
        %v4510 = vadd.f32 %v4509, %v4355
        %v4511 = vadd.f32 %v4510, %v4424
        %v4512 = vadd.f32 %v4511, %v4426
        %v4513 = vadd.f32 %v4512, %v4495
        %v4514 = vadd.f32 %v4513, %v4497
        %4515 = vadd.xlane.f32.xlu0 %v4514
        %v4516 = vpop.xlane.xlu0 %4515
        %v4517 = vadd.f32 %v4507, %v4516
        %4518 = vst.msk [vmem:[%s487] sm:$0xff] %vm978, %v4517
        %v4519 = vld [vmem:[%s491] sm:$0xff]
        %v4520 = vmul.f32 %v4282, %v4282
        %v4521 = vmul.f32 %v4284, %v4284
        %v4522 = vmul.f32 %v4353, %v4353
        %v4523 = vmul.f32 %v4355, %v4355
        %v4524 = vmul.f32 %v4424, %v4424
        %v4525 = vmul.f32 %v4426, %v4426
        %v4526 = vmul.f32 %v4495, %v4495
        %v4527 = vmul.f32 %v4497, %v4497
        %v4528 = vadd.f32 %v4520, %v4521
        %v4529 = vadd.f32 %v4528, %v4522
        %v4530 = vadd.f32 %v4529, %v4523
        %v4531 = vadd.f32 %v4530, %v4524
        %v4532 = vadd.f32 %v4531, %v4525
        %v4533 = vadd.f32 %v4532, %v4526
        %v4534 = vadd.f32 %v4533, %v4527
        %4535 = vadd.xlane.f32.xlu0 %v4534
        %v4536 = vpop.xlane.xlu0 %4535
        %v4537 = vadd.f32 %v4519, %v4536
        %4538 = vst.msk [vmem:[%s491] sm:$0xff] %vm978, %v4537
        %s4539 = sand.u32 %s194, 1
        %s4540 = scalar_lea.sflag [#allocation6], %s4539
        %s4541 = sand.u32 %s194, 1
        %s4542 = smul.addr %s4541, 64
        %s4543 = scalar_lea.vmem [#allocation13], %s4542
        %p4544 = scmp.lt.s32.totalorder %s33, 1
        %s4545 = scalar_select %p4544, %s33, 1
        %s4546 = smul.addr %s4545, 8
        %s4547 = scalar_lea.vmem %s6, %s4546
        %p4548 = scmp.lt.s32.totalorder %s33, 1
        %s4549 = scalar_select %p4548, %s33, 1
        %s4550 = smul.addr %s4549, 8
        %s4551 = scalar_lea.vmem %s7, %s4550
        // Predicated region
        $region65: #{tpu_custom_call.1} parent=39 // pred_check
          %p4552 = pneg %p204
        $region66: #{tpu_custom_call.1} parent=39 // pred_check_branch
          %4554 = sbr.rel (%p4552) target = $region68
        $region67: #{tpu_custom_call.1} parent=39 // pred_region
          %s4555 = smul.u32 8, %s34
          %s4557 = ssub.s32 1024, 1024
          %4558 = vsyncadd %s4540, %s4557
          %s4559 = smul.addr %s33, 32
          %s4560 = sadd.s32 %s4555, %s4559
          %s4561 = smul.addr %s4560, 128
          %s4562 = scalar_lea.hbm %s5, %s4561
          %s4564 = sshll.u32 %s4543, 4
          %s4565 = int_to_ptr.vmem [resolvable:$true] %s4564
          %4567 = dma.vmem_to_hbm [thread:$0]  %s4565, 1024, %s4562, %s4540
        $region68: #{tpu_custom_call.1} parent=39 // pred_fallthru
          _
        // Predicated region
        $region69: #{tpu_custom_call.1} parent=39 // pred_check
          %p4568 = pneg %p230
        $region70: #{tpu_custom_call.1} parent=39 // pred_check_branch
          %4570 = sbr.rel (%p4568) target = $region72
        $region71: #{tpu_custom_call.1} parent=39 // pred_region
          _
        $region72: #{tpu_custom_call.1} parent=39 // pred_fallthru
          _
        // Predicated region
        $region73: #{tpu_custom_call.1} parent=39 // pred_check
          %p4571 = pneg %p256
        $region74: #{tpu_custom_call.1} parent=39 // pred_check_branch
          %4573 = sbr.rel (%p4571) target = $region76
        $region75: #{tpu_custom_call.1} parent=39 // pred_region
          _
        $region76: #{tpu_custom_call.1} parent=39 // pred_fallthru
          _
      $region40: #{tpu_custom_call.1} parent=5 // pred_fallthru
        _
      %p4574 = scmp.le.s32.totalorder 2, %s24
      // Predicated region
      $region77: #{tpu_custom_call.1} parent=5 // pred_check
        %p4575 = pneg %p4574
      $region78: #{tpu_custom_call.1} parent=5 // pred_check_branch
        %4577 = sbr.rel (%p4575) target = $region80
      $region79: #{tpu_custom_call.1} parent=5 // pred_region
        %s4578 = ssub.s32 %s24, 2
        // Predicated region
        $region81: #{tpu_custom_call.1} parent=79 // pred_check
          %p4579 = pneg %p210
        $region82: #{tpu_custom_call.1} parent=79 // pred_check_branch
          %4581 = sbr.rel (%p4579) target = $region84
        $region83: #{tpu_custom_call.1} parent=79 // pred_region
          %s4582 = sand.u32 %s195, 1
          %s4583 = scalar_lea.sflag [#allocation6], %s4582
          %s4584 = sand.u32 %s195, 1
          %s4585 = smul.addr %s4584, 64
          %s4586 = scalar_lea.vmem [#allocation13], %s4585
          %4587 = dma.done %s4583, 1024
        $region84: #{tpu_custom_call.1} parent=79 // pred_fallthru
          _
        // Predicated region
        $region85: #{tpu_custom_call.1} parent=79 // pred_check
          %p4588 = pneg %p236
        $region86: #{tpu_custom_call.1} parent=79 // pred_check_branch
          %4590 = sbr.rel (%p4588) target = $region88
        $region87: #{tpu_custom_call.1} parent=79 // pred_region
          %p4591 = scmp.lt.s32.totalorder %s35, 1
          %s4592 = scalar_select %p4591, %s35, 1
          %s4593 = smul.addr %s4592, 8
          %s4594 = scalar_lea.vmem %s6, %s4593
        $region88: #{tpu_custom_call.1} parent=79 // pred_fallthru
          _
        // Predicated region
        $region89: #{tpu_custom_call.1} parent=79 // pred_check
          %p4595 = pneg %p262
        $region90: #{tpu_custom_call.1} parent=79 // pred_check_branch
          %4597 = sbr.rel (%p4595) target = $region92
        $region91: #{tpu_custom_call.1} parent=79 // pred_region
          %p4598 = scmp.lt.s32.totalorder %s35, 1
          %s4599 = scalar_select %p4598, %s35, 1
          %s4600 = smul.addr %s4599, 8
          %s4601 = scalar_lea.vmem %s7, %s4600
        $region92: #{tpu_custom_call.1} parent=79 // pred_fallthru
          _
      $region80: #{tpu_custom_call.1} parent=5 // pred_fallthru
        _
    $region6: #{tpu_custom_call.1} parent=1 // loop_footer
      %s28 = sadd.s32 1, %s24
    $region7: #{tpu_custom_call.1} parent=1 // loop_footer_branch
      %23 = sbr.rel target = $region3
    $region8: #{tpu_custom_call.1} parent=1 // loop_exit
      _
    %4602 = vsyncpa [#allocation5], 1
    %s4603 = scalar_lea.sflag [#allocation5], 1
    %4604 = vsyncpa %s4603, 1
    %4605 = vsyncpa [#allocation8], 1
    %s4606 = scalar_lea.sflag [#allocation8], 1
    %4607 = vsyncpa %s4606, 1
    %4608 = vsyncpa [#allocation11], 1
    %4609 = vsyncpa [#allocation6], 1
    %s4610 = scalar_lea.sflag [#allocation6], 1
    %4611 = vsyncpa %s4610, 1

</llo_original>
